<compile_context>
chip_gen: v7x
topology: tpu7x:2x2x1
jax: 0.10.0
libtpu: 0.0.40
codegen_flags: <defaults>
</compile_context>

<pallas_src>
import functools

import jax
import jax.numpy as jnp
from jax.experimental import pallas as pl
from jax.experimental.pallas import tpu as pltpu


def _round_up(x, m):
    return ((x + m - 1) // m) * m


# ----------------------------------------------------------------------------
# Fused whole-net Pallas kernel (single grid step, everything VMEM-resident)
# ----------------------------------------------------------------------------
def _autogcn_net_kernel(a_pows_ref, h_ref, snorm_ref, w_ref, b_ref, gamma_ref,
                        beta_ref, o_ref, hbuf, *, K, layer_relu, layer_residual, eps):
    """a_pows_ref: [max(K,1), N, N] bf16 (A^1..A^K precomputed);
    h_ref: [N, Cpad] f32; snorm_ref: [N, 1] f32;
    w_ref: [L, Cpad, (K+1)*Cpad] bf16 (lane-concatenated effective weights);
    b/gamma/beta_ref: [L, 1, Cpad] f32; o_ref: [N, Cpad] f32;
    hbuf: VMEM scratch [N, Cpad] f32 carrying the layer activation."""
    n_layers = len(layer_relu)
    C = o_ref.shape[-1]

    hbuf[...] = h_ref[...]

    for l in range(n_layers):
        # ---- one wide weight dot:  ycat[:, k*C:(k+1)*C] = h @ W_eff[l, k] -----
        h16 = hbuf[...].astype(jnp.bfloat16)
        ycat = jnp.dot(h16, w_ref[l], preferred_element_type=jnp.float32)  # [N,(K+1)*C]
        y16 = ycat.astype(jnp.bfloat16)

        # ---- propagation: K independent MXU dots against precomputed A^k -----
        x = ycat[:, :C]                                     # k = 0 term (f32)
        for k in range(1, K + 1):
            x = x + jnp.dot(a_pows_ref[k - 1], y16[:, k * C:(k + 1) * C],
                            preferred_element_type=jnp.float32)

        # ---- epilogue: bias -> graph_norm -> BatchNorm (one pass) -> act -> res
        x = (x + b_ref[l]) * snorm_ref[...]                 # graph_norm ([N,1] bcast)
        mu = jnp.mean(x, axis=0, keepdims=True)             # BN over node axis
        msq = jnp.mean(x * x, axis=0, keepdims=True)
        var = msq - mu * mu
        scale = gamma_ref[l] * jax.lax.rsqrt(var + eps)     # folded affine
        shift = beta_ref[l] - mu * scale
        y = x * scale + shift
        if layer_relu[l]:
            y = jnp.maximum(y, 0.0)
        if layer_residual[l]:
            y = y + hbuf[...]                               # re-read at point of use
        if l == n_layers - 1:
            o_ref[...] = y                                  # lane-dense [N, Cpad] store
        else:
            hbuf[...] = y


# ----------------------------------------------------------------------------
# Wrapper: fold filters/gates, lane-concat per-k weights, pad, precompute A^k
# ----------------------------------------------------------------------------
def _fold_layer_weights(p):
    """W_eff[k] = sum_f sigmoid(gate_f)*theta[f,k]*W_f ; b_eff = sum_f sigmoid(gate_f)*b_f."""
    gate_s = jax.nn.sigmoid(p["gate"])                      # [F]
    coef = gate_s[:, None] * p["theta"]                     # [F, K+1]
    w_eff = jnp.einsum("fk,fio->kio", coef, p["W"])         # [K+1, Cin, Cout]
    b_eff = gate_s @ p["b"]                                 # [Cout]
    return w_eff, b_eff


def _pack_net_params(layer_params, K, cpad):
    w_list, b_list, g_list, bt_list = [], [], [], []
    for p in layer_params:
        w_eff, b_eff = _fold_layer_weights(p)
        cin, cout = w_eff.shape[1], w_eff.shape[2]
        w_pad = jnp.zeros((K + 1, cpad, cpad), jnp.float32).at[:, :cin, :cout].set(w_eff)
        # lane-concatenate the K+1 effective weights: block k lives at lanes [k*cpad, ...)
        w_cat = jnp.transpose(w_pad, (1, 0, 2)).reshape(cpad, (K + 1) * cpad)
        w_list.append(w_cat.astype(jnp.bfloat16))
        b_list.append(jnp.zeros((1, cpad), jnp.float32).at[0, :cout].set(b_eff))
        g_list.append(jnp.zeros((1, cpad), jnp.float32).at[0, :cout].set(p["gamma"]))
        bt_list.append(jnp.zeros((1, cpad), jnp.float32).at[0, :cout].set(p["beta"]))
    W = jnp.stack(w_list)                                   # [L, cpad, (K+1)*cpad] bf16
    b = jnp.stack(b_list)                                   # [L, 1, cpad] f32
    gamma = jnp.stack(g_list)
    beta = jnp.stack(bt_list)
    return W, b, gamma, beta


def _stack_adjacency_powers(A_hat, K):
    """A^1..A^K stacked on the leading axis, bf16 (f32 matmuls, one cast at the end)."""
    N = A_hat.shape[0]
    if K == 0:
        return jnp.zeros((1, N, N), jnp.bfloat16)           # unused dummy
    pows = [A_hat]
    for _ in range(K - 1):
        pows.append(pows[-1] @ A_hat)
    return jnp.stack(pows).astype(jnp.bfloat16)             # [K, N, N]


def autogcn_net_forward(layer_params, A_hat, h, snorm_n, *, K):
    N, in_dim = h.shape
    dims = [(p["W"].shape[1], p["W"].shape[2]) for p in layer_params]
    cpad = _round_up(max(in_dim, max(max(d) for d in dims)), 128)

    # Static per-layer flags (relu on all but last; residual only when Cin==Cout).
    n_layers = len(layer_params)
    layer_relu = tuple(i < n_layers - 1 for i in range(n_layers))
    layer_residual = tuple(din == dout for (din, dout) in dims)

    W, b, gamma, beta = _pack_net_params(layer_params, K, cpad)
    h_pad = jnp.zeros((N, cpad), jnp.float32).at[:, :in_dim].set(h)
    a_pows = _stack_adjacency_powers(A_hat, K)

    kern = functools.partial(
        _autogcn_net_kernel,
        K=K, layer_relu=layer_relu, layer_residual=layer_residual, eps=1e-5,
    )
    vspec = pl.BlockSpec(memory_space=pltpu.MemorySpace.VMEM)
    out_pad = pl.pallas_call(
        kern,
        out_shape=jax.ShapeDtypeStruct((N, cpad), jnp.float32),
        in_specs=[vspec] * 7,
        out_specs=vspec,
        scratch_shapes=[pltpu.VMEM((N, cpad), jnp.float32)],
    )(a_pows, h_pad, snorm_n, W, b, gamma, beta)

    n_classes = dims[-1][1]
    return out_pad[:, :n_classes]                           # single slice at net end


# ----------------------------------------------------------------------------
# Pure-JAX f32 reference (unfused, unfolded) for correctness check
# ----------------------------------------------------------------------------
def autogcn_net_reference(layer_params, A_hat, h, snorm_n, *, K, eps=1e-5):
    n_layers = len(layer_params)
    for i, p in enumerate(layer_params):
        cin, cout = p["W"].shape[1], p["W"].shape[2]
        props = [h]
        cur = h
        for _ in range(K):
            cur = A_hat @ cur
            props.append(cur)
        gate_s = jax.nn.sigmoid(p["gate"])
        out = jnp.zeros((h.shape[0], cout), jnp.float32)
        for f in range(p["W"].shape[0]):
            hf = sum(p["theta"][f, k] * props[k] for k in range(K + 1))
            hf = hf @ p["W"][f] + p["b"][f][None, :]
            out = out + gate_s[f] * hf
        x = out * snorm_n
        mu = jnp.mean(x, axis=0, keepdims=True)
        var = jnp.mean((x - mu) ** 2, axis=0, keepdims=True)
        y = (x - mu) / jnp.sqrt(var + eps)
        y = y * p["gamma"][None, :] + p["beta"][None, :]
        if i < n_layers - 1:
            y = jnp.maximum(y, 0.0)
        if cin == cout:
            y = y + h
        h = y
    return h


# ----------------------------------------------------------------------------
# Deterministic parameter / input construction
# ----------------------------------------------------------------------------
def init_layer_params(key, in_dim, out_dim, K, num_filters):
    kW, kT = jax.random.split(key)
    limit = (6.0 / (in_dim + out_dim)) ** 0.5
    W = jax.random.uniform(kW, (num_filters, in_dim, out_dim), jnp.float32, -limit, limit)
    b = jnp.zeros((num_filters, out_dim), jnp.float32)
    theta = jnp.full((num_filters, K + 1), 1.0 / (K + 1), jnp.float32) + \
        0.01 * jax.random.normal(kT, (num_filters, K + 1), jnp.float32)
    gate = jnp.zeros((num_filters,), jnp.float32)           # sigmoid(0) = 0.5
    gamma = jnp.ones((out_dim,), jnp.float32)               # BatchNorm1d defaults
    beta = jnp.zeros((out_dim,), jnp.float32)
    return dict(W=W, b=b, theta=theta, gate=gate, gamma=gamma, beta=beta)


def build_normalized_adjacency(key, num_nodes, p_edge=0.05):
    a = (jax.random.uniform(key, (num_nodes, num_nodes)) < p_edge).astype(jnp.float32)
    a = jnp.maximum(a, a.T)                                 # symmetric
    a = a + jnp.eye(num_nodes, dtype=jnp.float32)           # self loops
    deg = jnp.sum(a, axis=1)
    d_inv_sqrt = 1.0 / jnp.sqrt(deg)
    return a * d_inv_sqrt[:, None] * d_inv_sqrt[None, :]    # D^-1/2 A D^-1/2


if __name__ == "__main__":
    # Small shapes consistent with citation-graph node classification
    N_NODES = 128
    IN_DIM = 64
    HIDDEN_DIM = 32
    N_CLASSES = 8
    K = 3
    NUM_FILTERS = 2
    N_LAYERS = 2   # 'L' -> total layers = L + 1

    key = jax.random.PRNGKey(0)
    k_adj, k_feat, *k_layers = jax.random.split(key, 2 + N_LAYERS + 1)

    A_hat = build_normalized_adjacency(k_adj, N_NODES)
    h = jax.random.normal(k_feat, (N_NODES, IN_DIM), jnp.float32)
    snorm_n = jnp.full((N_NODES, 1), 1.0 / jnp.sqrt(N_NODES), jnp.float32)

    dims = [(IN_DIM, HIDDEN_DIM)] + [(HIDDEN_DIM, HIDDEN_DIM)] * (N_LAYERS - 1) + \
           [(HIDDEN_DIM, N_CLASSES)]
    layer_params = [
        init_layer_params(k_layers[i], din, dout, K, NUM_FILTERS)
        for i, (din, dout) in enumerate(dims)
    ]

    fwd = jax.jit(functools.partial(autogcn_net_forward, K=K))
    out = jax.block_until_ready(fwd(layer_params, A_hat, h, snorm_n))

    assert out.shape == (N_NODES, N_CLASSES), out.shape
    assert bool(jnp.all(jnp.isfinite(out)))

    # Kernel uses bf16 MXU operands (f32 accumulation); reference is pure f32,
    # so allow a slightly wider absolute tolerance than the old f32-only kernel.
    ref = autogcn_net_reference(layer_params, A_hat, h, snorm_n, K=K)
    max_err = float(jnp.max(jnp.abs(out - ref)))
    assert max_err < 5e-2, f"mismatch vs reference: {max_err}"

    print("KERNEL_OK")
</pallas_src>

<mosaic_0001>
module attributes {stable_mosaic.version = 11 : i64} {
  func.func @_autogcn_net_kernel(%arg0: memref<3x128x128xbf16, #tpu.memory_space<vmem>>, %arg1: memref<128x128xf32, #tpu.memory_space<vmem>>, %arg2: memref<128x1xf32, #tpu.memory_space<vmem>>, %arg3: memref<3x128x512xbf16, #tpu.memory_space<vmem>>, %arg4: memref<3x1x128xf32, #tpu.memory_space<vmem>>, %arg5: memref<3x1x128xf32, #tpu.memory_space<vmem>>, %arg6: memref<3x1x128xf32, #tpu.memory_space<vmem>>, %arg7: memref<128x128xf32, #tpu.memory_space<vmem>>, %arg8: memref<128x128xf32, #tpu.memory_space<vmem>>) attributes {dimension_semantics = [], scalar_prefetch = 0 : i64, scratch_operands = 1 : i64, tpu.core_type = #tpu.core_type<tc>} {
    %c0 = arith.constant 0 : index
    %c0_0 = arith.constant 0 : index
    %0 = vector.load %arg1[%c0, %c0_0] : memref<128x128xf32, #tpu.memory_space<vmem>>, vector<128x128xf32>
    %c0_1 = arith.constant 0 : index
    %c0_2 = arith.constant 0 : index
    %1 = vector.load %arg8[%c0_1, %c0_2] : memref<128x128xf32, #tpu.memory_space<vmem>>, vector<128x128xf32>
    tpu.vector_store %arg8[%c0_1, %c0_2], %0 {strides = array<i32>} : memref<128x128xf32, #tpu.memory_space<vmem>>, vector<128x128xf32>,
    %c0_3 = arith.constant 0 : index
    %c0_4 = arith.constant 0 : index
    %2 = vector.load %arg8[%c0_3, %c0_4] : memref<128x128xf32, #tpu.memory_space<vmem>>, vector<128x128xf32>
    %3 = arith.truncf %2 : vector<128x128xf32> to vector<128x128xbf16>
    %c0_5 = arith.constant 0 : index
    %c0_6 = arith.constant 0 : index
    %c0_7 = arith.constant 0 : index
    %4 = vector.load %arg3[%c0_5, %c0_6, %c0_7] : memref<3x128x512xbf16, #tpu.memory_space<vmem>>, vector<1x128x512xbf16>
    %5 = vector.shape_cast %4 : vector<1x128x512xbf16> to vector<128x512xbf16>
    %cst = arith.constant dense<0.000000e+00> : vector<128x512xf32>
    %6 = tpu.matmul %3, %5, %cst {dimension_numbers = #tpu.dot_dimension_numbers<[1], [0], [0], [1], [0, 0, 1, 1], [], []>} : vector<128x128xbf16>, vector<128x512xbf16>, vector<128x512xf32> -> vector<128x512xf32>
    %7 = arith.truncf %6 : vector<128x512xf32> to vector<128x512xbf16>
    %8 = vector.extract_strided_slice %6 {offsets = [0, 0], sizes = [128, 128], strides = [1, 1]} : vector<128x512xf32> to vector<128x128xf32>
    %c0_8 = arith.constant 0 : index
    %c0_9 = arith.constant 0 : index
    %c0_10 = arith.constant 0 : index
    %9 = vector.load %arg0[%c0_8, %c0_9, %c0_10] : memref<3x128x128xbf16, #tpu.memory_space<vmem>>, vector<1x128x128xbf16>
    %10 = vector.shape_cast %9 : vector<1x128x128xbf16> to vector<128x128xbf16>
    %11 = vector.extract_strided_slice %7 {offsets = [0, 128], sizes = [128, 128], strides = [1, 1]} : vector<128x512xbf16> to vector<128x128xbf16>
    %cst_11 = arith.constant dense<0.000000e+00> : vector<128x128xf32>
    %12 = tpu.matmul %10, %11, %cst_11 {dimension_numbers = #tpu.dot_dimension_numbers<[1], [0], [0], [1], [0, 0, 1, 1], [], []>} : vector<128x128xbf16>, vector<128x128xbf16>, vector<128x128xf32> -> vector<128x128xf32>
    %13 = arith.addf %8, %12 : vector<128x128xf32>
    %c1 = arith.constant 1 : index
    %c0_12 = arith.constant 0 : index
    %c0_13 = arith.constant 0 : index
    %14 = vector.load %arg0[%c1, %c0_12, %c0_13] : memref<3x128x128xbf16, #tpu.memory_space<vmem>>, vector<1x128x128xbf16>
    %15 = vector.shape_cast %14 : vector<1x128x128xbf16> to vector<128x128xbf16>
    %16 = vector.extract_strided_slice %7 {offsets = [0, 256], sizes = [128, 128], strides = [1, 1]} : vector<128x512xbf16> to vector<128x128xbf16>
    %cst_14 = arith.constant dense<0.000000e+00> : vector<128x128xf32>
    %17 = tpu.matmul %15, %16, %cst_14 {dimension_numbers = #tpu.dot_dimension_numbers<[1], [0], [0], [1], [0, 0, 1, 1], [], []>} : vector<128x128xbf16>, vector<128x128xbf16>, vector<128x128xf32> -> vector<128x128xf32>
    %18 = arith.addf %13, %17 : vector<128x128xf32>
    %c2 = arith.constant 2 : index
    %c0_15 = arith.constant 0 : index
    %c0_16 = arith.constant 0 : index
    %19 = vector.load %arg0[%c2, %c0_15, %c0_16] : memref<3x128x128xbf16, #tpu.memory_space<vmem>>, vector<1x128x128xbf16>
    %20 = vector.shape_cast %19 : vector<1x128x128xbf16> to vector<128x128xbf16>
    %21 = vector.extract_strided_slice %7 {offsets = [0, 384], sizes = [128, 128], strides = [1, 1]} : vector<128x512xbf16> to vector<128x128xbf16>
    %cst_17 = arith.constant dense<0.000000e+00> : vector<128x128xf32>
    %22 = tpu.matmul %20, %21, %cst_17 {dimension_numbers = #tpu.dot_dimension_numbers<[1], [0], [0], [1], [0, 0, 1, 1], [], []>} : vector<128x128xbf16>, vector<128x128xbf16>, vector<128x128xf32> -> vector<128x128xf32>
    %23 = arith.addf %18, %22 : vector<128x128xf32>
    %c0_18 = arith.constant 0 : index
    %c0_19 = arith.constant 0 : index
    %c0_20 = arith.constant 0 : index
    %24 = vector.load %arg4[%c0_18, %c0_19, %c0_20] : memref<3x1x128xf32, #tpu.memory_space<vmem>>, vector<1x1x128xf32>
    %25 = vector.shape_cast %24 : vector<1x1x128xf32> to vector<1x128xf32>
    %26 = vector.broadcast %25 : vector<1x128xf32> to vector<128x128xf32>
    %27 = arith.addf %23, %26 : vector<128x128xf32>
    %c0_21 = arith.constant 0 : index
    %c0_22 = arith.constant 0 : index
    %28 = vector.load %arg2[%c0_21, %c0_22] : memref<128x1xf32, #tpu.memory_space<vmem>>, vector<128x1xf32>
    %29 = vector.broadcast %28 : vector<128x1xf32> to vector<128x128xf32>
    %30 = arith.mulf %27, %29 : vector<128x128xf32>
    %cst_23 = arith.constant dense<0.000000e+00> : vector<128xf32>
    %31 = vector.multi_reduction <add>, %30, %cst_23 [0] : vector<128x128xf32> to vector<128xf32>
    %32 = vector.shape_cast %31 : vector<128xf32> to vector<1x128xf32>
    %cst_24 = arith.constant 1.280000e+02 : f32
    %33 = vector.broadcast %cst_24 : f32 to vector<1x128xf32>
    %34 = arith.divf %32, %33 : vector<1x128xf32>
    %35 = arith.mulf %30, %30 : vector<128x128xf32>
    %cst_25 = arith.constant dense<0.000000e+00> : vector<128xf32>
    %36 = vector.multi_reduction <add>, %35, %cst_25 [0] : vector<128x128xf32> to vector<128xf32>
    %37 = vector.shape_cast %36 : vector<128xf32> to vector<1x128xf32>
    %cst_26 = arith.constant 1.280000e+02 : f32
    %38 = vector.broadcast %cst_26 : f32 to vector<1x128xf32>
    %39 = arith.divf %37, %38 : vector<1x128xf32>
    %40 = arith.mulf %34, %34 : vector<1x128xf32>
    %41 = arith.subf %39, %40 : vector<1x128xf32>
    %c0_27 = arith.constant 0 : index
    %c0_28 = arith.constant 0 : index
    %c0_29 = arith.constant 0 : index
    %42 = vector.load %arg5[%c0_27, %c0_28, %c0_29] : memref<3x1x128xf32, #tpu.memory_space<vmem>>, vector<1x1x128xf32>
    %43 = vector.shape_cast %42 : vector<1x1x128xf32> to vector<1x128xf32>
    %cst_30 = arith.constant 9.99999974E-6 : f32
    %44 = vector.broadcast %cst_30 : f32 to vector<1x128xf32>
    %45 = arith.addf %41, %44 : vector<1x128xf32>
    %46 = math.rsqrt %45 : vector<1x128xf32>
    %47 = arith.mulf %43, %46 : vector<1x128xf32>
    %c0_31 = arith.constant 0 : index
    %c0_32 = arith.constant 0 : index
    %c0_33 = arith.constant 0 : index
    %48 = vector.load %arg6[%c0_31, %c0_32, %c0_33] : memref<3x1x128xf32, #tpu.memory_space<vmem>>, vector<1x1x128xf32>
    %49 = vector.shape_cast %48 : vector<1x1x128xf32> to vector<1x128xf32>
    %50 = arith.mulf %34, %47 : vector<1x128xf32>
    %51 = arith.subf %49, %50 : vector<1x128xf32>
    %52 = vector.broadcast %47 : vector<1x128xf32> to vector<128x128xf32>
    %53 = arith.mulf %30, %52 : vector<128x128xf32>
    %54 = vector.broadcast %51 : vector<1x128xf32> to vector<128x128xf32>
    %55 = arith.addf %53, %54 : vector<128x128xf32>
    %cst_34 = arith.constant 0.000000e+00 : f32
    %56 = vector.broadcast %cst_34 : f32 to vector<128x128xf32>
    %57 = arith.maximumf %55, %56 : vector<128x128xf32>
    %c0_35 = arith.constant 0 : index
    %c0_36 = arith.constant 0 : index
    %58 = vector.load %arg8[%c0_35, %c0_36] : memref<128x128xf32, #tpu.memory_space<vmem>>, vector<128x128xf32>
    tpu.vector_store %arg8[%c0_35, %c0_36], %57 {strides = array<i32>} : memref<128x128xf32, #tpu.memory_space<vmem>>, vector<128x128xf32>,
    %c0_37 = arith.constant 0 : index
    %c0_38 = arith.constant 0 : index
    %59 = vector.load %arg8[%c0_37, %c0_38] : memref<128x128xf32, #tpu.memory_space<vmem>>, vector<128x128xf32>
    %60 = arith.truncf %59 : vector<128x128xf32> to vector<128x128xbf16>
    %c1_39 = arith.constant 1 : index
    %c0_40 = arith.constant 0 : index
    %c0_41 = arith.constant 0 : index
    %61 = vector.load %arg3[%c1_39, %c0_40, %c0_41] : memref<3x128x512xbf16, #tpu.memory_space<vmem>>, vector<1x128x512xbf16>
    %62 = vector.shape_cast %61 : vector<1x128x512xbf16> to vector<128x512xbf16>
    %cst_42 = arith.constant dense<0.000000e+00> : vector<128x512xf32>
    %63 = tpu.matmul %60, %62, %cst_42 {dimension_numbers = #tpu.dot_dimension_numbers<[1], [0], [0], [1], [0, 0, 1, 1], [], []>} : vector<128x128xbf16>, vector<128x512xbf16>, vector<128x512xf32> -> vector<128x512xf32>
    %64 = arith.truncf %63 : vector<128x512xf32> to vector<128x512xbf16>
    %65 = vector.extract_strided_slice %63 {offsets = [0, 0], sizes = [128, 128], strides = [1, 1]} : vector<128x512xf32> to vector<128x128xf32>
    %c0_43 = arith.constant 0 : index
    %c0_44 = arith.constant 0 : index
    %c0_45 = arith.constant 0 : index
    %66 = vector.load %arg0[%c0_43, %c0_44, %c0_45] : memref<3x128x128xbf16, #tpu.memory_space<vmem>>, vector<1x128x128xbf16>
    %67 = vector.shape_cast %66 : vector<1x128x128xbf16> to vector<128x128xbf16>
    %68 = vector.extract_strided_slice %64 {offsets = [0, 128], sizes = [128, 128], strides = [1, 1]} : vector<128x512xbf16> to vector<128x128xbf16>
    %cst_46 = arith.constant dense<0.000000e+00> : vector<128x128xf32>
    %69 = tpu.matmul %67, %68, %cst_46 {dimension_numbers = #tpu.dot_dimension_numbers<[1], [0], [0], [1], [0, 0, 1, 1], [], []>} : vector<128x128xbf16>, vector<128x128xbf16>, vector<128x128xf32> -> vector<128x128xf32>
    %70 = arith.addf %65, %69 : vector<128x128xf32>
    %c1_47 = arith.constant 1 : index
    %c0_48 = arith.constant 0 : index
    %c0_49 = arith.constant 0 : index
    %71 = vector.load %arg0[%c1_47, %c0_48, %c0_49] : memref<3x128x128xbf16, #tpu.memory_space<vmem>>, vector<1x128x128xbf16>
    %72 = vector.shape_cast %71 : vector<1x128x128xbf16> to vector<128x128xbf16>
    %73 = vector.extract_strided_slice %64 {offsets = [0, 256], sizes = [128, 128], strides = [1, 1]} : vector<128x512xbf16> to vector<128x128xbf16>
    %cst_50 = arith.constant dense<0.000000e+00> : vector<128x128xf32>
    %74 = tpu.matmul %72, %73, %cst_50 {dimension_numbers = #tpu.dot_dimension_numbers<[1], [0], [0], [1], [0, 0, 1, 1], [], []>} : vector<128x128xbf16>, vector<128x128xbf16>, vector<128x128xf32> -> vector<128x128xf32>
    %75 = arith.addf %70, %74 : vector<128x128xf32>
    %c2_51 = arith.constant 2 : index
    %c0_52 = arith.constant 0 : index
    %c0_53 = arith.constant 0 : index
    %76 = vector.load %arg0[%c2_51, %c0_52, %c0_53] : memref<3x128x128xbf16, #tpu.memory_space<vmem>>, vector<1x128x128xbf16>
    %77 = vector.shape_cast %76 : vector<1x128x128xbf16> to vector<128x128xbf16>
    %78 = vector.extract_strided_slice %64 {offsets = [0, 384], sizes = [128, 128], strides = [1, 1]} : vector<128x512xbf16> to vector<128x128xbf16>
    %cst_54 = arith.constant dense<0.000000e+00> : vector<128x128xf32>
    %79 = tpu.matmul %77, %78, %cst_54 {dimension_numbers = #tpu.dot_dimension_numbers<[1], [0], [0], [1], [0, 0, 1, 1], [], []>} : vector<128x128xbf16>, vector<128x128xbf16>, vector<128x128xf32> -> vector<128x128xf32>
    %80 = arith.addf %75, %79 : vector<128x128xf32>
    %c1_55 = arith.constant 1 : index
    %c0_56 = arith.constant 0 : index
    %c0_57 = arith.constant 0 : index
    %81 = vector.load %arg4[%c1_55, %c0_56, %c0_57] : memref<3x1x128xf32, #tpu.memory_space<vmem>>, vector<1x1x128xf32>
    %82 = vector.shape_cast %81 : vector<1x1x128xf32> to vector<1x128xf32>
    %83 = vector.broadcast %82 : vector<1x128xf32> to vector<128x128xf32>
    %84 = arith.addf %80, %83 : vector<128x128xf32>
    %c0_58 = arith.constant 0 : index
    %c0_59 = arith.constant 0 : index
    %85 = vector.load %arg2[%c0_58, %c0_59] : memref<128x1xf32, #tpu.memory_space<vmem>>, vector<128x1xf32>
    %86 = vector.broadcast %85 : vector<128x1xf32> to vector<128x128xf32>
    %87 = arith.mulf %84, %86 : vector<128x128xf32>
    %cst_60 = arith.constant dense<0.000000e+00> : vector<128xf32>
    %88 = vector.multi_reduction <add>, %87, %cst_60 [0] : vector<128x128xf32> to vector<128xf32>
    %89 = vector.shape_cast %88 : vector<128xf32> to vector<1x128xf32>
    %cst_61 = arith.constant 1.280000e+02 : f32
    %90 = vector.broadcast %cst_61 : f32 to vector<1x128xf32>
    %91 = arith.divf %89, %90 : vector<1x128xf32>
    %92 = arith.mulf %87, %87 : vector<128x128xf32>
    %cst_62 = arith.constant dense<0.000000e+00> : vector<128xf32>
    %93 = vector.multi_reduction <add>, %92, %cst_62 [0] : vector<128x128xf32> to vector<128xf32>
    %94 = vector.shape_cast %93 : vector<128xf32> to vector<1x128xf32>
    %cst_63 = arith.constant 1.280000e+02 : f32
    %95 = vector.broadcast %cst_63 : f32 to vector<1x128xf32>
    %96 = arith.divf %94, %95 : vector<1x128xf32>
    %97 = arith.mulf %91, %91 : vector<1x128xf32>
    %98 = arith.subf %96, %97 : vector<1x128xf32>
    %c1_64 = arith.constant 1 : index
    %c0_65 = arith.constant 0 : index
    %c0_66 = arith.constant 0 : index
    %99 = vector.load %arg5[%c1_64, %c0_65, %c0_66] : memref<3x1x128xf32, #tpu.memory_space<vmem>>, vector<1x1x128xf32>
    %100 = vector.shape_cast %99 : vector<1x1x128xf32> to vector<1x128xf32>
    %cst_67 = arith.constant 9.99999974E-6 : f32
    %101 = vector.broadcast %cst_67 : f32 to vector<1x128xf32>
    %102 = arith.addf %98, %101 : vector<1x128xf32>
    %103 = math.rsqrt %102 : vector<1x128xf32>
    %104 = arith.mulf %100, %103 : vector<1x128xf32>
    %c1_68 = arith.constant 1 : index
    %c0_69 = arith.constant 0 : index
    %c0_70 = arith.constant 0 : index
    %105 = vector.load %arg6[%c1_68, %c0_69, %c0_70] : memref<3x1x128xf32, #tpu.memory_space<vmem>>, vector<1x1x128xf32>
    %106 = vector.shape_cast %105 : vector<1x1x128xf32> to vector<1x128xf32>
    %107 = arith.mulf %91, %104 : vector<1x128xf32>
    %108 = arith.subf %106, %107 : vector<1x128xf32>
    %109 = vector.broadcast %104 : vector<1x128xf32> to vector<128x128xf32>
    %110 = arith.mulf %87, %109 : vector<128x128xf32>
    %111 = vector.broadcast %108 : vector<1x128xf32> to vector<128x128xf32>
    %112 = arith.addf %110, %111 : vector<128x128xf32>
    %cst_71 = arith.constant 0.000000e+00 : f32
    %113 = vector.broadcast %cst_71 : f32 to vector<128x128xf32>
    %114 = arith.maximumf %112, %113 : vector<128x128xf32>
    %c0_72 = arith.constant 0 : index
    %c0_73 = arith.constant 0 : index
    %115 = vector.load %arg8[%c0_72, %c0_73] : memref<128x128xf32, #tpu.memory_space<vmem>>, vector<128x128xf32>
    %116 = arith.addf %114, %115 : vector<128x128xf32>
    %c0_74 = arith.constant 0 : index
    %c0_75 = arith.constant 0 : index
    %117 = vector.load %arg8[%c0_74, %c0_75] : memref<128x128xf32, #tpu.memory_space<vmem>>, vector<128x128xf32>
    tpu.vector_store %arg8[%c0_74, %c0_75], %116 {strides = array<i32>} : memref<128x128xf32, #tpu.memory_space<vmem>>, vector<128x128xf32>,
    %c0_76 = arith.constant 0 : index
    %c0_77 = arith.constant 0 : index
    %118 = vector.load %arg8[%c0_76, %c0_77] : memref<128x128xf32, #tpu.memory_space<vmem>>, vector<128x128xf32>
    %119 = arith.truncf %118 : vector<128x128xf32> to vector<128x128xbf16>
    %c2_78 = arith.constant 2 : index
    %c0_79 = arith.constant 0 : index
    %c0_80 = arith.constant 0 : index
    %120 = vector.load %arg3[%c2_78, %c0_79, %c0_80] : memref<3x128x512xbf16, #tpu.memory_space<vmem>>, vector<1x128x512xbf16>
    %121 = vector.shape_cast %120 : vector<1x128x512xbf16> to vector<128x512xbf16>
    %cst_81 = arith.constant dense<0.000000e+00> : vector<128x512xf32>
    %122 = tpu.matmul %119, %121, %cst_81 {dimension_numbers = #tpu.dot_dimension_numbers<[1], [0], [0], [1], [0, 0, 1, 1], [], []>} : vector<128x128xbf16>, vector<128x512xbf16>, vector<128x512xf32> -> vector<128x512xf32>
    %123 = arith.truncf %122 : vector<128x512xf32> to vector<128x512xbf16>
    %124 = vector.extract_strided_slice %122 {offsets = [0, 0], sizes = [128, 128], strides = [1, 1]} : vector<128x512xf32> to vector<128x128xf32>
    %c0_82 = arith.constant 0 : index
    %c0_83 = arith.constant 0 : index
    %c0_84 = arith.constant 0 : index
    %125 = vector.load %arg0[%c0_82, %c0_83, %c0_84] : memref<3x128x128xbf16, #tpu.memory_space<vmem>>, vector<1x128x128xbf16>
    %126 = vector.shape_cast %125 : vector<1x128x128xbf16> to vector<128x128xbf16>
    %127 = vector.extract_strided_slice %123 {offsets = [0, 128], sizes = [128, 128], strides = [1, 1]} : vector<128x512xbf16> to vector<128x128xbf16>
    %cst_85 = arith.constant dense<0.000000e+00> : vector<128x128xf32>
    %128 = tpu.matmul %126, %127, %cst_85 {dimension_numbers = #tpu.dot_dimension_numbers<[1], [0], [0], [1], [0, 0, 1, 1], [], []>} : vector<128x128xbf16>, vector<128x128xbf16>, vector<128x128xf32> -> vector<128x128xf32>
    %129 = arith.addf %124, %128 : vector<128x128xf32>
    %c1_86 = arith.constant 1 : index
    %c0_87 = arith.constant 0 : index
    %c0_88 = arith.constant 0 : index
    %130 = vector.load %arg0[%c1_86, %c0_87, %c0_88] : memref<3x128x128xbf16, #tpu.memory_space<vmem>>, vector<1x128x128xbf16>
    %131 = vector.shape_cast %130 : vector<1x128x128xbf16> to vector<128x128xbf16>
    %132 = vector.extract_strided_slice %123 {offsets = [0, 256], sizes = [128, 128], strides = [1, 1]} : vector<128x512xbf16> to vector<128x128xbf16>
    %cst_89 = arith.constant dense<0.000000e+00> : vector<128x128xf32>
    %133 = tpu.matmul %131, %132, %cst_89 {dimension_numbers = #tpu.dot_dimension_numbers<[1], [0], [0], [1], [0, 0, 1, 1], [], []>} : vector<128x128xbf16>, vector<128x128xbf16>, vector<128x128xf32> -> vector<128x128xf32>
    %134 = arith.addf %129, %133 : vector<128x128xf32>
    %c2_90 = arith.constant 2 : index
    %c0_91 = arith.constant 0 : index
    %c0_92 = arith.constant 0 : index
    %135 = vector.load %arg0[%c2_90, %c0_91, %c0_92] : memref<3x128x128xbf16, #tpu.memory_space<vmem>>, vector<1x128x128xbf16>
    %136 = vector.shape_cast %135 : vector<1x128x128xbf16> to vector<128x128xbf16>
    %137 = vector.extract_strided_slice %123 {offsets = [0, 384], sizes = [128, 128], strides = [1, 1]} : vector<128x512xbf16> to vector<128x128xbf16>
    %cst_93 = arith.constant dense<0.000000e+00> : vector<128x128xf32>
    %138 = tpu.matmul %136, %137, %cst_93 {dimension_numbers = #tpu.dot_dimension_numbers<[1], [0], [0], [1], [0, 0, 1, 1], [], []>} : vector<128x128xbf16>, vector<128x128xbf16>, vector<128x128xf32> -> vector<128x128xf32>
    %139 = arith.addf %134, %138 : vector<128x128xf32>
    %c2_94 = arith.constant 2 : index
    %c0_95 = arith.constant 0 : index
    %c0_96 = arith.constant 0 : index
    %140 = vector.load %arg4[%c2_94, %c0_95, %c0_96] : memref<3x1x128xf32, #tpu.memory_space<vmem>>, vector<1x1x128xf32>
    %141 = vector.shape_cast %140 : vector<1x1x128xf32> to vector<1x128xf32>
    %142 = vector.broadcast %141 : vector<1x128xf32> to vector<128x128xf32>
    %143 = arith.addf %139, %142 : vector<128x128xf32>
    %c0_97 = arith.constant 0 : index
    %c0_98 = arith.constant 0 : index
    %144 = vector.load %arg2[%c0_97, %c0_98] : memref<128x1xf32, #tpu.memory_space<vmem>>, vector<128x1xf32>
    %145 = vector.broadcast %144 : vector<128x1xf32> to vector<128x128xf32>
    %146 = arith.mulf %143, %145 : vector<128x128xf32>
    %cst_99 = arith.constant dense<0.000000e+00> : vector<128xf32>
    %147 = vector.multi_reduction <add>, %146, %cst_99 [0] : vector<128x128xf32> to vector<128xf32>
    %148 = vector.shape_cast %147 : vector<128xf32> to vector<1x128xf32>
    %cst_100 = arith.constant 1.280000e+02 : f32
    %149 = vector.broadcast %cst_100 : f32 to vector<1x128xf32>
    %150 = arith.divf %148, %149 : vector<1x128xf32>
    %151 = arith.mulf %146, %146 : vector<128x128xf32>
    %cst_101 = arith.constant dense<0.000000e+00> : vector<128xf32>
    %152 = vector.multi_reduction <add>, %151, %cst_101 [0] : vector<128x128xf32> to vector<128xf32>
    %153 = vector.shape_cast %152 : vector<128xf32> to vector<1x128xf32>
    %cst_102 = arith.constant 1.280000e+02 : f32
    %154 = vector.broadcast %cst_102 : f32 to vector<1x128xf32>
    %155 = arith.divf %153, %154 : vector<1x128xf32>
    %156 = arith.mulf %150, %150 : vector<1x128xf32>
    %157 = arith.subf %155, %156 : vector<1x128xf32>
    %c2_103 = arith.constant 2 : index
    %c0_104 = arith.constant 0 : index
    %c0_105 = arith.constant 0 : index
    %158 = vector.load %arg5[%c2_103, %c0_104, %c0_105] : memref<3x1x128xf32, #tpu.memory_space<vmem>>, vector<1x1x128xf32>
    %159 = vector.shape_cast %158 : vector<1x1x128xf32> to vector<1x128xf32>
    %cst_106 = arith.constant 9.99999974E-6 : f32
    %160 = vector.broadcast %cst_106 : f32 to vector<1x128xf32>
    %161 = arith.addf %157, %160 : vector<1x128xf32>
    %162 = math.rsqrt %161 : vector<1x128xf32>
    %163 = arith.mulf %159, %162 : vector<1x128xf32>
    %c2_107 = arith.constant 2 : index
    %c0_108 = arith.constant 0 : index
    %c0_109 = arith.constant 0 : index
    %164 = vector.load %arg6[%c2_107, %c0_108, %c0_109] : memref<3x1x128xf32, #tpu.memory_space<vmem>>, vector<1x1x128xf32>
    %165 = vector.shape_cast %164 : vector<1x1x128xf32> to vector<1x128xf32>
    %166 = arith.mulf %150, %163 : vector<1x128xf32>
    %167 = arith.subf %165, %166 : vector<1x128xf32>
    %168 = vector.broadcast %163 : vector<1x128xf32> to vector<128x128xf32>
    %169 = arith.mulf %146, %168 : vector<128x128xf32>
    %170 = vector.broadcast %167 : vector<1x128xf32> to vector<128x128xf32>
    %171 = arith.addf %169, %170 : vector<128x128xf32>
    %c0_110 = arith.constant 0 : index
    %c0_111 = arith.constant 0 : index
    %172 = vector.load %arg7[%c0_110, %c0_111] : memref<128x128xf32, #tpu.memory_space<vmem>>, vector<128x128xf32>
    tpu.vector_store %arg7[%c0_110, %c0_111], %171 {strides = array<i32>} : memref<128x128xf32, #tpu.memory_space<vmem>>, vector<128x128xf32>,
    return
  }
}

</mosaic_0001>

<llo_original>
// kernel: autogcn_net_forward.1
$region0: #{autogcn_net_forward.1}
  #allocation0 [shape = 'u32[]', space=smem, size = 0x4, offset = 0x4, fixed_abs, tag = 'smem constant byte address 0x4 - core index']
  #allocation1 [shape = 'u32[144,128]{1,0:T(1,128)}', space=vmem, size = 0x12000, scoped, tag = 'internal scratch']
  #allocation2 [shape = 'f32[128,128]{1,0:T(8,128)}', space=vmem, size = 0x10000, scoped, tag = 'scratch operand']
  %s0 = inlined_call_operand.vmem [shape: bf16[3,128,128], index: 0, kind: input, shape index: {}]
  %s1 = inlined_call_operand.vmem [shape: f32[128,128], index: 1, kind: input, shape index: {}]
  %s2 = inlined_call_operand.vmem [shape: f32[128,1], index: 2, kind: input, shape index: {}]
  %s3 = inlined_call_operand.vmem [shape: bf16[3,128,512], index: 3, kind: input, shape index: {}]
  %s4 = inlined_call_operand.vmem [shape: f32[3,1,128], index: 4, kind: input, shape index: {}]
  %s5 = inlined_call_operand.vmem [shape: f32[3,1,128], index: 5, kind: input, shape index: {}]
  %s6 = inlined_call_operand.vmem [shape: f32[3,1,128], index: 6, kind: input, shape index: {}]
  %s7 = inlined_call_operand.vmem [shape: f32[128,128], index: 7, kind: output, shape index: {}]
  %s8 = sld [smem:[#allocation0]]
  $region38: #{autogcn_net_forward.1} parent=0
    _
  %s10 = ssub.s32 1, %s8
  %s11 = scalar_select 0, %s10, %s8
  // Predicated region
  $region2: #{autogcn_net_forward.1} parent=0 // pred_check
    _
  $region3: #{autogcn_net_forward.1} parent=0 // pred_check_branch
    %13 = sbr.rel (0) target = $region5
  $region4: #{autogcn_net_forward.1} parent=0 // pred_region
    _
  $region5: #{autogcn_net_forward.1} parent=0 // pred_fallthru
    _
  // Predicated region
  $region6: #{autogcn_net_forward.1} parent=0 // pred_check
    _
  $region7: #{autogcn_net_forward.1} parent=0 // pred_check_branch
    %15 = sbr.rel (0) target = $region9
  $region8: #{autogcn_net_forward.1} parent=0 // pred_region
    _
  $region9: #{autogcn_net_forward.1} parent=0 // pred_fallthru
    _
  // Predicated region
  $region10: #{autogcn_net_forward.1} parent=0 // pred_check
    _
  $region11: #{autogcn_net_forward.1} parent=0 // pred_check_branch
    %17 = sbr.rel (0) target = $region13
  $region12: #{autogcn_net_forward.1} parent=0 // pred_region
    _
  $region13: #{autogcn_net_forward.1} parent=0 // pred_fallthru
    _
  // Predicated region
  $region14: #{autogcn_net_forward.1} parent=0 // pred_check
    _
  $region15: #{autogcn_net_forward.1} parent=0 // pred_check_branch
    %19 = sbr.rel (0) target = $region17
  $region16: #{autogcn_net_forward.1} parent=0 // pred_region
    _
  $region17: #{autogcn_net_forward.1} parent=0 // pred_fallthru
    _
  // Predicated region
  $region18: #{autogcn_net_forward.1} parent=0 // pred_check
    _
  $region19: #{autogcn_net_forward.1} parent=0 // pred_check_branch
    %21 = sbr.rel (0) target = $region21
  $region20: #{autogcn_net_forward.1} parent=0 // pred_region
    _
  $region21: #{autogcn_net_forward.1} parent=0 // pred_fallthru
    _
  // Predicated region
  $region22: #{autogcn_net_forward.1} parent=0 // pred_check
    _
  $region23: #{autogcn_net_forward.1} parent=0 // pred_check_branch
    %23 = sbr.rel (0) target = $region25
  $region24: #{autogcn_net_forward.1} parent=0 // pred_region
    _
  $region25: #{autogcn_net_forward.1} parent=0 // pred_fallthru
    _
  // Predicated region
  $region26: #{autogcn_net_forward.1} parent=0 // pred_check
    _
  $region27: #{autogcn_net_forward.1} parent=0 // pred_check_branch
    %25 = sbr.rel (0) target = $region29
  $region28: #{autogcn_net_forward.1} parent=0 // pred_region
    _
  $region29: #{autogcn_net_forward.1} parent=0 // pred_fallthru
    _
  %v27 = vld [vmem:[%s1] sm:$0xff]
  %v28 = vld [vmem:[%s1 + $0x8] sm:$0xff]
  %v29 = vld [vmem:[%s1 + $0x10] sm:$0xff]
  %v30 = vld [vmem:[%s1 + $0x18] sm:$0xff]
  %v31 = vld [vmem:[%s1 + $0x20] sm:$0xff]
  %v32 = vld [vmem:[%s1 + $0x28] sm:$0xff]
  %v33 = vld [vmem:[%s1 + $0x30] sm:$0xff]
  %v34 = vld [vmem:[%s1 + $0x38] sm:$0xff]
  %v35 = vld [vmem:[%s1 + $0x40] sm:$0xff]
  %v36 = vld [vmem:[%s1 + $0x48] sm:$0xff]
  %v37 = vld [vmem:[%s1 + $0x50] sm:$0xff]
  %v38 = vld [vmem:[%s1 + $0x58] sm:$0xff]
  %v39 = vld [vmem:[%s1 + $0x60] sm:$0xff]
  %v40 = vld [vmem:[%s1 + $0x68] sm:$0xff]
  %v41 = vld [vmem:[%s1 + $0x70] sm:$0xff]
  %v42 = vld [vmem:[%s1 + $0x78] sm:$0xff]
  %43 = vst [vmem:[#allocation2] sm:$0xff] %v27
  %44 = vst [vmem:[#allocation2 + $0x8] sm:$0xff] %v28
  %45 = vst [vmem:[#allocation2 + $0x10] sm:$0xff] %v29
  %46 = vst [vmem:[#allocation2 + $0x18] sm:$0xff] %v30
  %47 = vst [vmem:[#allocation2 + $0x20] sm:$0xff] %v31
  %48 = vst [vmem:[#allocation2 + $0x28] sm:$0xff] %v32
  %49 = vst [vmem:[#allocation2 + $0x30] sm:$0xff] %v33
  %50 = vst [vmem:[#allocation2 + $0x38] sm:$0xff] %v34
  %51 = vst [vmem:[#allocation2 + $0x40] sm:$0xff] %v35
  %52 = vst [vmem:[#allocation2 + $0x48] sm:$0xff] %v36
  %53 = vst [vmem:[#allocation2 + $0x50] sm:$0xff] %v37
  %54 = vst [vmem:[#allocation2 + $0x58] sm:$0xff] %v38
  %55 = vst [vmem:[#allocation2 + $0x60] sm:$0xff] %v39
  %56 = vst [vmem:[#allocation2 + $0x68] sm:$0xff] %v40
  %57 = vst [vmem:[#allocation2 + $0x70] sm:$0xff] %v41
  %58 = vst [vmem:[#allocation2 + $0x78] sm:$0xff] %v42
  %v59 = vld [vmem:[#allocation2] sm:$0xff]
  %v60 = vld [vmem:[#allocation2 + $0x8] sm:$0xff]
  %v61 = vld [vmem:[#allocation2 + $0x10] sm:$0xff]
  %v62 = vld [vmem:[#allocation2 + $0x18] sm:$0xff]
  %v63 = vld [vmem:[#allocation2 + $0x20] sm:$0xff]
  %v64 = vld [vmem:[#allocation2 + $0x28] sm:$0xff]
  %v65 = vld [vmem:[#allocation2 + $0x30] sm:$0xff]
  %v66 = vld [vmem:[#allocation2 + $0x38] sm:$0xff]
  %v67 = vld [vmem:[#allocation2 + $0x40] sm:$0xff]
  %v68 = vld [vmem:[#allocation2 + $0x48] sm:$0xff]
  %v69 = vld [vmem:[#allocation2 + $0x50] sm:$0xff]
  %v70 = vld [vmem:[#allocation2 + $0x58] sm:$0xff]
  %v71 = vld [vmem:[#allocation2 + $0x60] sm:$0xff]
  %v72 = vld [vmem:[#allocation2 + $0x68] sm:$0xff]
  %v73 = vld [vmem:[#allocation2 + $0x70] sm:$0xff]
  %v74 = vld [vmem:[#allocation2 + $0x78] sm:$0xff]
  %v75 = vpack.c.bf16 %v60, %v59
  %v76 = vpack.c.bf16 %v62, %v61
  %v77 = vpack.c.bf16 %v64, %v63
  %v78 = vpack.c.bf16 %v66, %v65
  %v79 = vpack.c.bf16 %v68, %v67
  %v80 = vpack.c.bf16 %v70, %v69
  %v81 = vpack.c.bf16 %v72, %v71
  %v82 = vpack.c.bf16 %v74, %v73
  %v83 = vld [vmem:[%s3] sm:$0xff]
  %v84 = vld [vmem:[%s3 + $0x8] sm:$0xff]
  %v85 = vld [vmem:[%s3 + $0x10] sm:$0xff]
  %v86 = vld [vmem:[%s3 + $0x18] sm:$0xff]
  %v87 = vld [vmem:[%s3 + $0x20] sm:$0xff]
  %v88 = vld [vmem:[%s3 + $0x28] sm:$0xff]
  %v89 = vld [vmem:[%s3 + $0x30] sm:$0xff]
  %v90 = vld [vmem:[%s3 + $0x38] sm:$0xff]
  %v91 = vld [vmem:[%s3 + $0x40] sm:$0xff]
  %v92 = vld [vmem:[%s3 + $0x48] sm:$0xff]
  %v93 = vld [vmem:[%s3 + $0x50] sm:$0xff]
  %v94 = vld [vmem:[%s3 + $0x58] sm:$0xff]
  %v95 = vld [vmem:[%s3 + $0x60] sm:$0xff]
  %v96 = vld [vmem:[%s3 + $0x68] sm:$0xff]
  %v97 = vld [vmem:[%s3 + $0x70] sm:$0xff]
  %v98 = vld [vmem:[%s3 + $0x78] sm:$0xff]
  %v99 = vld [vmem:[%s3 + $0x80] sm:$0xff]
  %v100 = vld [vmem:[%s3 + $0x88] sm:$0xff]
  %v101 = vld [vmem:[%s3 + $0x90] sm:$0xff]
  %v102 = vld [vmem:[%s3 + $0x98] sm:$0xff]
  %v103 = vld [vmem:[%s3 + $0xa0] sm:$0xff]
  %v104 = vld [vmem:[%s3 + $0xa8] sm:$0xff]
  %v105 = vld [vmem:[%s3 + $0xb0] sm:$0xff]
  %v106 = vld [vmem:[%s3 + $0xb8] sm:$0xff]
  %v107 = vld [vmem:[%s3 + $0xc0] sm:$0xff]
  %v108 = vld [vmem:[%s3 + $0xc8] sm:$0xff]
  %v109 = vld [vmem:[%s3 + $0xd0] sm:$0xff]
  %v110 = vld [vmem:[%s3 + $0xd8] sm:$0xff]
  %v111 = vld [vmem:[%s3 + $0xe0] sm:$0xff]
  %v112 = vld [vmem:[%s3 + $0xe8] sm:$0xff]
  %v113 = vld [vmem:[%s3 + $0xf0] sm:$0xff]
  %v114 = vld [vmem:[%s3 + $0xf8] sm:$0xff]
  %v147 = vunpack.c.l.b16 %v83
  %v148 = vunpack.c.h.b16 %v83
  %v149 = vunpack.c.l.b16 %v84
  %v150 = vunpack.c.h.b16 %v84
  %v151 = vunpack.c.l.b16 %v85
  %v152 = vunpack.c.h.b16 %v85
  %v153 = vunpack.c.l.b16 %v86
  %v154 = vunpack.c.h.b16 %v86
  %v155 = vunpack.c.l.b16 %v87
  %v156 = vunpack.c.h.b16 %v87
  %v157 = vunpack.c.l.b16 %v88
  %v158 = vunpack.c.h.b16 %v88
  %v159 = vunpack.c.l.b16 %v89
  %v160 = vunpack.c.h.b16 %v89
  %v161 = vunpack.c.l.b16 %v90
  %v162 = vunpack.c.h.b16 %v90
  %v163 = vunpack.c.l.b16 %v91
  %v164 = vunpack.c.h.b16 %v91
  %v165 = vunpack.c.l.b16 %v92
  %v166 = vunpack.c.h.b16 %v92
  %v167 = vunpack.c.l.b16 %v93
  %v168 = vunpack.c.h.b16 %v93
  %v169 = vunpack.c.l.b16 %v94
  %v170 = vunpack.c.h.b16 %v94
  %v171 = vunpack.c.l.b16 %v95
  %v172 = vunpack.c.h.b16 %v95
  %v173 = vunpack.c.l.b16 %v96
  %v174 = vunpack.c.h.b16 %v96
  %v175 = vunpack.c.l.b16 %v97
  %v176 = vunpack.c.h.b16 %v97
  %v177 = vunpack.c.l.b16 %v98
  %v178 = vunpack.c.h.b16 %v98
  %v179 = vunpack.c.l.b16 %v99
  %v180 = vunpack.c.h.b16 %v99
  %v181 = vunpack.c.l.b16 %v100
  %v182 = vunpack.c.h.b16 %v100
  %v183 = vunpack.c.l.b16 %v101
  %v184 = vunpack.c.h.b16 %v101
  %v185 = vunpack.c.l.b16 %v102
  %v186 = vunpack.c.h.b16 %v102
  %v187 = vunpack.c.l.b16 %v103
  %v188 = vunpack.c.h.b16 %v103
  %v189 = vunpack.c.l.b16 %v104
  %v190 = vunpack.c.h.b16 %v104
  %v191 = vunpack.c.l.b16 %v105
  %v192 = vunpack.c.h.b16 %v105
  %v193 = vunpack.c.l.b16 %v106
  %v194 = vunpack.c.h.b16 %v106
  %v195 = vunpack.c.l.b16 %v107
  %v196 = vunpack.c.h.b16 %v107
  %v197 = vunpack.c.l.b16 %v108
  %v198 = vunpack.c.h.b16 %v108
  %v199 = vunpack.c.l.b16 %v109
  %v200 = vunpack.c.h.b16 %v109
  %v201 = vunpack.c.l.b16 %v110
  %v202 = vunpack.c.h.b16 %v110
  %v203 = vunpack.c.l.b16 %v111
  %v204 = vunpack.c.h.b16 %v111
  %v205 = vunpack.c.l.b16 %v112
  %v206 = vunpack.c.h.b16 %v112
  %v207 = vunpack.c.l.b16 %v113
  %v208 = vunpack.c.h.b16 %v113
  %v209 = vunpack.c.l.b16 %v114
  %v210 = vunpack.c.h.b16 %v114
  %v211 = vpack.c.b16 %v151, %v147
  %v212 = vpack.c.b16 %v152, %v148
  %v213 = vpack.c.b16 %v153, %v149
  %v214 = vpack.c.b16 %v154, %v150
  %v215 = vpack.c.b16 %v159, %v155
  %v216 = vpack.c.b16 %v160, %v156
  %v217 = vpack.c.b16 %v161, %v157
  %v218 = vpack.c.b16 %v162, %v158
  %v219 = vpack.c.b16 %v167, %v163
  %v220 = vpack.c.b16 %v168, %v164
  %v221 = vpack.c.b16 %v169, %v165
  %v222 = vpack.c.b16 %v170, %v166
  %v223 = vpack.c.b16 %v175, %v171
  %v224 = vpack.c.b16 %v176, %v172
  %v225 = vpack.c.b16 %v177, %v173
  %v226 = vpack.c.b16 %v178, %v174
  %v227 = vpack.c.b16 %v183, %v179
  %v228 = vpack.c.b16 %v184, %v180
  %v229 = vpack.c.b16 %v185, %v181
  %v230 = vpack.c.b16 %v186, %v182
  %v231 = vpack.c.b16 %v191, %v187
  %v232 = vpack.c.b16 %v192, %v188
  %v233 = vpack.c.b16 %v193, %v189
  %v234 = vpack.c.b16 %v194, %v190
  %v235 = vpack.c.b16 %v199, %v195
  %v236 = vpack.c.b16 %v200, %v196
  %v237 = vpack.c.b16 %v201, %v197
  %v238 = vpack.c.b16 %v202, %v198
  %v239 = vpack.c.b16 %v207, %v203
  %v240 = vpack.c.b16 %v208, %v204
  %v241 = vpack.c.b16 %v209, %v205
  %v242 = vpack.c.b16 %v210, %v206
  %275 = vmatprep.subr.bf16.mxu0 %v212
  %276 = vmatpush1.bf16.msra.mxu0 %v211
  %277 = vmatprep.subr.bf16.mxu0 %v216
  %278 = vmatpush1.bf16.msra.mxu0 %v215
  %279 = vmatprep.subr.bf16.mxu0 %v220
  %280 = vmatpush1.bf16.msra.mxu0 %v219
  %281 = vmatprep.subr.bf16.mxu0 %v224
  %282 = vmatpush1.bf16.msra.mxu0 %v223
  %283 = vmatprep.subr.bf16.mxu0 %v228
  %284 = vmatpush1.bf16.msra.mxu0 %v227
  %285 = vmatprep.subr.bf16.mxu0 %v232
  %286 = vmatpush1.bf16.msra.mxu0 %v231
  %287 = vmatprep.subr.bf16.mxu0 %v236
  %288 = vmatpush1.bf16.msra.mxu0 %v235
  %289 = vmatprep.subr.bf16.mxu0 %v240
  %290 = vmatpush1.bf16.msra.mxu0 %v239
  %291 = vmatprep.subr.bf16.mxu0 0
  %292 = vmatpush1.bf16.msra.mxu0 0
  %293 = vmatprep.subr.bf16.mxu0 0
  %294 = vmatpush1.bf16.msra.mxu0 0
  %295 = vmatprep.subr.bf16.mxu0 0
  %296 = vmatpush1.bf16.msra.mxu0 0
  %297 = vmatprep.subr.bf16.mxu0 0
  %298 = vmatpush1.bf16.msra.mxu0 0
  %299 = vmatprep.subr.bf16.mxu0 0
  %300 = vmatpush1.bf16.msra.mxu0 0
  %301 = vmatprep.subr.bf16.mxu0 0
  %302 = vmatpush1.bf16.msra.mxu0 0
  %303 = vmatprep.subr.bf16.mxu0 0
  %304 = vmatpush1.bf16.msra.mxu0 0
  %305 = vmatprep.subr.bf16.mxu0 0
  %306 = vmatpush1.bf16.msra.mxu0 0
  %307 = vmatprep.mubr.bf16.mxu0 0
  %308 = vmatmul.mubr.bf16.gmra.mrb[0].mxu0 %v75
  %v309 = vpop.f32.mrb[0].mxu0
  %v310 = vadd.f32 0.0, %v309
  %v311 = vpop.f32.mrb[0].mxu0
  %v312 = vadd.f32 0.0, %v311
  %v313 = vpop.f32.mrb[0].mxu0
  %v314 = vadd.f32 0.0, %v313
  %v315 = vpop.f32.mrb[0].mxu0
  %v316 = vadd.f32 0.0, %v315
  %317 = vmatprep.mubr.bf16.mxu0 0
  %318 = vmatmul.mubr.bf16.gmra.mrb[0].mxu0 %v76
  %v319 = vpop.f32.mrb[0].mxu0
  %v320 = vadd.f32 0.0, %v319
  %v321 = vpop.f32.mrb[0].mxu0
  %v322 = vadd.f32 0.0, %v321
  %v323 = vpop.f32.mrb[0].mxu0
  %v324 = vadd.f32 0.0, %v323
  %v325 = vpop.f32.mrb[0].mxu0
  %v326 = vadd.f32 0.0, %v325
  %327 = vmatprep.mubr.bf16.mxu0 0
  %328 = vmatmul.mubr.bf16.gmra.mrb[0].mxu0 %v77
  %v329 = vpop.f32.mrb[0].mxu0
  %v330 = vadd.f32 0.0, %v329
  %v331 = vpop.f32.mrb[0].mxu0
  %v332 = vadd.f32 0.0, %v331
  %v333 = vpop.f32.mrb[0].mxu0
  %v334 = vadd.f32 0.0, %v333
  %v335 = vpop.f32.mrb[0].mxu0
  %v336 = vadd.f32 0.0, %v335
  %337 = vmatprep.mubr.bf16.mxu0 0
  %338 = vmatmul.mubr.bf16.gmra.mrb[0].mxu0 %v78
  %v339 = vpop.f32.mrb[0].mxu0
  %v340 = vadd.f32 0.0, %v339
  %v341 = vpop.f32.mrb[0].mxu0
  %v342 = vadd.f32 0.0, %v341
  %v343 = vpop.f32.mrb[0].mxu0
  %v344 = vadd.f32 0.0, %v343
  %v345 = vpop.f32.mrb[0].mxu0
  %v346 = vadd.f32 0.0, %v345
  %347 = vmatprep.mubr.bf16.mxu0 0
  %348 = vmatmul.mubr.bf16.gmra.mrb[0].mxu0 %v79
  %v349 = vpop.f32.mrb[0].mxu0
  %v350 = vadd.f32 0.0, %v349
  %v351 = vpop.f32.mrb[0].mxu0
  %v352 = vadd.f32 0.0, %v351
  %v353 = vpop.f32.mrb[0].mxu0
  %v354 = vadd.f32 0.0, %v353
  %v355 = vpop.f32.mrb[0].mxu0
  %v356 = vadd.f32 0.0, %v355
  %357 = vmatprep.mubr.bf16.mxu0 0
  %358 = vmatmul.mubr.bf16.gmra.mrb[0].mxu0 %v80
  %v359 = vpop.f32.mrb[0].mxu0
  %v360 = vadd.f32 0.0, %v359
  %v361 = vpop.f32.mrb[0].mxu0
  %v362 = vadd.f32 0.0, %v361
  %v363 = vpop.f32.mrb[0].mxu0
  %v364 = vadd.f32 0.0, %v363
  %v365 = vpop.f32.mrb[0].mxu0
  %v366 = vadd.f32 0.0, %v365
  %367 = vmatprep.mubr.bf16.mxu0 0
  %368 = vmatmul.mubr.bf16.gmra.mrb[0].mxu0 %v81
  %v369 = vpop.f32.mrb[0].mxu0
  %v370 = vadd.f32 0.0, %v369
  %v371 = vpop.f32.mrb[0].mxu0
  %v372 = vadd.f32 0.0, %v371
  %v373 = vpop.f32.mrb[0].mxu0
  %v374 = vadd.f32 0.0, %v373
  %v375 = vpop.f32.mrb[0].mxu0
  %v376 = vadd.f32 0.0, %v375
  %377 = vmatprep.mubr.bf16.mxu0 0
  %378 = vmatmul.mubr.bf16.gmra.mrb[0].mxu0 %v82
  %v379 = vpop.f32.mrb[0].mxu0
  %v380 = vadd.f32 0.0, %v379
  %v381 = vpop.f32.mrb[0].mxu0
  %v382 = vadd.f32 0.0, %v381
  %v383 = vpop.f32.mrb[0].mxu0
  %v384 = vadd.f32 0.0, %v383
  %v385 = vpop.f32.mrb[0].mxu0
  %v386 = vadd.f32 0.0, %v385
  %387 = vdwg.mxu0
  %388 = vmatprep.subr.bf16.mxu0 %v214
  %389 = vmatpush1.bf16.msra.mxu0 %v213
  %390 = vmatprep.subr.bf16.mxu0 %v218
  %391 = vmatpush1.bf16.msra.mxu0 %v217
  %392 = vmatprep.subr.bf16.mxu0 %v222
  %393 = vmatpush1.bf16.msra.mxu0 %v221
  %394 = vmatprep.subr.bf16.mxu0 %v226
  %395 = vmatpush1.bf16.msra.mxu0 %v225
  %396 = vmatprep.subr.bf16.mxu0 %v230
  %397 = vmatpush1.bf16.msra.mxu0 %v229
  %398 = vmatprep.subr.bf16.mxu0 %v234
  %399 = vmatpush1.bf16.msra.mxu0 %v233
  %400 = vmatprep.subr.bf16.mxu0 %v238
  %401 = vmatpush1.bf16.msra.mxu0 %v237
  %402 = vmatprep.subr.bf16.mxu0 %v242
  %403 = vmatpush1.bf16.msra.mxu0 %v241
  %404 = vmatprep.subr.bf16.mxu0 0
  %405 = vmatpush1.bf16.msra.mxu0 0
  %406 = vmatprep.subr.bf16.mxu0 0
  %407 = vmatpush1.bf16.msra.mxu0 0
  %408 = vmatprep.subr.bf16.mxu0 0
  %409 = vmatpush1.bf16.msra.mxu0 0
  %410 = vmatprep.subr.bf16.mxu0 0
  %411 = vmatpush1.bf16.msra.mxu0 0
  %412 = vmatprep.subr.bf16.mxu0 0
  %413 = vmatpush1.bf16.msra.mxu0 0
  %414 = vmatprep.subr.bf16.mxu0 0
  %415 = vmatpush1.bf16.msra.mxu0 0
  %416 = vmatprep.subr.bf16.mxu0 0
  %417 = vmatpush1.bf16.msra.mxu0 0
  %418 = vmatprep.subr.bf16.mxu0 0
  %419 = vmatpush1.bf16.msra.mxu0 0
  %420 = vmatprep.mubr.bf16.mxu0 0
  %421 = vmatmul.mubr.bf16.gmra.mrb[0].mxu0 %v75
  %v422 = vpop.f32.mrb[0].mxu0
  %v423 = vadd.f32 0.0, %v422
  %v424 = vpop.f32.mrb[0].mxu0
  %v425 = vadd.f32 0.0, %v424
  %v426 = vpop.f32.mrb[0].mxu0
  %v427 = vadd.f32 0.0, %v426
  %v428 = vpop.f32.mrb[0].mxu0
  %v429 = vadd.f32 0.0, %v428
  %430 = vmatprep.mubr.bf16.mxu0 0
  %431 = vmatmul.mubr.bf16.gmra.mrb[0].mxu0 %v76
  %v432 = vpop.f32.mrb[0].mxu0
  %v433 = vadd.f32 0.0, %v432
  %v434 = vpop.f32.mrb[0].mxu0
  %v435 = vadd.f32 0.0, %v434
  %v436 = vpop.f32.mrb[0].mxu0
  %v437 = vadd.f32 0.0, %v436
  %v438 = vpop.f32.mrb[0].mxu0
  %v439 = vadd.f32 0.0, %v438
  %440 = vmatprep.mubr.bf16.mxu0 0
  %441 = vmatmul.mubr.bf16.gmra.mrb[0].mxu0 %v77
  %v442 = vpop.f32.mrb[0].mxu0
  %v443 = vadd.f32 0.0, %v442
  %v444 = vpop.f32.mrb[0].mxu0
  %v445 = vadd.f32 0.0, %v444
  %v446 = vpop.f32.mrb[0].mxu0
  %v447 = vadd.f32 0.0, %v446
  %v448 = vpop.f32.mrb[0].mxu0
  %v449 = vadd.f32 0.0, %v448
  %450 = vmatprep.mubr.bf16.mxu0 0
  %451 = vmatmul.mubr.bf16.gmra.mrb[0].mxu0 %v78
  %v452 = vpop.f32.mrb[0].mxu0
  %v453 = vadd.f32 0.0, %v452
  %v454 = vpop.f32.mrb[0].mxu0
  %v455 = vadd.f32 0.0, %v454
  %v456 = vpop.f32.mrb[0].mxu0
  %v457 = vadd.f32 0.0, %v456
  %v458 = vpop.f32.mrb[0].mxu0
  %v459 = vadd.f32 0.0, %v458
  %460 = vmatprep.mubr.bf16.mxu0 0
  %461 = vmatmul.mubr.bf16.gmra.mrb[0].mxu0 %v79
  %v462 = vpop.f32.mrb[0].mxu0
  %v463 = vadd.f32 0.0, %v462
  %v464 = vpop.f32.mrb[0].mxu0
  %v465 = vadd.f32 0.0, %v464
  %v466 = vpop.f32.mrb[0].mxu0
  %v467 = vadd.f32 0.0, %v466
  %v468 = vpop.f32.mrb[0].mxu0
  %v469 = vadd.f32 0.0, %v468
  %470 = vmatprep.mubr.bf16.mxu0 0
  %471 = vmatmul.mubr.bf16.gmra.mrb[0].mxu0 %v80
  %v472 = vpop.f32.mrb[0].mxu0
  %v473 = vadd.f32 0.0, %v472
  %v474 = vpop.f32.mrb[0].mxu0
  %v475 = vadd.f32 0.0, %v474
  %v476 = vpop.f32.mrb[0].mxu0
  %v477 = vadd.f32 0.0, %v476
  %v478 = vpop.f32.mrb[0].mxu0
  %v479 = vadd.f32 0.0, %v478
  %480 = vmatprep.mubr.bf16.mxu0 0
  %481 = vmatmul.mubr.bf16.gmra.mrb[0].mxu0 %v81
  %v482 = vpop.f32.mrb[0].mxu0
  %v483 = vadd.f32 0.0, %v482
  %v484 = vpop.f32.mrb[0].mxu0
  %v485 = vadd.f32 0.0, %v484
  %v486 = vpop.f32.mrb[0].mxu0
  %v487 = vadd.f32 0.0, %v486
  %v488 = vpop.f32.mrb[0].mxu0
  %v489 = vadd.f32 0.0, %v488
  %490 = vmatprep.mubr.bf16.mxu0 0
  %491 = vmatmul.mubr.bf16.gmra.mrb[0].mxu0 %v82
  %v492 = vpop.f32.mrb[0].mxu0
  %v493 = vadd.f32 0.0, %v492
  %v494 = vpop.f32.mrb[0].mxu0
  %v495 = vadd.f32 0.0, %v494
  %v496 = vpop.f32.mrb[0].mxu0
  %v497 = vadd.f32 0.0, %v496
  %v498 = vpop.f32.mrb[0].mxu0
  %v499 = vadd.f32 0.0, %v498
  %500 = vdwg.mxu0
  %v501 = vpack.c.bf16 %v316, %v312
  %v502 = vpack.c.bf16 %v427, %v423
  %v503 = vpack.c.bf16 %v429, %v425
  %v504 = vpack.c.bf16 %v326, %v322
  %v505 = vpack.c.bf16 %v437, %v433
  %v506 = vpack.c.bf16 %v439, %v435
  %v507 = vpack.c.bf16 %v336, %v332
  %v508 = vpack.c.bf16 %v447, %v443
  %v509 = vpack.c.bf16 %v449, %v445
  %v510 = vpack.c.bf16 %v346, %v342
  %v511 = vpack.c.bf16 %v457, %v453
  %v512 = vpack.c.bf16 %v459, %v455
  %v513 = vpack.c.bf16 %v356, %v352
  %v514 = vpack.c.bf16 %v467, %v463
  %v515 = vpack.c.bf16 %v469, %v465
  %v516 = vpack.c.bf16 %v366, %v362
  %v517 = vpack.c.bf16 %v477, %v473
  %v518 = vpack.c.bf16 %v479, %v475
  %v519 = vpack.c.bf16 %v376, %v372
  %v520 = vpack.c.bf16 %v487, %v483
  %v521 = vpack.c.bf16 %v489, %v485
  %v522 = vpack.c.bf16 %v386, %v382
  %v523 = vpack.c.bf16 %v497, %v493
  %v524 = vpack.c.bf16 %v499, %v495
  %v525 = vld [vmem:[%s0] sm:$0xf]
  %v526 = vld [vmem:[%s0 + $0x4] sm:$0xf]
  %v527 = vld [vmem:[%s0 + $0x8] sm:$0xf]
  %v528 = vld [vmem:[%s0 + $0xc] sm:$0xf]
  %v529 = vld [vmem:[%s0 + $0x10] sm:$0xf]
  %v530 = vld [vmem:[%s0 + $0x14] sm:$0xf]
  %v531 = vld [vmem:[%s0 + $0x18] sm:$0xf]
  %v532 = vld [vmem:[%s0 + $0x1c] sm:$0xf]
  %v533 = vld [vmem:[%s0 + $0x20] sm:$0xf]
  %v534 = vld [vmem:[%s0 + $0x24] sm:$0xf]
  %v535 = vld [vmem:[%s0 + $0x28] sm:$0xf]
  %v536 = vld [vmem:[%s0 + $0x2c] sm:$0xf]
  %v537 = vld [vmem:[%s0 + $0x30] sm:$0xf]
  %v538 = vld [vmem:[%s0 + $0x34] sm:$0xf]
  %v539 = vld [vmem:[%s0 + $0x38] sm:$0xf]
  %v540 = vld [vmem:[%s0 + $0x3c] sm:$0xf]
  %v557 = vunpack.c.l.b16 %v525
  %v558 = vunpack.c.l.b16 %v526
  %v559 = vunpack.c.l.b16 %v527
  %v560 = vunpack.c.l.b16 %v528
  %v561 = vunpack.c.l.b16 %v529
  %v562 = vunpack.c.l.b16 %v530
  %v563 = vunpack.c.l.b16 %v531
  %v564 = vunpack.c.l.b16 %v532
  %v565 = vunpack.c.l.b16 %v533
  %v566 = vunpack.c.l.b16 %v534
  %v567 = vunpack.c.l.b16 %v535
  %v568 = vunpack.c.l.b16 %v536
  %v569 = vunpack.c.l.b16 %v537
  %v570 = vunpack.c.l.b16 %v538
  %v571 = vunpack.c.l.b16 %v539
  %v572 = vunpack.c.l.b16 %v540
  %v573 = vpack.c.b16 %v558, %v557
  %v574 = vpack.c.b16 %v560, %v559
  %v575 = vpack.c.b16 %v562, %v561
  %v576 = vpack.c.b16 %v564, %v563
  %v577 = vpack.c.b16 %v566, %v565
  %v578 = vpack.c.b16 %v568, %v567
  %v579 = vpack.c.b16 %v570, %v569
  %v580 = vpack.c.b16 %v572, %v571
  %589 = vmatprep.subr.bf16.mxu0 0
  %590 = vmatpush1.bf16.msra.mxu0 %v501
  %591 = vmatprep.subr.bf16.mxu0 0
  %592 = vmatpush1.bf16.msra.mxu0 %v504
  %593 = vmatprep.subr.bf16.mxu0 0
  %594 = vmatpush1.bf16.msra.mxu0 %v507
  %595 = vmatprep.subr.bf16.mxu0 0
  %596 = vmatpush1.bf16.msra.mxu0 %v510
  %597 = vmatprep.subr.bf16.mxu0 0
  %598 = vmatpush1.bf16.msra.mxu0 %v513
  %599 = vmatprep.subr.bf16.mxu0 0
  %600 = vmatpush1.bf16.msra.mxu0 %v516
  %601 = vmatprep.subr.bf16.mxu0 0
  %602 = vmatpush1.bf16.msra.mxu0 %v519
  %603 = vmatprep.subr.bf16.mxu0 0
  %604 = vmatpush1.bf16.msra.mxu0 %v522
  %605 = vmatprep.subr.bf16.mxu0 0
  %606 = vmatpush1.bf16.msra.mxu0 0
  %607 = vmatprep.subr.bf16.mxu0 0
  %608 = vmatpush1.bf16.msra.mxu0 0
  %609 = vmatprep.subr.bf16.mxu0 0
  %610 = vmatpush1.bf16.msra.mxu0 0
  %611 = vmatprep.subr.bf16.mxu0 0
  %612 = vmatpush1.bf16.msra.mxu0 0
  %613 = vmatprep.subr.bf16.mxu0 0
  %614 = vmatpush1.bf16.msra.mxu0 0
  %615 = vmatprep.subr.bf16.mxu0 0
  %616 = vmatpush1.bf16.msra.mxu0 0
  %617 = vmatprep.subr.bf16.mxu0 0
  %618 = vmatpush1.bf16.msra.mxu0 0
  %619 = vmatprep.subr.bf16.mxu0 0
  %620 = vmatpush1.bf16.msra.mxu0 0
  %621 = vmatprep.mubr.bf16.mxu0 0
  %622 = vmatmul.mubr.bf16.gmra.mrb[0].mxu0 %v573
  %v623 = vpop.f32.mrb[0].mxu0
  %v624 = vadd.f32 0.0, %v623
  %v625 = vpop.f32.mrb[0].mxu0
  %v626 = vpop.f32.mrb[0].mxu0
  %v627 = vadd.f32 0.0, %v626
  %v628 = vpop.f32.mrb[0].mxu0
  %629 = vmatprep.mubr.bf16.mxu0 0
  %630 = vmatmul.mubr.bf16.gmra.mrb[0].mxu0 %v574
  %v631 = vpop.f32.mrb[0].mxu0
  %v632 = vadd.f32 0.0, %v631
  %v633 = vpop.f32.mrb[0].mxu0
  %v634 = vpop.f32.mrb[0].mxu0
  %v635 = vadd.f32 0.0, %v634
  %v636 = vpop.f32.mrb[0].mxu0
  %637 = vmatprep.mubr.bf16.mxu0 0
  %638 = vmatmul.mubr.bf16.gmra.mrb[0].mxu0 %v575
  %v639 = vpop.f32.mrb[0].mxu0
  %v640 = vadd.f32 0.0, %v639
  %v641 = vpop.f32.mrb[0].mxu0
  %v642 = vpop.f32.mrb[0].mxu0
  %v643 = vadd.f32 0.0, %v642
  %v644 = vpop.f32.mrb[0].mxu0
  %645 = vmatprep.mubr.bf16.mxu0 0
  %646 = vmatmul.mubr.bf16.gmra.mrb[0].mxu0 %v576
  %v647 = vpop.f32.mrb[0].mxu0
  %v648 = vadd.f32 0.0, %v647
  %v649 = vpop.f32.mrb[0].mxu0
  %v650 = vpop.f32.mrb[0].mxu0
  %v651 = vadd.f32 0.0, %v650
  %v652 = vpop.f32.mrb[0].mxu0
  %653 = vmatprep.mubr.bf16.mxu0 0
  %654 = vmatmul.mubr.bf16.gmra.mrb[0].mxu0 %v577
  %v655 = vpop.f32.mrb[0].mxu0
  %v656 = vadd.f32 0.0, %v655
  %v657 = vpop.f32.mrb[0].mxu0
  %v658 = vpop.f32.mrb[0].mxu0
  %v659 = vadd.f32 0.0, %v658
  %v660 = vpop.f32.mrb[0].mxu0
  %661 = vmatprep.mubr.bf16.mxu0 0
  %662 = vmatmul.mubr.bf16.gmra.mrb[0].mxu0 %v578
  %v663 = vpop.f32.mrb[0].mxu0
  %v664 = vadd.f32 0.0, %v663
  %v665 = vpop.f32.mrb[0].mxu0
  %v666 = vpop.f32.mrb[0].mxu0
  %v667 = vadd.f32 0.0, %v666
  %v668 = vpop.f32.mrb[0].mxu0
  %669 = vmatprep.mubr.bf16.mxu0 0
  %670 = vmatmul.mubr.bf16.gmra.mrb[0].mxu0 %v579
  %v671 = vpop.f32.mrb[0].mxu0
  %v672 = vadd.f32 0.0, %v671
  %v673 = vpop.f32.mrb[0].mxu0
  %v674 = vpop.f32.mrb[0].mxu0
  %v675 = vadd.f32 0.0, %v674
  %v676 = vpop.f32.mrb[0].mxu0
  %677 = vmatprep.mubr.bf16.mxu0 0
  %678 = vmatmul.mubr.bf16.gmra.mrb[0].mxu0 %v580
  %v679 = vpop.f32.mrb[0].mxu0
  %v680 = vadd.f32 0.0, %v679
  %v681 = vpop.f32.mrb[0].mxu0
  %v682 = vpop.f32.mrb[0].mxu0
  %v683 = vadd.f32 0.0, %v682
  %v684 = vpop.f32.mrb[0].mxu0
  %685 = vdwg.mxu0
  %v686 = vadd.f32 %v310, %v624
  %v687 = vadd.f32 %v314, %v627
  %v688 = vadd.f32 %v320, %v632
  %v689 = vadd.f32 %v324, %v635
  %v690 = vadd.f32 %v330, %v640
  %v691 = vadd.f32 %v334, %v643
  %v692 = vadd.f32 %v340, %v648
  %v693 = vadd.f32 %v344, %v651
  %v694 = vadd.f32 %v350, %v656
  %v695 = vadd.f32 %v354, %v659
  %v696 = vadd.f32 %v360, %v664
  %v697 = vadd.f32 %v364, %v667
  %v698 = vadd.f32 %v370, %v672
  %v699 = vadd.f32 %v374, %v675
  %v700 = vadd.f32 %v380, %v680
  %v701 = vadd.f32 %v384, %v683
  %s702 = scalar_lea.vmem %s0, 64
  %v703 = vld [vmem:[%s702] sm:$0xf]
  %v704 = vld [vmem:[%s702 + $0x4] sm:$0xf]
  %v705 = vld [vmem:[%s702 + $0x8] sm:$0xf]
  %v706 = vld [vmem:[%s702 + $0xc] sm:$0xf]
  %v707 = vld [vmem:[%s702 + $0x10] sm:$0xf]
  %v708 = vld [vmem:[%s702 + $0x14] sm:$0xf]
  %v709 = vld [vmem:[%s702 + $0x18] sm:$0xf]
  %v710 = vld [vmem:[%s702 + $0x1c] sm:$0xf]
  %v711 = vld [vmem:[%s702 + $0x20] sm:$0xf]
  %v712 = vld [vmem:[%s702 + $0x24] sm:$0xf]
  %v713 = vld [vmem:[%s702 + $0x28] sm:$0xf]
  %v714 = vld [vmem:[%s702 + $0x2c] sm:$0xf]
  %v715 = vld [vmem:[%s702 + $0x30] sm:$0xf]
  %v716 = vld [vmem:[%s702 + $0x34] sm:$0xf]
  %v717 = vld [vmem:[%s702 + $0x38] sm:$0xf]
  %v718 = vld [vmem:[%s702 + $0x3c] sm:$0xf]
  %v735 = vunpack.c.l.b16 %v703
  %v736 = vunpack.c.l.b16 %v704
  %v737 = vunpack.c.l.b16 %v705
  %v738 = vunpack.c.l.b16 %v706
  %v739 = vunpack.c.l.b16 %v707
  %v740 = vunpack.c.l.b16 %v708
  %v741 = vunpack.c.l.b16 %v709
  %v742 = vunpack.c.l.b16 %v710
  %v743 = vunpack.c.l.b16 %v711
  %v744 = vunpack.c.l.b16 %v712
  %v745 = vunpack.c.l.b16 %v713
  %v746 = vunpack.c.l.b16 %v714
  %v747 = vunpack.c.l.b16 %v715
  %v748 = vunpack.c.l.b16 %v716
  %v749 = vunpack.c.l.b16 %v717
  %v750 = vunpack.c.l.b16 %v718
  %v751 = vpack.c.b16 %v736, %v735
  %v752 = vpack.c.b16 %v738, %v737
  %v753 = vpack.c.b16 %v740, %v739
  %v754 = vpack.c.b16 %v742, %v741
  %v755 = vpack.c.b16 %v744, %v743
  %v756 = vpack.c.b16 %v746, %v745
  %v757 = vpack.c.b16 %v748, %v747
  %v758 = vpack.c.b16 %v750, %v749
  %767 = vmatprep.subr.bf16.mxu0 0
  %768 = vmatpush1.bf16.msra.mxu0 %v502
  %769 = vmatprep.subr.bf16.mxu0 0
  %770 = vmatpush1.bf16.msra.mxu0 %v505
  %771 = vmatprep.subr.bf16.mxu0 0
  %772 = vmatpush1.bf16.msra.mxu0 %v508
  %773 = vmatprep.subr.bf16.mxu0 0
  %774 = vmatpush1.bf16.msra.mxu0 %v511
  %775 = vmatprep.subr.bf16.mxu0 0
  %776 = vmatpush1.bf16.msra.mxu0 %v514
  %777 = vmatprep.subr.bf16.mxu0 0
  %778 = vmatpush1.bf16.msra.mxu0 %v517
  %779 = vmatprep.subr.bf16.mxu0 0
  %780 = vmatpush1.bf16.msra.mxu0 %v520
  %781 = vmatprep.subr.bf16.mxu0 0
  %782 = vmatpush1.bf16.msra.mxu0 %v523
  %783 = vmatprep.subr.bf16.mxu0 0
  %784 = vmatpush1.bf16.msra.mxu0 0
  %785 = vmatprep.subr.bf16.mxu0 0
  %786 = vmatpush1.bf16.msra.mxu0 0
  %787 = vmatprep.subr.bf16.mxu0 0
  %788 = vmatpush1.bf16.msra.mxu0 0
  %789 = vmatprep.subr.bf16.mxu0 0
  %790 = vmatpush1.bf16.msra.mxu0 0
  %791 = vmatprep.subr.bf16.mxu0 0
  %792 = vmatpush1.bf16.msra.mxu0 0
  %793 = vmatprep.subr.bf16.mxu0 0
  %794 = vmatpush1.bf16.msra.mxu0 0
  %795 = vmatprep.subr.bf16.mxu0 0
  %796 = vmatpush1.bf16.msra.mxu0 0
  %797 = vmatprep.subr.bf16.mxu0 0
  %798 = vmatpush1.bf16.msra.mxu0 0
  %799 = vmatprep.mubr.bf16.mxu0 0
  %800 = vmatmul.mubr.bf16.gmra.mrb[0].mxu0 %v751
  %v801 = vpop.f32.mrb[0].mxu0
  %v802 = vadd.f32 0.0, %v801
  %v803 = vpop.f32.mrb[0].mxu0
  %v804 = vpop.f32.mrb[0].mxu0
  %v805 = vadd.f32 0.0, %v804
  %v806 = vpop.f32.mrb[0].mxu0
  %807 = vmatprep.mubr.bf16.mxu0 0
  %808 = vmatmul.mubr.bf16.gmra.mrb[0].mxu0 %v752
  %v809 = vpop.f32.mrb[0].mxu0
  %v810 = vadd.f32 0.0, %v809
  %v811 = vpop.f32.mrb[0].mxu0
  %v812 = vpop.f32.mrb[0].mxu0
  %v813 = vadd.f32 0.0, %v812
  %v814 = vpop.f32.mrb[0].mxu0
  %815 = vmatprep.mubr.bf16.mxu0 0
  %816 = vmatmul.mubr.bf16.gmra.mrb[0].mxu0 %v753
  %v817 = vpop.f32.mrb[0].mxu0
  %v818 = vadd.f32 0.0, %v817
  %v819 = vpop.f32.mrb[0].mxu0
  %v820 = vpop.f32.mrb[0].mxu0
  %v821 = vadd.f32 0.0, %v820
  %v822 = vpop.f32.mrb[0].mxu0
  %823 = vmatprep.mubr.bf16.mxu0 0
  %824 = vmatmul.mubr.bf16.gmra.mrb[0].mxu0 %v754
  %v825 = vpop.f32.mrb[0].mxu0
  %v826 = vadd.f32 0.0, %v825
  %v827 = vpop.f32.mrb[0].mxu0
  %v828 = vpop.f32.mrb[0].mxu0
  %v829 = vadd.f32 0.0, %v828
  %v830 = vpop.f32.mrb[0].mxu0
  %831 = vmatprep.mubr.bf16.mxu0 0
  %832 = vmatmul.mubr.bf16.gmra.mrb[0].mxu0 %v755
  %v833 = vpop.f32.mrb[0].mxu0
  %v834 = vadd.f32 0.0, %v833
  %v835 = vpop.f32.mrb[0].mxu0
  %v836 = vpop.f32.mrb[0].mxu0
  %v837 = vadd.f32 0.0, %v836
  %v838 = vpop.f32.mrb[0].mxu0
  %839 = vmatprep.mubr.bf16.mxu0 0
  %840 = vmatmul.mubr.bf16.gmra.mrb[0].mxu0 %v756
  %v841 = vpop.f32.mrb[0].mxu0
  %v842 = vadd.f32 0.0, %v841
  %v843 = vpop.f32.mrb[0].mxu0
  %v844 = vpop.f32.mrb[0].mxu0
  %v845 = vadd.f32 0.0, %v844
  %v846 = vpop.f32.mrb[0].mxu0
  %847 = vmatprep.mubr.bf16.mxu0 0
  %848 = vmatmul.mubr.bf16.gmra.mrb[0].mxu0 %v757
  %v849 = vpop.f32.mrb[0].mxu0
  %v850 = vadd.f32 0.0, %v849
  %v851 = vpop.f32.mrb[0].mxu0
  %v852 = vpop.f32.mrb[0].mxu0
  %v853 = vadd.f32 0.0, %v852
  %v854 = vpop.f32.mrb[0].mxu0
  %855 = vmatprep.mubr.bf16.mxu0 0
  %856 = vmatmul.mubr.bf16.gmra.mrb[0].mxu0 %v758
  %v857 = vpop.f32.mrb[0].mxu0
  %v858 = vadd.f32 0.0, %v857
  %v859 = vpop.f32.mrb[0].mxu0
  %v860 = vpop.f32.mrb[0].mxu0
  %v861 = vadd.f32 0.0, %v860
  %v862 = vpop.f32.mrb[0].mxu0
  %863 = vdwg.mxu0
  %v864 = vadd.f32 %v686, %v802
  %v865 = vadd.f32 %v687, %v805
  %v866 = vadd.f32 %v688, %v810
  %v867 = vadd.f32 %v689, %v813
  %v868 = vadd.f32 %v690, %v818
  %v869 = vadd.f32 %v691, %v821
  %v870 = vadd.f32 %v692, %v826
  %v871 = vadd.f32 %v693, %v829
  %v872 = vadd.f32 %v694, %v834
  %v873 = vadd.f32 %v695, %v837
  %v874 = vadd.f32 %v696, %v842
  %v875 = vadd.f32 %v697, %v845
  %v876 = vadd.f32 %v698, %v850
  %v877 = vadd.f32 %v699, %v853
  %v878 = vadd.f32 %v700, %v858
  %v879 = vadd.f32 %v701, %v861
  %s880 = scalar_lea.vmem %s0, 128
  %v881 = vld [vmem:[%s880] sm:$0xf]
  %v882 = vld [vmem:[%s880 + $0x4] sm:$0xf]
  %v883 = vld [vmem:[%s880 + $0x8] sm:$0xf]
  %v884 = vld [vmem:[%s880 + $0xc] sm:$0xf]
  %v885 = vld [vmem:[%s880 + $0x10] sm:$0xf]
  %v886 = vld [vmem:[%s880 + $0x14] sm:$0xf]
  %v887 = vld [vmem:[%s880 + $0x18] sm:$0xf]
  %v888 = vld [vmem:[%s880 + $0x1c] sm:$0xf]
  %v889 = vld [vmem:[%s880 + $0x20] sm:$0xf]
  %v890 = vld [vmem:[%s880 + $0x24] sm:$0xf]
  %v891 = vld [vmem:[%s880 + $0x28] sm:$0xf]
  %v892 = vld [vmem:[%s880 + $0x2c] sm:$0xf]
  %v893 = vld [vmem:[%s880 + $0x30] sm:$0xf]
  %v894 = vld [vmem:[%s880 + $0x34] sm:$0xf]
  %v895 = vld [vmem:[%s880 + $0x38] sm:$0xf]
  %v896 = vld [vmem:[%s880 + $0x3c] sm:$0xf]
  %v913 = vunpack.c.l.b16 %v881
  %v914 = vunpack.c.l.b16 %v882
  %v915 = vunpack.c.l.b16 %v883
  %v916 = vunpack.c.l.b16 %v884
  %v917 = vunpack.c.l.b16 %v885
  %v918 = vunpack.c.l.b16 %v886
  %v919 = vunpack.c.l.b16 %v887
  %v920 = vunpack.c.l.b16 %v888
  %v921 = vunpack.c.l.b16 %v889
  %v922 = vunpack.c.l.b16 %v890
  %v923 = vunpack.c.l.b16 %v891
  %v924 = vunpack.c.l.b16 %v892
  %v925 = vunpack.c.l.b16 %v893
  %v926 = vunpack.c.l.b16 %v894
  %v927 = vunpack.c.l.b16 %v895
  %v928 = vunpack.c.l.b16 %v896
  %v929 = vpack.c.b16 %v914, %v913
  %v930 = vpack.c.b16 %v916, %v915
  %v931 = vpack.c.b16 %v918, %v917
  %v932 = vpack.c.b16 %v920, %v919
  %v933 = vpack.c.b16 %v922, %v921
  %v934 = vpack.c.b16 %v924, %v923
  %v935 = vpack.c.b16 %v926, %v925
  %v936 = vpack.c.b16 %v928, %v927
  %945 = vmatprep.subr.bf16.mxu0 0
  %946 = vmatpush1.bf16.msra.mxu0 %v503
  %947 = vmatprep.subr.bf16.mxu0 0
  %948 = vmatpush1.bf16.msra.mxu0 %v506
  %949 = vmatprep.subr.bf16.mxu0 0
  %950 = vmatpush1.bf16.msra.mxu0 %v509
  %951 = vmatprep.subr.bf16.mxu0 0
  %952 = vmatpush1.bf16.msra.mxu0 %v512
  %953 = vmatprep.subr.bf16.mxu0 0
  %954 = vmatpush1.bf16.msra.mxu0 %v515
  %955 = vmatprep.subr.bf16.mxu0 0
  %956 = vmatpush1.bf16.msra.mxu0 %v518
  %957 = vmatprep.subr.bf16.mxu0 0
  %958 = vmatpush1.bf16.msra.mxu0 %v521
  %959 = vmatprep.subr.bf16.mxu0 0
  %960 = vmatpush1.bf16.msra.mxu0 %v524
  %961 = vmatprep.subr.bf16.mxu0 0
  %962 = vmatpush1.bf16.msra.mxu0 0
  %963 = vmatprep.subr.bf16.mxu0 0
  %964 = vmatpush1.bf16.msra.mxu0 0
  %965 = vmatprep.subr.bf16.mxu0 0
  %966 = vmatpush1.bf16.msra.mxu0 0
  %967 = vmatprep.subr.bf16.mxu0 0
  %968 = vmatpush1.bf16.msra.mxu0 0
  %969 = vmatprep.subr.bf16.mxu0 0
  %970 = vmatpush1.bf16.msra.mxu0 0
  %971 = vmatprep.subr.bf16.mxu0 0
  %972 = vmatpush1.bf16.msra.mxu0 0
  %973 = vmatprep.subr.bf16.mxu0 0
  %974 = vmatpush1.bf16.msra.mxu0 0
  %975 = vmatprep.subr.bf16.mxu0 0
  %976 = vmatpush1.bf16.msra.mxu0 0
  %977 = vmatprep.mubr.bf16.mxu0 0
  %978 = vmatmul.mubr.bf16.gmra.mrb[0].mxu0 %v929
  %v979 = vpop.f32.mrb[0].mxu0
  %v980 = vadd.f32 0.0, %v979
  %v981 = vpop.f32.mrb[0].mxu0
  %v982 = vpop.f32.mrb[0].mxu0
  %v983 = vadd.f32 0.0, %v982
  %v984 = vpop.f32.mrb[0].mxu0
  %985 = vmatprep.mubr.bf16.mxu0 0
  %986 = vmatmul.mubr.bf16.gmra.mrb[0].mxu0 %v930
  %v987 = vpop.f32.mrb[0].mxu0
  %v988 = vadd.f32 0.0, %v987
  %v989 = vpop.f32.mrb[0].mxu0
  %v990 = vpop.f32.mrb[0].mxu0
  %v991 = vadd.f32 0.0, %v990
  %v992 = vpop.f32.mrb[0].mxu0
  %993 = vmatprep.mubr.bf16.mxu0 0
  %994 = vmatmul.mubr.bf16.gmra.mrb[0].mxu0 %v931
  %v995 = vpop.f32.mrb[0].mxu0
  %v996 = vadd.f32 0.0, %v995
  %v997 = vpop.f32.mrb[0].mxu0
  %v998 = vpop.f32.mrb[0].mxu0
  %v999 = vadd.f32 0.0, %v998
  %v1000 = vpop.f32.mrb[0].mxu0
  %1001 = vmatprep.mubr.bf16.mxu0 0
  %1002 = vmatmul.mubr.bf16.gmra.mrb[0].mxu0 %v932
  %v1003 = vpop.f32.mrb[0].mxu0
  %v1004 = vadd.f32 0.0, %v1003
  %v1005 = vpop.f32.mrb[0].mxu0
  %v1006 = vpop.f32.mrb[0].mxu0
  %v1007 = vadd.f32 0.0, %v1006
  %v1008 = vpop.f32.mrb[0].mxu0
  %1009 = vmatprep.mubr.bf16.mxu0 0
  %1010 = vmatmul.mubr.bf16.gmra.mrb[0].mxu0 %v933
  %v1011 = vpop.f32.mrb[0].mxu0
  %v1012 = vadd.f32 0.0, %v1011
  %v1013 = vpop.f32.mrb[0].mxu0
  %v1014 = vpop.f32.mrb[0].mxu0
  %v1015 = vadd.f32 0.0, %v1014
  %v1016 = vpop.f32.mrb[0].mxu0
  %1017 = vmatprep.mubr.bf16.mxu0 0
  %1018 = vmatmul.mubr.bf16.gmra.mrb[0].mxu0 %v934
  %v1019 = vpop.f32.mrb[0].mxu0
  %v1020 = vadd.f32 0.0, %v1019
  %v1021 = vpop.f32.mrb[0].mxu0
  %v1022 = vpop.f32.mrb[0].mxu0
  %v1023 = vadd.f32 0.0, %v1022
  %v1024 = vpop.f32.mrb[0].mxu0
  %1025 = vmatprep.mubr.bf16.mxu0 0
  %1026 = vmatmul.mubr.bf16.gmra.mrb[0].mxu0 %v935
  %v1027 = vpop.f32.mrb[0].mxu0
  %v1028 = vadd.f32 0.0, %v1027
  %v1029 = vpop.f32.mrb[0].mxu0
  %v1030 = vpop.f32.mrb[0].mxu0
  %v1031 = vadd.f32 0.0, %v1030
  %v1032 = vpop.f32.mrb[0].mxu0
  %1033 = vmatprep.mubr.bf16.mxu0 0
  %1034 = vmatmul.mubr.bf16.gmra.mrb[0].mxu0 %v936
  %v1035 = vpop.f32.mrb[0].mxu0
  %v1036 = vadd.f32 0.0, %v1035
  %v1037 = vpop.f32.mrb[0].mxu0
  %v1038 = vpop.f32.mrb[0].mxu0
  %v1039 = vadd.f32 0.0, %v1038
  %v1040 = vpop.f32.mrb[0].mxu0
  %1041 = vdwg.mxu0
  %v1042 = vadd.f32 %v864, %v980
  %v1043 = vadd.f32 %v865, %v983
  %v1044 = vadd.f32 %v866, %v988
  %v1045 = vadd.f32 %v867, %v991
  %v1046 = vadd.f32 %v868, %v996
  %v1047 = vadd.f32 %v869, %v999
  %v1048 = vadd.f32 %v870, %v1004
  %v1049 = vadd.f32 %v871, %v1007
  %v1050 = vadd.f32 %v872, %v1012
  %v1051 = vadd.f32 %v873, %v1015
  %v1052 = vadd.f32 %v874, %v1020
  %v1053 = vadd.f32 %v875, %v1023
  %v1054 = vadd.f32 %v876, %v1028
  %v1055 = vadd.f32 %v877, %v1031
  %v1056 = vadd.f32 %v878, %v1036
  %v1057 = vadd.f32 %v879, %v1039
  %v1058 = vld [vmem:[%s4] sm:$0x1]
  %v1060 = vlaneseq
  %v1061 = vshrl.u32 %v1060, 7
  %v1062 = vsub.s32 0, %v1061
  %v1063 = vrot.slane %v1058, %v1062
  %v1065 = vadd.f32 %v1042, %v1063
  %v1066 = vadd.f32 %v1043, %v1063
  %v1067 = vadd.f32 %v1044, %v1063
  %v1068 = vadd.f32 %v1045, %v1063
  %v1069 = vadd.f32 %v1046, %v1063
  %v1070 = vadd.f32 %v1047, %v1063
  %v1071 = vadd.f32 %v1048, %v1063
  %v1072 = vadd.f32 %v1049, %v1063
  %v1073 = vadd.f32 %v1050, %v1063
  %v1074 = vadd.f32 %v1051, %v1063
  %v1075 = vadd.f32 %v1052, %v1063
  %v1076 = vadd.f32 %v1053, %v1063
  %v1077 = vadd.f32 %v1054, %v1063
  %v1078 = vadd.f32 %v1055, %v1063
  %v1079 = vadd.f32 %v1056, %v1063
  %v1080 = vadd.f32 %v1057, %v1063
  %v1081 = vld [vmem:[%s2] sm:$0xff]
  %v1082 = vld [vmem:[%s2 + $0x8] sm:$0xff]
  %v1083 = vld [vmem:[%s2 + $0x10] sm:$0xff]
  %v1084 = vld [vmem:[%s2 + $0x18] sm:$0xff]
  %v1085 = vld [vmem:[%s2 + $0x20] sm:$0xff]
  %v1086 = vld [vmem:[%s2 + $0x28] sm:$0xff]
  %v1087 = vld [vmem:[%s2 + $0x30] sm:$0xff]
  %v1088 = vld [vmem:[%s2 + $0x38] sm:$0xff]
  %v1089 = vld [vmem:[%s2 + $0x40] sm:$0xff]
  %v1090 = vld [vmem:[%s2 + $0x48] sm:$0xff]
  %v1091 = vld [vmem:[%s2 + $0x50] sm:$0xff]
  %v1092 = vld [vmem:[%s2 + $0x58] sm:$0xff]
  %v1093 = vld [vmem:[%s2 + $0x60] sm:$0xff]
  %v1094 = vld [vmem:[%s2 + $0x68] sm:$0xff]
  %v1095 = vld [vmem:[%s2 + $0x70] sm:$0xff]
  %v1096 = vld [vmem:[%s2 + $0x78] sm:$0xff]
  %1098 = vset.pattern.permute.xlu0 0
  %1099 = vperm.xlu0 %1098, %v1081
  %v1100 = vpop.permute.xlu0 %1099
  %1103 = vset.pattern.permute.xlu0 0
  %1104 = vperm.xlu0 %1103, %v1082
  %v1105 = vpop.permute.xlu0 %1104
  %1108 = vset.pattern.permute.xlu0 0
  %1109 = vperm.xlu0 %1108, %v1083
  %v1110 = vpop.permute.xlu0 %1109
  %1113 = vset.pattern.permute.xlu0 0
  %1114 = vperm.xlu0 %1113, %v1084
  %v1115 = vpop.permute.xlu0 %1114
  %1118 = vset.pattern.permute.xlu0 0
  %1119 = vperm.xlu0 %1118, %v1085
  %v1120 = vpop.permute.xlu0 %1119
  %1123 = vset.pattern.permute.xlu0 0
  %1124 = vperm.xlu0 %1123, %v1086
  %v1125 = vpop.permute.xlu0 %1124
  %1128 = vset.pattern.permute.xlu0 0
  %1129 = vperm.xlu0 %1128, %v1087
  %v1130 = vpop.permute.xlu0 %1129
  %1133 = vset.pattern.permute.xlu0 0
  %1134 = vperm.xlu0 %1133, %v1088
  %v1135 = vpop.permute.xlu0 %1134
  %1138 = vset.pattern.permute.xlu0 0
  %1139 = vperm.xlu0 %1138, %v1089
  %v1140 = vpop.permute.xlu0 %1139
  %1143 = vset.pattern.permute.xlu0 0
  %1144 = vperm.xlu0 %1143, %v1090
  %v1145 = vpop.permute.xlu0 %1144
  %1148 = vset.pattern.permute.xlu0 0
  %1149 = vperm.xlu0 %1148, %v1091
  %v1150 = vpop.permute.xlu0 %1149
  %1153 = vset.pattern.permute.xlu0 0
  %1154 = vperm.xlu0 %1153, %v1092
  %v1155 = vpop.permute.xlu0 %1154
  %1158 = vset.pattern.permute.xlu0 0
  %1159 = vperm.xlu0 %1158, %v1093
  %v1160 = vpop.permute.xlu0 %1159
  %1163 = vset.pattern.permute.xlu0 0
  %1164 = vperm.xlu0 %1163, %v1094
  %v1165 = vpop.permute.xlu0 %1164
  %1168 = vset.pattern.permute.xlu0 0
  %1169 = vperm.xlu0 %1168, %v1095
  %v1170 = vpop.permute.xlu0 %1169
  %1173 = vset.pattern.permute.xlu0 0
  %1174 = vperm.xlu0 %1173, %v1096
  %v1175 = vpop.permute.xlu0 %1174
  %v1177 = vmul.f32 %v1065, %v1100
  %v1178 = vmul.f32 %v1066, %v1105
  %v1179 = vmul.f32 %v1067, %v1110
  %v1180 = vmul.f32 %v1068, %v1115
  %v1181 = vmul.f32 %v1069, %v1120
  %v1182 = vmul.f32 %v1070, %v1125
  %v1183 = vmul.f32 %v1071, %v1130
  %v1184 = vmul.f32 %v1072, %v1135
  %v1185 = vmul.f32 %v1073, %v1140
  %v1186 = vmul.f32 %v1074, %v1145
  %v1187 = vmul.f32 %v1075, %v1150
  %v1188 = vmul.f32 %v1076, %v1155
  %v1189 = vmul.f32 %v1077, %v1160
  %v1190 = vmul.f32 %v1078, %v1165
  %v1191 = vmul.f32 %v1079, %v1170
  %v1192 = vmul.f32 %v1080, %v1175
  %v1193 = vadd.f32 %v1177, %v1178
  %v1194 = vadd.f32 %v1193, %v1179
  %v1195 = vadd.f32 %v1194, %v1180
  %v1196 = vadd.f32 %v1195, %v1181
  %v1197 = vadd.f32 %v1196, %v1182
  %v1198 = vadd.f32 %v1197, %v1183
  %v1199 = vadd.f32 %v1198, %v1184
  %v1200 = vadd.f32 %v1199, %v1185
  %v1201 = vadd.f32 %v1200, %v1186
  %v1202 = vadd.f32 %v1201, %v1187
  %v1203 = vadd.f32 %v1202, %v1188
  %v1204 = vadd.f32 %v1203, %v1189
  %v1205 = vadd.f32 %v1204, %v1190
  %v1206 = vadd.f32 %v1205, %v1191
  %v1207 = vadd.f32 %v1206, %v1192
  %v1208 = vrot.slane %v1207, 4
  %v1209 = vadd.f32 %v1207, %v1208
  %v1210 = vrot.slane %v1209, 2
  %v1211 = vadd.f32 %v1209, %v1210
  %v1212 = vrot.slane %v1211, 1
  %v1213 = vadd.f32 %v1211, %v1212
  %v1214 = vrcp.pop 128.0
  %v1215 = vmul.f32 %v1213, %v1214
  %v1216 = vmul.f32 %v1177, %v1177
  %v1217 = vmul.f32 %v1178, %v1178
  %v1218 = vmul.f32 %v1179, %v1179
  %v1219 = vmul.f32 %v1180, %v1180
  %v1220 = vmul.f32 %v1181, %v1181
  %v1221 = vmul.f32 %v1182, %v1182
  %v1222 = vmul.f32 %v1183, %v1183
  %v1223 = vmul.f32 %v1184, %v1184
  %v1224 = vmul.f32 %v1185, %v1185
  %v1225 = vmul.f32 %v1186, %v1186
  %v1226 = vmul.f32 %v1187, %v1187
  %v1227 = vmul.f32 %v1188, %v1188
  %v1228 = vmul.f32 %v1189, %v1189
  %v1229 = vmul.f32 %v1190, %v1190
  %v1230 = vmul.f32 %v1191, %v1191
  %v1231 = vmul.f32 %v1192, %v1192
  %v1232 = vadd.f32 %v1216, %v1217
  %v1233 = vadd.f32 %v1232, %v1218
  %v1234 = vadd.f32 %v1233, %v1219
  %v1235 = vadd.f32 %v1234, %v1220
  %v1236 = vadd.f32 %v1235, %v1221
  %v1237 = vadd.f32 %v1236, %v1222
  %v1238 = vadd.f32 %v1237, %v1223
  %v1239 = vadd.f32 %v1238, %v1224
  %v1240 = vadd.f32 %v1239, %v1225
  %v1241 = vadd.f32 %v1240, %v1226
  %v1242 = vadd.f32 %v1241, %v1227
  %v1243 = vadd.f32 %v1242, %v1228
  %v1244 = vadd.f32 %v1243, %v1229
  %v1245 = vadd.f32 %v1244, %v1230
  %v1246 = vadd.f32 %v1245, %v1231
  %v1247 = vrot.slane %v1246, 4
  %v1248 = vadd.f32 %v1246, %v1247
  %v1249 = vrot.slane %v1248, 2
  %v1250 = vadd.f32 %v1248, %v1249
  %v1251 = vrot.slane %v1250, 1
  %v1252 = vadd.f32 %v1250, %v1251
  %v1253 = vmul.f32 %v1252, %v1214
  %v1254 = vmul.f32 %v1215, %v1215
  %v1255 = vsub.f32 %v1253, %v1254
  %v1256 = vld [vmem:[%s5] sm:$0x1]
  %v1257 = vadd.f32 %v1255, 1e-05
  %v1258 = vrsqrt.pop %v1257
  %v1259 = vmul.f32 %v1256, %v1258
  %v1260 = vld [vmem:[%s6] sm:$0x1]
  %v1261 = vmul.f32 %v1215, %v1259
  %v1262 = vsub.f32 %v1260, %v1261
  %v1264 = vlaneseq
  %v1265 = vshrl.u32 %v1264, 7
  %v1266 = vsub.s32 0, %v1265
  %v1267 = vrot.slane %v1259, %v1266
  %v1269 = vmul.f32 %v1177, %v1267
  %v1270 = vmul.f32 %v1178, %v1267
  %v1271 = vmul.f32 %v1179, %v1267
  %v1272 = vmul.f32 %v1180, %v1267
  %v1273 = vmul.f32 %v1181, %v1267
  %v1274 = vmul.f32 %v1182, %v1267
  %v1275 = vmul.f32 %v1183, %v1267
  %v1276 = vmul.f32 %v1184, %v1267
  %v1277 = vmul.f32 %v1185, %v1267
  %v1278 = vmul.f32 %v1186, %v1267
  %v1279 = vmul.f32 %v1187, %v1267
  %v1280 = vmul.f32 %v1188, %v1267
  %v1281 = vmul.f32 %v1189, %v1267
  %v1282 = vmul.f32 %v1190, %v1267
  %v1283 = vmul.f32 %v1191, %v1267
  %v1284 = vmul.f32 %v1192, %v1267
  %v1286 = vlaneseq
  %v1287 = vshrl.u32 %v1286, 7
  %v1288 = vsub.s32 0, %v1287
  %v1289 = vrot.slane %v1262, %v1288
  %v1291 = vadd.f32 %v1269, %v1289
  %v1292 = vadd.f32 %v1270, %v1289
  %v1293 = vadd.f32 %v1271, %v1289
  %v1294 = vadd.f32 %v1272, %v1289
  %v1295 = vadd.f32 %v1273, %v1289
  %v1296 = vadd.f32 %v1274, %v1289
  %v1297 = vadd.f32 %v1275, %v1289
  %v1298 = vadd.f32 %v1276, %v1289
  %v1299 = vadd.f32 %v1277, %v1289
  %v1300 = vadd.f32 %v1278, %v1289
  %v1301 = vadd.f32 %v1279, %v1289
  %v1302 = vadd.f32 %v1280, %v1289
  %v1303 = vadd.f32 %v1281, %v1289
  %v1304 = vadd.f32 %v1282, %v1289
  %v1305 = vadd.f32 %v1283, %v1289
  %v1306 = vadd.f32 %v1284, %v1289
  %v1307 = vmax.f32 %v1291, 0.0
  %v1308 = vmax.f32 %v1292, 0.0
  %v1309 = vmax.f32 %v1293, 0.0
  %v1310 = vmax.f32 %v1294, 0.0
  %v1311 = vmax.f32 %v1295, 0.0
  %v1312 = vmax.f32 %v1296, 0.0
  %v1313 = vmax.f32 %v1297, 0.0
  %v1314 = vmax.f32 %v1298, 0.0
  %v1315 = vmax.f32 %v1299, 0.0
  %v1316 = vmax.f32 %v1300, 0.0
  %v1317 = vmax.f32 %v1301, 0.0
  %v1318 = vmax.f32 %v1302, 0.0
  %v1319 = vmax.f32 %v1303, 0.0
  %v1320 = vmax.f32 %v1304, 0.0
  %v1321 = vmax.f32 %v1305, 0.0
  %v1322 = vmax.f32 %v1306, 0.0
  %1323 = vst [vmem:[#allocation2] sm:$0xff] %v1307
  %1324 = vst [vmem:[#allocation2 + $0x8] sm:$0xff] %v1308
  %1325 = vst [vmem:[#allocation2 + $0x10] sm:$0xff] %v1309
  %1326 = vst [vmem:[#allocation2 + $0x18] sm:$0xff] %v1310
  %1327 = vst [vmem:[#allocation2 + $0x20] sm:$0xff] %v1311
  %1328 = vst [vmem:[#allocation2 + $0x28] sm:$0xff] %v1312
  %1329 = vst [vmem:[#allocation2 + $0x30] sm:$0xff] %v1313
  %1330 = vst [vmem:[#allocation2 + $0x38] sm:$0xff] %v1314
  %1331 = vst [vmem:[#allocation2 + $0x40] sm:$0xff] %v1315
  %1332 = vst [vmem:[#allocation2 + $0x48] sm:$0xff] %v1316
  %1333 = vst [vmem:[#allocation2 + $0x50] sm:$0xff] %v1317
  %1334 = vst [vmem:[#allocation2 + $0x58] sm:$0xff] %v1318
  %1335 = vst [vmem:[#allocation2 + $0x60] sm:$0xff] %v1319
  %1336 = vst [vmem:[#allocation2 + $0x68] sm:$0xff] %v1320
  %1337 = vst [vmem:[#allocation2 + $0x70] sm:$0xff] %v1321
  %1338 = vst [vmem:[#allocation2 + $0x78] sm:$0xff] %v1322
  %v1339 = vld [vmem:[#allocation2] sm:$0xff]
  %v1340 = vld [vmem:[#allocation2 + $0x8] sm:$0xff]
  %v1341 = vld [vmem:[#allocation2 + $0x10] sm:$0xff]
  %v1342 = vld [vmem:[#allocation2 + $0x18] sm:$0xff]
  %v1343 = vld [vmem:[#allocation2 + $0x20] sm:$0xff]
  %v1344 = vld [vmem:[#allocation2 + $0x28] sm:$0xff]
  %v1345 = vld [vmem:[#allocation2 + $0x30] sm:$0xff]
  %v1346 = vld [vmem:[#allocation2 + $0x38] sm:$0xff]
  %v1347 = vld [vmem:[#allocation2 + $0x40] sm:$0xff]
  %v1348 = vld [vmem:[#allocation2 + $0x48] sm:$0xff]
  %v1349 = vld [vmem:[#allocation2 + $0x50] sm:$0xff]
  %v1350 = vld [vmem:[#allocation2 + $0x58] sm:$0xff]
  %v1351 = vld [vmem:[#allocation2 + $0x60] sm:$0xff]
  %v1352 = vld [vmem:[#allocation2 + $0x68] sm:$0xff]
  %v1353 = vld [vmem:[#allocation2 + $0x70] sm:$0xff]
  %v1354 = vld [vmem:[#allocation2 + $0x78] sm:$0xff]
  %v1355 = vpack.c.bf16 %v1340, %v1339
  %v1356 = vpack.c.bf16 %v1342, %v1341
  %v1357 = vpack.c.bf16 %v1344, %v1343
  %v1358 = vpack.c.bf16 %v1346, %v1345
  %v1359 = vpack.c.bf16 %v1348, %v1347
  %v1360 = vpack.c.bf16 %v1350, %v1349
  %v1361 = vpack.c.bf16 %v1352, %v1351
  %v1362 = vpack.c.bf16 %v1354, %v1353
  %s1363 = scalar_lea.vmem %s3, 256
  %v1364 = vld [vmem:[%s1363] sm:$0xff]
  %v1365 = vld [vmem:[%s1363 + $0x8] sm:$0xff]
  %v1366 = vld [vmem:[%s1363 + $0x10] sm:$0xff]
  %v1367 = vld [vmem:[%s1363 + $0x18] sm:$0xff]
  %v1368 = vld [vmem:[%s1363 + $0x20] sm:$0xff]
  %v1369 = vld [vmem:[%s1363 + $0x28] sm:$0xff]
  %v1370 = vld [vmem:[%s1363 + $0x30] sm:$0xff]
  %v1371 = vld [vmem:[%s1363 + $0x38] sm:$0xff]
  %v1372 = vld [vmem:[%s1363 + $0x40] sm:$0xff]
  %v1373 = vld [vmem:[%s1363 + $0x48] sm:$0xff]
  %v1374 = vld [vmem:[%s1363 + $0x50] sm:$0xff]
  %v1375 = vld [vmem:[%s1363 + $0x58] sm:$0xff]
  %v1376 = vld [vmem:[%s1363 + $0x60] sm:$0xff]
  %v1377 = vld [vmem:[%s1363 + $0x68] sm:$0xff]
  %v1378 = vld [vmem:[%s1363 + $0x70] sm:$0xff]
  %v1379 = vld [vmem:[%s1363 + $0x78] sm:$0xff]
  %v1380 = vld [vmem:[%s1363 + $0x80] sm:$0xff]
  %v1381 = vld [vmem:[%s1363 + $0x88] sm:$0xff]
  %v1382 = vld [vmem:[%s1363 + $0x90] sm:$0xff]
  %v1383 = vld [vmem:[%s1363 + $0x98] sm:$0xff]
  %v1384 = vld [vmem:[%s1363 + $0xa0] sm:$0xff]
  %v1385 = vld [vmem:[%s1363 + $0xa8] sm:$0xff]
  %v1386 = vld [vmem:[%s1363 + $0xb0] sm:$0xff]
  %v1387 = vld [vmem:[%s1363 + $0xb8] sm:$0xff]
  %v1388 = vld [vmem:[%s1363 + $0xc0] sm:$0xff]
  %v1389 = vld [vmem:[%s1363 + $0xc8] sm:$0xff]
  %v1390 = vld [vmem:[%s1363 + $0xd0] sm:$0xff]
  %v1391 = vld [vmem:[%s1363 + $0xd8] sm:$0xff]
  %v1392 = vld [vmem:[%s1363 + $0xe0] sm:$0xff]
  %v1393 = vld [vmem:[%s1363 + $0xe8] sm:$0xff]
  %v1394 = vld [vmem:[%s1363 + $0xf0] sm:$0xff]
  %v1395 = vld [vmem:[%s1363 + $0xf8] sm:$0xff]
  %v1428 = vunpack.c.l.b16 %v1364
  %v1429 = vunpack.c.h.b16 %v1364
  %v1430 = vunpack.c.l.b16 %v1365
  %v1431 = vunpack.c.h.b16 %v1365
  %v1432 = vunpack.c.l.b16 %v1366
  %v1433 = vunpack.c.h.b16 %v1366
  %v1434 = vunpack.c.l.b16 %v1367
  %v1435 = vunpack.c.h.b16 %v1367
  %v1436 = vunpack.c.l.b16 %v1368
  %v1437 = vunpack.c.h.b16 %v1368
  %v1438 = vunpack.c.l.b16 %v1369
  %v1439 = vunpack.c.h.b16 %v1369
  %v1440 = vunpack.c.l.b16 %v1370
  %v1441 = vunpack.c.h.b16 %v1370
  %v1442 = vunpack.c.l.b16 %v1371
  %v1443 = vunpack.c.h.b16 %v1371
  %v1444 = vunpack.c.l.b16 %v1372
  %v1445 = vunpack.c.h.b16 %v1372
  %v1446 = vunpack.c.l.b16 %v1373
  %v1447 = vunpack.c.h.b16 %v1373
  %v1448 = vunpack.c.l.b16 %v1374
  %v1449 = vunpack.c.h.b16 %v1374
  %v1450 = vunpack.c.l.b16 %v1375
  %v1451 = vunpack.c.h.b16 %v1375
  %v1452 = vunpack.c.l.b16 %v1376
  %v1453 = vunpack.c.h.b16 %v1376
  %v1454 = vunpack.c.l.b16 %v1377
  %v1455 = vunpack.c.h.b16 %v1377
  %v1456 = vunpack.c.l.b16 %v1378
  %v1457 = vunpack.c.h.b16 %v1378
  %v1458 = vunpack.c.l.b16 %v1379
  %v1459 = vunpack.c.h.b16 %v1379
  %v1460 = vunpack.c.l.b16 %v1380
  %v1461 = vunpack.c.h.b16 %v1380
  %v1462 = vunpack.c.l.b16 %v1381
  %v1463 = vunpack.c.h.b16 %v1381
  %v1464 = vunpack.c.l.b16 %v1382
  %v1465 = vunpack.c.h.b16 %v1382
  %v1466 = vunpack.c.l.b16 %v1383
  %v1467 = vunpack.c.h.b16 %v1383
  %v1468 = vunpack.c.l.b16 %v1384
  %v1469 = vunpack.c.h.b16 %v1384
  %v1470 = vunpack.c.l.b16 %v1385
  %v1471 = vunpack.c.h.b16 %v1385
  %v1472 = vunpack.c.l.b16 %v1386
  %v1473 = vunpack.c.h.b16 %v1386
  %v1474 = vunpack.c.l.b16 %v1387
  %v1475 = vunpack.c.h.b16 %v1387
  %v1476 = vunpack.c.l.b16 %v1388
  %v1477 = vunpack.c.h.b16 %v1388
  %v1478 = vunpack.c.l.b16 %v1389
  %v1479 = vunpack.c.h.b16 %v1389
  %v1480 = vunpack.c.l.b16 %v1390
  %v1481 = vunpack.c.h.b16 %v1390
  %v1482 = vunpack.c.l.b16 %v1391
  %v1483 = vunpack.c.h.b16 %v1391
  %v1484 = vunpack.c.l.b16 %v1392
  %v1485 = vunpack.c.h.b16 %v1392
  %v1486 = vunpack.c.l.b16 %v1393
  %v1487 = vunpack.c.h.b16 %v1393
  %v1488 = vunpack.c.l.b16 %v1394
  %v1489 = vunpack.c.h.b16 %v1394
  %v1490 = vunpack.c.l.b16 %v1395
  %v1491 = vunpack.c.h.b16 %v1395
  %v1492 = vpack.c.b16 %v1432, %v1428
  %v1493 = vpack.c.b16 %v1433, %v1429
  %v1494 = vpack.c.b16 %v1434, %v1430
  %v1495 = vpack.c.b16 %v1435, %v1431
  %v1496 = vpack.c.b16 %v1440, %v1436
  %v1497 = vpack.c.b16 %v1441, %v1437
  %v1498 = vpack.c.b16 %v1442, %v1438
  %v1499 = vpack.c.b16 %v1443, %v1439
  %v1500 = vpack.c.b16 %v1448, %v1444
  %v1501 = vpack.c.b16 %v1449, %v1445
  %v1502 = vpack.c.b16 %v1450, %v1446
  %v1503 = vpack.c.b16 %v1451, %v1447
  %v1504 = vpack.c.b16 %v1456, %v1452
  %v1505 = vpack.c.b16 %v1457, %v1453
  %v1506 = vpack.c.b16 %v1458, %v1454
  %v1507 = vpack.c.b16 %v1459, %v1455
  %v1508 = vpack.c.b16 %v1464, %v1460
  %v1509 = vpack.c.b16 %v1465, %v1461
  %v1510 = vpack.c.b16 %v1466, %v1462
  %v1511 = vpack.c.b16 %v1467, %v1463
  %v1512 = vpack.c.b16 %v1472, %v1468
  %v1513 = vpack.c.b16 %v1473, %v1469
  %v1514 = vpack.c.b16 %v1474, %v1470
  %v1515 = vpack.c.b16 %v1475, %v1471
  %v1516 = vpack.c.b16 %v1480, %v1476
  %v1517 = vpack.c.b16 %v1481, %v1477
  %v1518 = vpack.c.b16 %v1482, %v1478
  %v1519 = vpack.c.b16 %v1483, %v1479
  %v1520 = vpack.c.b16 %v1488, %v1484
  %v1521 = vpack.c.b16 %v1489, %v1485
  %v1522 = vpack.c.b16 %v1490, %v1486
  %v1523 = vpack.c.b16 %v1491, %v1487
  %1556 = vmatprep.subr.bf16.mxu0 %v1493
  %1557 = vmatpush1.bf16.msra.mxu0 %v1492
  %1558 = vmatprep.subr.bf16.mxu0 %v1497
  %1559 = vmatpush1.bf16.msra.mxu0 %v1496
  %1560 = vmatprep.subr.bf16.mxu0 %v1501
  %1561 = vmatpush1.bf16.msra.mxu0 %v1500
  %1562 = vmatprep.subr.bf16.mxu0 %v1505
  %1563 = vmatpush1.bf16.msra.mxu0 %v1504
  %1564 = vmatprep.subr.bf16.mxu0 %v1509
  %1565 = vmatpush1.bf16.msra.mxu0 %v1508
  %1566 = vmatprep.subr.bf16.mxu0 %v1513
  %1567 = vmatpush1.bf16.msra.mxu0 %v1512
  %1568 = vmatprep.subr.bf16.mxu0 %v1517
  %1569 = vmatpush1.bf16.msra.mxu0 %v1516
  %1570 = vmatprep.subr.bf16.mxu0 %v1521
  %1571 = vmatpush1.bf16.msra.mxu0 %v1520
  %1572 = vmatprep.subr.bf16.mxu0 0
  %1573 = vmatpush1.bf16.msra.mxu0 0
  %1574 = vmatprep.subr.bf16.mxu0 0
  %1575 = vmatpush1.bf16.msra.mxu0 0
  %1576 = vmatprep.subr.bf16.mxu0 0
  %1577 = vmatpush1.bf16.msra.mxu0 0
  %1578 = vmatprep.subr.bf16.mxu0 0
  %1579 = vmatpush1.bf16.msra.mxu0 0
  %1580 = vmatprep.subr.bf16.mxu0 0
  %1581 = vmatpush1.bf16.msra.mxu0 0
  %1582 = vmatprep.subr.bf16.mxu0 0
  %1583 = vmatpush1.bf16.msra.mxu0 0
  %1584 = vmatprep.subr.bf16.mxu0 0
  %1585 = vmatpush1.bf16.msra.mxu0 0
  %1586 = vmatprep.subr.bf16.mxu0 0
  %1587 = vmatpush1.bf16.msra.mxu0 0
  %1588 = vmatprep.mubr.bf16.mxu0 0
  %1589 = vmatmul.mubr.bf16.gmra.mrb[0].mxu0 %v1355
  %v1590 = vpop.f32.mrb[0].mxu0
  %v1591 = vadd.f32 0.0, %v1590
  %v1592 = vpop.f32.mrb[0].mxu0
  %v1593 = vadd.f32 0.0, %v1592
  %v1594 = vpop.f32.mrb[0].mxu0
  %v1595 = vadd.f32 0.0, %v1594
  %v1596 = vpop.f32.mrb[0].mxu0
  %v1597 = vadd.f32 0.0, %v1596
  %1598 = vmatprep.mubr.bf16.mxu0 0
  %1599 = vmatmul.mubr.bf16.gmra.mrb[0].mxu0 %v1356
  %v1600 = vpop.f32.mrb[0].mxu0
  %v1601 = vadd.f32 0.0, %v1600
  %v1602 = vpop.f32.mrb[0].mxu0
  %v1603 = vadd.f32 0.0, %v1602
  %v1604 = vpop.f32.mrb[0].mxu0
  %v1605 = vadd.f32 0.0, %v1604
  %v1606 = vpop.f32.mrb[0].mxu0
  %v1607 = vadd.f32 0.0, %v1606
  %1608 = vmatprep.mubr.bf16.mxu0 0
  %1609 = vmatmul.mubr.bf16.gmra.mrb[0].mxu0 %v1357
  %v1610 = vpop.f32.mrb[0].mxu0
  %v1611 = vadd.f32 0.0, %v1610
  %v1612 = vpop.f32.mrb[0].mxu0
  %v1613 = vadd.f32 0.0, %v1612
  %v1614 = vpop.f32.mrb[0].mxu0
  %v1615 = vadd.f32 0.0, %v1614
  %v1616 = vpop.f32.mrb[0].mxu0
  %v1617 = vadd.f32 0.0, %v1616
  %1618 = vmatprep.mubr.bf16.mxu0 0
  %1619 = vmatmul.mubr.bf16.gmra.mrb[0].mxu0 %v1358
  %v1620 = vpop.f32.mrb[0].mxu0
  %v1621 = vadd.f32 0.0, %v1620
  %v1622 = vpop.f32.mrb[0].mxu0
  %v1623 = vadd.f32 0.0, %v1622
  %v1624 = vpop.f32.mrb[0].mxu0
  %v1625 = vadd.f32 0.0, %v1624
  %v1626 = vpop.f32.mrb[0].mxu0
  %v1627 = vadd.f32 0.0, %v1626
  %1628 = vmatprep.mubr.bf16.mxu0 0
  %1629 = vmatmul.mubr.bf16.gmra.mrb[0].mxu0 %v1359
  %v1630 = vpop.f32.mrb[0].mxu0
  %v1631 = vadd.f32 0.0, %v1630
  %v1632 = vpop.f32.mrb[0].mxu0
  %v1633 = vadd.f32 0.0, %v1632
  %v1634 = vpop.f32.mrb[0].mxu0
  %v1635 = vadd.f32 0.0, %v1634
  %v1636 = vpop.f32.mrb[0].mxu0
  %v1637 = vadd.f32 0.0, %v1636
  %1638 = vmatprep.mubr.bf16.mxu0 0
  %1639 = vmatmul.mubr.bf16.gmra.mrb[0].mxu0 %v1360
  %v1640 = vpop.f32.mrb[0].mxu0
  %v1641 = vadd.f32 0.0, %v1640
  %v1642 = vpop.f32.mrb[0].mxu0
  %v1643 = vadd.f32 0.0, %v1642
  %v1644 = vpop.f32.mrb[0].mxu0
  %v1645 = vadd.f32 0.0, %v1644
  %v1646 = vpop.f32.mrb[0].mxu0
  %v1647 = vadd.f32 0.0, %v1646
  %1648 = vmatprep.mubr.bf16.mxu0 0
  %1649 = vmatmul.mubr.bf16.gmra.mrb[0].mxu0 %v1361
  %v1650 = vpop.f32.mrb[0].mxu0
  %v1651 = vadd.f32 0.0, %v1650
  %v1652 = vpop.f32.mrb[0].mxu0
  %v1653 = vadd.f32 0.0, %v1652
  %v1654 = vpop.f32.mrb[0].mxu0
  %v1655 = vadd.f32 0.0, %v1654
  %v1656 = vpop.f32.mrb[0].mxu0
  %v1657 = vadd.f32 0.0, %v1656
  %1658 = vmatprep.mubr.bf16.mxu0 0
  %1659 = vmatmul.mubr.bf16.gmra.mrb[0].mxu0 %v1362
  %v1660 = vpop.f32.mrb[0].mxu0
  %v1661 = vadd.f32 0.0, %v1660
  %v1662 = vpop.f32.mrb[0].mxu0
  %v1663 = vadd.f32 0.0, %v1662
  %v1664 = vpop.f32.mrb[0].mxu0
  %v1665 = vadd.f32 0.0, %v1664
  %v1666 = vpop.f32.mrb[0].mxu0
  %v1667 = vadd.f32 0.0, %v1666
  %1668 = vdwg.mxu0
  %1669 = vmatprep.subr.bf16.mxu0 %v1495
  %1670 = vmatpush1.bf16.msra.mxu0 %v1494
  %1671 = vmatprep.subr.bf16.mxu0 %v1499
  %1672 = vmatpush1.bf16.msra.mxu0 %v1498
  %1673 = vmatprep.subr.bf16.mxu0 %v1503
  %1674 = vmatpush1.bf16.msra.mxu0 %v1502
  %1675 = vmatprep.subr.bf16.mxu0 %v1507
  %1676 = vmatpush1.bf16.msra.mxu0 %v1506
  %1677 = vmatprep.subr.bf16.mxu0 %v1511
  %1678 = vmatpush1.bf16.msra.mxu0 %v1510
  %1679 = vmatprep.subr.bf16.mxu0 %v1515
  %1680 = vmatpush1.bf16.msra.mxu0 %v1514
  %1681 = vmatprep.subr.bf16.mxu0 %v1519
  %1682 = vmatpush1.bf16.msra.mxu0 %v1518
  %1683 = vmatprep.subr.bf16.mxu0 %v1523
  %1684 = vmatpush1.bf16.msra.mxu0 %v1522
  %1685 = vmatprep.subr.bf16.mxu0 0
  %1686 = vmatpush1.bf16.msra.mxu0 0
  %1687 = vmatprep.subr.bf16.mxu0 0
  %1688 = vmatpush1.bf16.msra.mxu0 0
  %1689 = vmatprep.subr.bf16.mxu0 0
  %1690 = vmatpush1.bf16.msra.mxu0 0
  %1691 = vmatprep.subr.bf16.mxu0 0
  %1692 = vmatpush1.bf16.msra.mxu0 0
  %1693 = vmatprep.subr.bf16.mxu0 0
  %1694 = vmatpush1.bf16.msra.mxu0 0
  %1695 = vmatprep.subr.bf16.mxu0 0
  %1696 = vmatpush1.bf16.msra.mxu0 0
  %1697 = vmatprep.subr.bf16.mxu0 0
  %1698 = vmatpush1.bf16.msra.mxu0 0
  %1699 = vmatprep.subr.bf16.mxu0 0
  %1700 = vmatpush1.bf16.msra.mxu0 0
  %1701 = vmatprep.mubr.bf16.mxu0 0
  %1702 = vmatmul.mubr.bf16.gmra.mrb[0].mxu0 %v1355
  %v1703 = vpop.f32.mrb[0].mxu0
  %v1704 = vadd.f32 0.0, %v1703
  %v1705 = vpop.f32.mrb[0].mxu0
  %v1706 = vadd.f32 0.0, %v1705
  %v1707 = vpop.f32.mrb[0].mxu0
  %v1708 = vadd.f32 0.0, %v1707
  %v1709 = vpop.f32.mrb[0].mxu0
  %v1710 = vadd.f32 0.0, %v1709
  %1711 = vmatprep.mubr.bf16.mxu0 0
  %1712 = vmatmul.mubr.bf16.gmra.mrb[0].mxu0 %v1356
  %v1713 = vpop.f32.mrb[0].mxu0
  %v1714 = vadd.f32 0.0, %v1713
  %v1715 = vpop.f32.mrb[0].mxu0
  %v1716 = vadd.f32 0.0, %v1715
  %v1717 = vpop.f32.mrb[0].mxu0
  %v1718 = vadd.f32 0.0, %v1717
  %v1719 = vpop.f32.mrb[0].mxu0
  %v1720 = vadd.f32 0.0, %v1719
  %1721 = vmatprep.mubr.bf16.mxu0 0
  %1722 = vmatmul.mubr.bf16.gmra.mrb[0].mxu0 %v1357
  %v1723 = vpop.f32.mrb[0].mxu0
  %v1724 = vadd.f32 0.0, %v1723
  %v1725 = vpop.f32.mrb[0].mxu0
  %v1726 = vadd.f32 0.0, %v1725
  %v1727 = vpop.f32.mrb[0].mxu0
  %v1728 = vadd.f32 0.0, %v1727
  %v1729 = vpop.f32.mrb[0].mxu0
  %v1730 = vadd.f32 0.0, %v1729
  %1731 = vmatprep.mubr.bf16.mxu0 0
  %1732 = vmatmul.mubr.bf16.gmra.mrb[0].mxu0 %v1358
  %v1733 = vpop.f32.mrb[0].mxu0
  %v1734 = vadd.f32 0.0, %v1733
  %v1735 = vpop.f32.mrb[0].mxu0
  %v1736 = vadd.f32 0.0, %v1735
  %v1737 = vpop.f32.mrb[0].mxu0
  %v1738 = vadd.f32 0.0, %v1737
  %v1739 = vpop.f32.mrb[0].mxu0
  %v1740 = vadd.f32 0.0, %v1739
  %1741 = vmatprep.mubr.bf16.mxu0 0
  %1742 = vmatmul.mubr.bf16.gmra.mrb[0].mxu0 %v1359
  %v1743 = vpop.f32.mrb[0].mxu0
  %v1744 = vadd.f32 0.0, %v1743
  %v1745 = vpop.f32.mrb[0].mxu0
  %v1746 = vadd.f32 0.0, %v1745
  %v1747 = vpop.f32.mrb[0].mxu0
  %v1748 = vadd.f32 0.0, %v1747
  %v1749 = vpop.f32.mrb[0].mxu0
  %v1750 = vadd.f32 0.0, %v1749
  %1751 = vmatprep.mubr.bf16.mxu0 0
  %1752 = vmatmul.mubr.bf16.gmra.mrb[0].mxu0 %v1360
  %v1753 = vpop.f32.mrb[0].mxu0
  %v1754 = vadd.f32 0.0, %v1753
  %v1755 = vpop.f32.mrb[0].mxu0
  %v1756 = vadd.f32 0.0, %v1755
  %v1757 = vpop.f32.mrb[0].mxu0
  %v1758 = vadd.f32 0.0, %v1757
  %v1759 = vpop.f32.mrb[0].mxu0
  %v1760 = vadd.f32 0.0, %v1759
  %1761 = vmatprep.mubr.bf16.mxu0 0
  %1762 = vmatmul.mubr.bf16.gmra.mrb[0].mxu0 %v1361
  %v1763 = vpop.f32.mrb[0].mxu0
  %v1764 = vadd.f32 0.0, %v1763
  %v1765 = vpop.f32.mrb[0].mxu0
  %v1766 = vadd.f32 0.0, %v1765
  %v1767 = vpop.f32.mrb[0].mxu0
  %v1768 = vadd.f32 0.0, %v1767
  %v1769 = vpop.f32.mrb[0].mxu0
  %v1770 = vadd.f32 0.0, %v1769
  %1771 = vmatprep.mubr.bf16.mxu0 0
  %1772 = vmatmul.mubr.bf16.gmra.mrb[0].mxu0 %v1362
  %v1773 = vpop.f32.mrb[0].mxu0
  %v1774 = vadd.f32 0.0, %v1773
  %v1775 = vpop.f32.mrb[0].mxu0
  %v1776 = vadd.f32 0.0, %v1775
  %v1777 = vpop.f32.mrb[0].mxu0
  %v1778 = vadd.f32 0.0, %v1777
  %v1779 = vpop.f32.mrb[0].mxu0
  %v1780 = vadd.f32 0.0, %v1779
  %1781 = vdwg.mxu0
  %v1782 = vpack.c.bf16 %v1597, %v1593
  %v1783 = vpack.c.bf16 %v1708, %v1704
  %v1784 = vpack.c.bf16 %v1710, %v1706
  %v1785 = vpack.c.bf16 %v1607, %v1603
  %v1786 = vpack.c.bf16 %v1718, %v1714
  %v1787 = vpack.c.bf16 %v1720, %v1716
  %v1788 = vpack.c.bf16 %v1617, %v1613
  %v1789 = vpack.c.bf16 %v1728, %v1724
  %v1790 = vpack.c.bf16 %v1730, %v1726
  %v1791 = vpack.c.bf16 %v1627, %v1623
  %v1792 = vpack.c.bf16 %v1738, %v1734
  %v1793 = vpack.c.bf16 %v1740, %v1736
  %v1794 = vpack.c.bf16 %v1637, %v1633
  %v1795 = vpack.c.bf16 %v1748, %v1744
  %v1796 = vpack.c.bf16 %v1750, %v1746
  %v1797 = vpack.c.bf16 %v1647, %v1643
  %v1798 = vpack.c.bf16 %v1758, %v1754
  %v1799 = vpack.c.bf16 %v1760, %v1756
  %v1800 = vpack.c.bf16 %v1657, %v1653
  %v1801 = vpack.c.bf16 %v1768, %v1764
  %v1802 = vpack.c.bf16 %v1770, %v1766
  %v1803 = vpack.c.bf16 %v1667, %v1663
  %v1804 = vpack.c.bf16 %v1778, %v1774
  %v1805 = vpack.c.bf16 %v1780, %v1776
  %v1806 = vld [vmem:[%s0] sm:$0xf]
  %v1807 = vld [vmem:[%s0 + $0x4] sm:$0xf]
  %v1808 = vld [vmem:[%s0 + $0x8] sm:$0xf]
  %v1809 = vld [vmem:[%s0 + $0xc] sm:$0xf]
  %v1810 = vld [vmem:[%s0 + $0x10] sm:$0xf]
  %v1811 = vld [vmem:[%s0 + $0x14] sm:$0xf]
  %v1812 = vld [vmem:[%s0 + $0x18] sm:$0xf]
  %v1813 = vld [vmem:[%s0 + $0x1c] sm:$0xf]
  %v1814 = vld [vmem:[%s0 + $0x20] sm:$0xf]
  %v1815 = vld [vmem:[%s0 + $0x24] sm:$0xf]
  %v1816 = vld [vmem:[%s0 + $0x28] sm:$0xf]
  %v1817 = vld [vmem:[%s0 + $0x2c] sm:$0xf]
  %v1818 = vld [vmem:[%s0 + $0x30] sm:$0xf]
  %v1819 = vld [vmem:[%s0 + $0x34] sm:$0xf]
  %v1820 = vld [vmem:[%s0 + $0x38] sm:$0xf]
  %v1821 = vld [vmem:[%s0 + $0x3c] sm:$0xf]
  %v1838 = vunpack.c.l.b16 %v1806
  %v1839 = vunpack.c.l.b16 %v1807
  %v1840 = vunpack.c.l.b16 %v1808
  %v1841 = vunpack.c.l.b16 %v1809
  %v1842 = vunpack.c.l.b16 %v1810
  %v1843 = vunpack.c.l.b16 %v1811
  %v1844 = vunpack.c.l.b16 %v1812
  %v1845 = vunpack.c.l.b16 %v1813
  %v1846 = vunpack.c.l.b16 %v1814
  %v1847 = vunpack.c.l.b16 %v1815
  %v1848 = vunpack.c.l.b16 %v1816
  %v1849 = vunpack.c.l.b16 %v1817
  %v1850 = vunpack.c.l.b16 %v1818
  %v1851 = vunpack.c.l.b16 %v1819
  %v1852 = vunpack.c.l.b16 %v1820
  %v1853 = vunpack.c.l.b16 %v1821
  %v1854 = vpack.c.b16 %v1839, %v1838
  %v1855 = vpack.c.b16 %v1841, %v1840
  %v1856 = vpack.c.b16 %v1843, %v1842
  %v1857 = vpack.c.b16 %v1845, %v1844
  %v1858 = vpack.c.b16 %v1847, %v1846
  %v1859 = vpack.c.b16 %v1849, %v1848
  %v1860 = vpack.c.b16 %v1851, %v1850
  %v1861 = vpack.c.b16 %v1853, %v1852
  %1870 = vmatprep.subr.bf16.mxu0 0
  %1871 = vmatpush1.bf16.msra.mxu0 %v1782
  %1872 = vmatprep.subr.bf16.mxu0 0
  %1873 = vmatpush1.bf16.msra.mxu0 %v1785
  %1874 = vmatprep.subr.bf16.mxu0 0
  %1875 = vmatpush1.bf16.msra.mxu0 %v1788
  %1876 = vmatprep.subr.bf16.mxu0 0
  %1877 = vmatpush1.bf16.msra.mxu0 %v1791
  %1878 = vmatprep.subr.bf16.mxu0 0
  %1879 = vmatpush1.bf16.msra.mxu0 %v1794
  %1880 = vmatprep.subr.bf16.mxu0 0
  %1881 = vmatpush1.bf16.msra.mxu0 %v1797
  %1882 = vmatprep.subr.bf16.mxu0 0
  %1883 = vmatpush1.bf16.msra.mxu0 %v1800
  %1884 = vmatprep.subr.bf16.mxu0 0
  %1885 = vmatpush1.bf16.msra.mxu0 %v1803
  %1886 = vmatprep.subr.bf16.mxu0 0
  %1887 = vmatpush1.bf16.msra.mxu0 0
  %1888 = vmatprep.subr.bf16.mxu0 0
  %1889 = vmatpush1.bf16.msra.mxu0 0
  %1890 = vmatprep.subr.bf16.mxu0 0
  %1891 = vmatpush1.bf16.msra.mxu0 0
  %1892 = vmatprep.subr.bf16.mxu0 0
  %1893 = vmatpush1.bf16.msra.mxu0 0
  %1894 = vmatprep.subr.bf16.mxu0 0
  %1895 = vmatpush1.bf16.msra.mxu0 0
  %1896 = vmatprep.subr.bf16.mxu0 0
  %1897 = vmatpush1.bf16.msra.mxu0 0
  %1898 = vmatprep.subr.bf16.mxu0 0
  %1899 = vmatpush1.bf16.msra.mxu0 0
  %1900 = vmatprep.subr.bf16.mxu0 0
  %1901 = vmatpush1.bf16.msra.mxu0 0
  %1902 = vmatprep.mubr.bf16.mxu0 0
  %1903 = vmatmul.mubr.bf16.gmra.mrb[0].mxu0 %v1854
  %v1904 = vpop.f32.mrb[0].mxu0
  %v1905 = vadd.f32 0.0, %v1904
  %v1906 = vpop.f32.mrb[0].mxu0
  %v1907 = vpop.f32.mrb[0].mxu0
  %v1908 = vadd.f32 0.0, %v1907
  %v1909 = vpop.f32.mrb[0].mxu0
  %1910 = vmatprep.mubr.bf16.mxu0 0
  %1911 = vmatmul.mubr.bf16.gmra.mrb[0].mxu0 %v1855
  %v1912 = vpop.f32.mrb[0].mxu0
  %v1913 = vadd.f32 0.0, %v1912
  %v1914 = vpop.f32.mrb[0].mxu0
  %v1915 = vpop.f32.mrb[0].mxu0
  %v1916 = vadd.f32 0.0, %v1915
  %v1917 = vpop.f32.mrb[0].mxu0
  %1918 = vmatprep.mubr.bf16.mxu0 0
  %1919 = vmatmul.mubr.bf16.gmra.mrb[0].mxu0 %v1856
  %v1920 = vpop.f32.mrb[0].mxu0
  %v1921 = vadd.f32 0.0, %v1920
  %v1922 = vpop.f32.mrb[0].mxu0
  %v1923 = vpop.f32.mrb[0].mxu0
  %v1924 = vadd.f32 0.0, %v1923
  %v1925 = vpop.f32.mrb[0].mxu0
  %1926 = vmatprep.mubr.bf16.mxu0 0
  %1927 = vmatmul.mubr.bf16.gmra.mrb[0].mxu0 %v1857
  %v1928 = vpop.f32.mrb[0].mxu0
  %v1929 = vadd.f32 0.0, %v1928
  %v1930 = vpop.f32.mrb[0].mxu0
  %v1931 = vpop.f32.mrb[0].mxu0
  %v1932 = vadd.f32 0.0, %v1931
  %v1933 = vpop.f32.mrb[0].mxu0
  %1934 = vmatprep.mubr.bf16.mxu0 0
  %1935 = vmatmul.mubr.bf16.gmra.mrb[0].mxu0 %v1858
  %v1936 = vpop.f32.mrb[0].mxu0
  %v1937 = vadd.f32 0.0, %v1936
  %v1938 = vpop.f32.mrb[0].mxu0
  %v1939 = vpop.f32.mrb[0].mxu0
  %v1940 = vadd.f32 0.0, %v1939
  %v1941 = vpop.f32.mrb[0].mxu0
  %1942 = vmatprep.mubr.bf16.mxu0 0
  %1943 = vmatmul.mubr.bf16.gmra.mrb[0].mxu0 %v1859
  %v1944 = vpop.f32.mrb[0].mxu0
  %v1945 = vadd.f32 0.0, %v1944
  %v1946 = vpop.f32.mrb[0].mxu0
  %v1947 = vpop.f32.mrb[0].mxu0
  %v1948 = vadd.f32 0.0, %v1947
  %v1949 = vpop.f32.mrb[0].mxu0
  %1950 = vmatprep.mubr.bf16.mxu0 0
  %1951 = vmatmul.mubr.bf16.gmra.mrb[0].mxu0 %v1860
  %v1952 = vpop.f32.mrb[0].mxu0
  %v1953 = vadd.f32 0.0, %v1952
  %v1954 = vpop.f32.mrb[0].mxu0
  %v1955 = vpop.f32.mrb[0].mxu0
  %v1956 = vadd.f32 0.0, %v1955
  %v1957 = vpop.f32.mrb[0].mxu0
  %1958 = vmatprep.mubr.bf16.mxu0 0
  %1959 = vmatmul.mubr.bf16.gmra.mrb[0].mxu0 %v1861
  %v1960 = vpop.f32.mrb[0].mxu0
  %v1961 = vadd.f32 0.0, %v1960
  %v1962 = vpop.f32.mrb[0].mxu0
  %v1963 = vpop.f32.mrb[0].mxu0
  %v1964 = vadd.f32 0.0, %v1963
  %v1965 = vpop.f32.mrb[0].mxu0
  %1966 = vdwg.mxu0
  %v1967 = vadd.f32 %v1591, %v1905
  %v1968 = vadd.f32 %v1595, %v1908
  %v1969 = vadd.f32 %v1601, %v1913
  %v1970 = vadd.f32 %v1605, %v1916
  %v1971 = vadd.f32 %v1611, %v1921
  %v1972 = vadd.f32 %v1615, %v1924
  %v1973 = vadd.f32 %v1621, %v1929
  %v1974 = vadd.f32 %v1625, %v1932
  %v1975 = vadd.f32 %v1631, %v1937
  %v1976 = vadd.f32 %v1635, %v1940
  %v1977 = vadd.f32 %v1641, %v1945
  %v1978 = vadd.f32 %v1645, %v1948
  %v1979 = vadd.f32 %v1651, %v1953
  %v1980 = vadd.f32 %v1655, %v1956
  %v1981 = vadd.f32 %v1661, %v1961
  %v1982 = vadd.f32 %v1665, %v1964
  %v1983 = vld [vmem:[%s702] sm:$0xf]
  %v1984 = vld [vmem:[%s702 + $0x4] sm:$0xf]
  %v1985 = vld [vmem:[%s702 + $0x8] sm:$0xf]
  %v1986 = vld [vmem:[%s702 + $0xc] sm:$0xf]
  %v1987 = vld [vmem:[%s702 + $0x10] sm:$0xf]
  %v1988 = vld [vmem:[%s702 + $0x14] sm:$0xf]
  %v1989 = vld [vmem:[%s702 + $0x18] sm:$0xf]
  %v1990 = vld [vmem:[%s702 + $0x1c] sm:$0xf]
  %v1991 = vld [vmem:[%s702 + $0x20] sm:$0xf]
  %v1992 = vld [vmem:[%s702 + $0x24] sm:$0xf]
  %v1993 = vld [vmem:[%s702 + $0x28] sm:$0xf]
  %v1994 = vld [vmem:[%s702 + $0x2c] sm:$0xf]
  %v1995 = vld [vmem:[%s702 + $0x30] sm:$0xf]
  %v1996 = vld [vmem:[%s702 + $0x34] sm:$0xf]
  %v1997 = vld [vmem:[%s702 + $0x38] sm:$0xf]
  %v1998 = vld [vmem:[%s702 + $0x3c] sm:$0xf]
  %v2015 = vunpack.c.l.b16 %v1983
  %v2016 = vunpack.c.l.b16 %v1984
  %v2017 = vunpack.c.l.b16 %v1985
  %v2018 = vunpack.c.l.b16 %v1986
  %v2019 = vunpack.c.l.b16 %v1987
  %v2020 = vunpack.c.l.b16 %v1988
  %v2021 = vunpack.c.l.b16 %v1989
  %v2022 = vunpack.c.l.b16 %v1990
  %v2023 = vunpack.c.l.b16 %v1991
  %v2024 = vunpack.c.l.b16 %v1992
  %v2025 = vunpack.c.l.b16 %v1993
  %v2026 = vunpack.c.l.b16 %v1994
  %v2027 = vunpack.c.l.b16 %v1995
  %v2028 = vunpack.c.l.b16 %v1996
  %v2029 = vunpack.c.l.b16 %v1997
  %v2030 = vunpack.c.l.b16 %v1998
  %v2031 = vpack.c.b16 %v2016, %v2015
  %v2032 = vpack.c.b16 %v2018, %v2017
  %v2033 = vpack.c.b16 %v2020, %v2019
  %v2034 = vpack.c.b16 %v2022, %v2021
  %v2035 = vpack.c.b16 %v2024, %v2023
  %v2036 = vpack.c.b16 %v2026, %v2025
  %v2037 = vpack.c.b16 %v2028, %v2027
  %v2038 = vpack.c.b16 %v2030, %v2029
  %2047 = vmatprep.subr.bf16.mxu0 0
  %2048 = vmatpush1.bf16.msra.mxu0 %v1783
  %2049 = vmatprep.subr.bf16.mxu0 0
  %2050 = vmatpush1.bf16.msra.mxu0 %v1786
  %2051 = vmatprep.subr.bf16.mxu0 0
  %2052 = vmatpush1.bf16.msra.mxu0 %v1789
  %2053 = vmatprep.subr.bf16.mxu0 0
  %2054 = vmatpush1.bf16.msra.mxu0 %v1792
  %2055 = vmatprep.subr.bf16.mxu0 0
  %2056 = vmatpush1.bf16.msra.mxu0 %v1795
  %2057 = vmatprep.subr.bf16.mxu0 0
  %2058 = vmatpush1.bf16.msra.mxu0 %v1798
  %2059 = vmatprep.subr.bf16.mxu0 0
  %2060 = vmatpush1.bf16.msra.mxu0 %v1801
  %2061 = vmatprep.subr.bf16.mxu0 0
  %2062 = vmatpush1.bf16.msra.mxu0 %v1804
  %2063 = vmatprep.subr.bf16.mxu0 0
  %2064 = vmatpush1.bf16.msra.mxu0 0
  %2065 = vmatprep.subr.bf16.mxu0 0
  %2066 = vmatpush1.bf16.msra.mxu0 0
  %2067 = vmatprep.subr.bf16.mxu0 0
  %2068 = vmatpush1.bf16.msra.mxu0 0
  %2069 = vmatprep.subr.bf16.mxu0 0
  %2070 = vmatpush1.bf16.msra.mxu0 0
  %2071 = vmatprep.subr.bf16.mxu0 0
  %2072 = vmatpush1.bf16.msra.mxu0 0
  %2073 = vmatprep.subr.bf16.mxu0 0
  %2074 = vmatpush1.bf16.msra.mxu0 0
  %2075 = vmatprep.subr.bf16.mxu0 0
  %2076 = vmatpush1.bf16.msra.mxu0 0
  %2077 = vmatprep.subr.bf16.mxu0 0
  %2078 = vmatpush1.bf16.msra.mxu0 0
  %2079 = vmatprep.mubr.bf16.mxu0 0
  %2080 = vmatmul.mubr.bf16.gmra.mrb[0].mxu0 %v2031
  %v2081 = vpop.f32.mrb[0].mxu0
  %v2082 = vadd.f32 0.0, %v2081
  %v2083 = vpop.f32.mrb[0].mxu0
  %v2084 = vpop.f32.mrb[0].mxu0
  %v2085 = vadd.f32 0.0, %v2084
  %v2086 = vpop.f32.mrb[0].mxu0
  %2087 = vmatprep.mubr.bf16.mxu0 0
  %2088 = vmatmul.mubr.bf16.gmra.mrb[0].mxu0 %v2032
  %v2089 = vpop.f32.mrb[0].mxu0
  %v2090 = vadd.f32 0.0, %v2089
  %v2091 = vpop.f32.mrb[0].mxu0
  %v2092 = vpop.f32.mrb[0].mxu0
  %v2093 = vadd.f32 0.0, %v2092
  %v2094 = vpop.f32.mrb[0].mxu0
  %2095 = vmatprep.mubr.bf16.mxu0 0
  %2096 = vmatmul.mubr.bf16.gmra.mrb[0].mxu0 %v2033
  %v2097 = vpop.f32.mrb[0].mxu0
  %v2098 = vadd.f32 0.0, %v2097
  %v2099 = vpop.f32.mrb[0].mxu0
  %v2100 = vpop.f32.mrb[0].mxu0
  %v2101 = vadd.f32 0.0, %v2100
  %v2102 = vpop.f32.mrb[0].mxu0
  %2103 = vmatprep.mubr.bf16.mxu0 0
  %2104 = vmatmul.mubr.bf16.gmra.mrb[0].mxu0 %v2034
  %v2105 = vpop.f32.mrb[0].mxu0
  %v2106 = vadd.f32 0.0, %v2105
  %v2107 = vpop.f32.mrb[0].mxu0
  %v2108 = vpop.f32.mrb[0].mxu0
  %v2109 = vadd.f32 0.0, %v2108
  %v2110 = vpop.f32.mrb[0].mxu0
  %2111 = vmatprep.mubr.bf16.mxu0 0
  %2112 = vmatmul.mubr.bf16.gmra.mrb[0].mxu0 %v2035
  %v2113 = vpop.f32.mrb[0].mxu0
  %v2114 = vadd.f32 0.0, %v2113
  %v2115 = vpop.f32.mrb[0].mxu0
  %v2116 = vpop.f32.mrb[0].mxu0
  %v2117 = vadd.f32 0.0, %v2116
  %v2118 = vpop.f32.mrb[0].mxu0
  %2119 = vmatprep.mubr.bf16.mxu0 0
  %2120 = vmatmul.mubr.bf16.gmra.mrb[0].mxu0 %v2036
  %v2121 = vpop.f32.mrb[0].mxu0
  %v2122 = vadd.f32 0.0, %v2121
  %v2123 = vpop.f32.mrb[0].mxu0
  %v2124 = vpop.f32.mrb[0].mxu0
  %v2125 = vadd.f32 0.0, %v2124
  %v2126 = vpop.f32.mrb[0].mxu0
  %2127 = vmatprep.mubr.bf16.mxu0 0
  %2128 = vmatmul.mubr.bf16.gmra.mrb[0].mxu0 %v2037
  %v2129 = vpop.f32.mrb[0].mxu0
  %v2130 = vadd.f32 0.0, %v2129
  %v2131 = vpop.f32.mrb[0].mxu0
  %v2132 = vpop.f32.mrb[0].mxu0
  %v2133 = vadd.f32 0.0, %v2132
  %v2134 = vpop.f32.mrb[0].mxu0
  %2135 = vmatprep.mubr.bf16.mxu0 0
  %2136 = vmatmul.mubr.bf16.gmra.mrb[0].mxu0 %v2038
  %v2137 = vpop.f32.mrb[0].mxu0
  %v2138 = vadd.f32 0.0, %v2137
  %v2139 = vpop.f32.mrb[0].mxu0
  %v2140 = vpop.f32.mrb[0].mxu0
  %v2141 = vadd.f32 0.0, %v2140
  %v2142 = vpop.f32.mrb[0].mxu0
  %2143 = vdwg.mxu0
  %v2144 = vadd.f32 %v1967, %v2082
  %v2145 = vadd.f32 %v1968, %v2085
  %v2146 = vadd.f32 %v1969, %v2090
  %v2147 = vadd.f32 %v1970, %v2093
  %v2148 = vadd.f32 %v1971, %v2098
  %v2149 = vadd.f32 %v1972, %v2101
  %v2150 = vadd.f32 %v1973, %v2106
  %v2151 = vadd.f32 %v1974, %v2109
  %v2152 = vadd.f32 %v1975, %v2114
  %v2153 = vadd.f32 %v1976, %v2117
  %v2154 = vadd.f32 %v1977, %v2122
  %v2155 = vadd.f32 %v1978, %v2125
  %v2156 = vadd.f32 %v1979, %v2130
  %v2157 = vadd.f32 %v1980, %v2133
  %v2158 = vadd.f32 %v1981, %v2138
  %v2159 = vadd.f32 %v1982, %v2141
  %v2160 = vld [vmem:[%s880] sm:$0xf]
  %v2161 = vld [vmem:[%s880 + $0x4] sm:$0xf]
  %v2162 = vld [vmem:[%s880 + $0x8] sm:$0xf]
  %v2163 = vld [vmem:[%s880 + $0xc] sm:$0xf]
  %v2164 = vld [vmem:[%s880 + $0x10] sm:$0xf]
  %v2165 = vld [vmem:[%s880 + $0x14] sm:$0xf]
  %v2166 = vld [vmem:[%s880 + $0x18] sm:$0xf]
  %v2167 = vld [vmem:[%s880 + $0x1c] sm:$0xf]
  %v2168 = vld [vmem:[%s880 + $0x20] sm:$0xf]
  %v2169 = vld [vmem:[%s880 + $0x24] sm:$0xf]
  %v2170 = vld [vmem:[%s880 + $0x28] sm:$0xf]
  %v2171 = vld [vmem:[%s880 + $0x2c] sm:$0xf]
  %v2172 = vld [vmem:[%s880 + $0x30] sm:$0xf]
  %v2173 = vld [vmem:[%s880 + $0x34] sm:$0xf]
  %v2174 = vld [vmem:[%s880 + $0x38] sm:$0xf]
  %v2175 = vld [vmem:[%s880 + $0x3c] sm:$0xf]
  %v2192 = vunpack.c.l.b16 %v2160
  %v2193 = vunpack.c.l.b16 %v2161
  %v2194 = vunpack.c.l.b16 %v2162
  %v2195 = vunpack.c.l.b16 %v2163
  %v2196 = vunpack.c.l.b16 %v2164
  %v2197 = vunpack.c.l.b16 %v2165
  %v2198 = vunpack.c.l.b16 %v2166
  %v2199 = vunpack.c.l.b16 %v2167
  %v2200 = vunpack.c.l.b16 %v2168
  %v2201 = vunpack.c.l.b16 %v2169
  %v2202 = vunpack.c.l.b16 %v2170
  %v2203 = vunpack.c.l.b16 %v2171
  %v2204 = vunpack.c.l.b16 %v2172
  %v2205 = vunpack.c.l.b16 %v2173
  %v2206 = vunpack.c.l.b16 %v2174
  %v2207 = vunpack.c.l.b16 %v2175
  %v2208 = vpack.c.b16 %v2193, %v2192
  %v2209 = vpack.c.b16 %v2195, %v2194
  %v2210 = vpack.c.b16 %v2197, %v2196
  %v2211 = vpack.c.b16 %v2199, %v2198
  %v2212 = vpack.c.b16 %v2201, %v2200
  %v2213 = vpack.c.b16 %v2203, %v2202
  %v2214 = vpack.c.b16 %v2205, %v2204
  %v2215 = vpack.c.b16 %v2207, %v2206
  %2224 = vmatprep.subr.bf16.mxu0 0
  %2225 = vmatpush1.bf16.msra.mxu0 %v1784
  %2226 = vmatprep.subr.bf16.mxu0 0
  %2227 = vmatpush1.bf16.msra.mxu0 %v1787
  %2228 = vmatprep.subr.bf16.mxu0 0
  %2229 = vmatpush1.bf16.msra.mxu0 %v1790
  %2230 = vmatprep.subr.bf16.mxu0 0
  %2231 = vmatpush1.bf16.msra.mxu0 %v1793
  %2232 = vmatprep.subr.bf16.mxu0 0
  %2233 = vmatpush1.bf16.msra.mxu0 %v1796
  %2234 = vmatprep.subr.bf16.mxu0 0
  %2235 = vmatpush1.bf16.msra.mxu0 %v1799
  %2236 = vmatprep.subr.bf16.mxu0 0
  %2237 = vmatpush1.bf16.msra.mxu0 %v1802
  %2238 = vmatprep.subr.bf16.mxu0 0
  %2239 = vmatpush1.bf16.msra.mxu0 %v1805
  %2240 = vmatprep.subr.bf16.mxu0 0
  %2241 = vmatpush1.bf16.msra.mxu0 0
  %2242 = vmatprep.subr.bf16.mxu0 0
  %2243 = vmatpush1.bf16.msra.mxu0 0
  %2244 = vmatprep.subr.bf16.mxu0 0
  %2245 = vmatpush1.bf16.msra.mxu0 0
  %2246 = vmatprep.subr.bf16.mxu0 0
  %2247 = vmatpush1.bf16.msra.mxu0 0
  %2248 = vmatprep.subr.bf16.mxu0 0
  %2249 = vmatpush1.bf16.msra.mxu0 0
  %2250 = vmatprep.subr.bf16.mxu0 0
  %2251 = vmatpush1.bf16.msra.mxu0 0
  %2252 = vmatprep.subr.bf16.mxu0 0
  %2253 = vmatpush1.bf16.msra.mxu0 0
  %2254 = vmatprep.subr.bf16.mxu0 0
  %2255 = vmatpush1.bf16.msra.mxu0 0
  %2256 = vmatprep.mubr.bf16.mxu0 0
  %2257 = vmatmul.mubr.bf16.gmra.mrb[0].mxu0 %v2208
  %v2258 = vpop.f32.mrb[0].mxu0
  %v2259 = vadd.f32 0.0, %v2258
  %v2260 = vpop.f32.mrb[0].mxu0
  %v2261 = vpop.f32.mrb[0].mxu0
  %v2262 = vadd.f32 0.0, %v2261
  %v2263 = vpop.f32.mrb[0].mxu0
  %2264 = vmatprep.mubr.bf16.mxu0 0
  %2265 = vmatmul.mubr.bf16.gmra.mrb[0].mxu0 %v2209
  %v2266 = vpop.f32.mrb[0].mxu0
  %v2267 = vadd.f32 0.0, %v2266
  %v2268 = vpop.f32.mrb[0].mxu0
  %v2269 = vpop.f32.mrb[0].mxu0
  %v2270 = vadd.f32 0.0, %v2269
  %v2271 = vpop.f32.mrb[0].mxu0
  %2272 = vmatprep.mubr.bf16.mxu0 0
  %2273 = vmatmul.mubr.bf16.gmra.mrb[0].mxu0 %v2210
  %v2274 = vpop.f32.mrb[0].mxu0
  %v2275 = vadd.f32 0.0, %v2274
  %v2276 = vpop.f32.mrb[0].mxu0
  %v2277 = vpop.f32.mrb[0].mxu0
  %v2278 = vadd.f32 0.0, %v2277
  %v2279 = vpop.f32.mrb[0].mxu0
  %2280 = vmatprep.mubr.bf16.mxu0 0
  %2281 = vmatmul.mubr.bf16.gmra.mrb[0].mxu0 %v2211
  %v2282 = vpop.f32.mrb[0].mxu0
  %v2283 = vadd.f32 0.0, %v2282
  %v2284 = vpop.f32.mrb[0].mxu0
  %v2285 = vpop.f32.mrb[0].mxu0
  %v2286 = vadd.f32 0.0, %v2285
  %v2287 = vpop.f32.mrb[0].mxu0
  %2288 = vmatprep.mubr.bf16.mxu0 0
  %2289 = vmatmul.mubr.bf16.gmra.mrb[0].mxu0 %v2212
  %v2290 = vpop.f32.mrb[0].mxu0
  %v2291 = vadd.f32 0.0, %v2290
  %v2292 = vpop.f32.mrb[0].mxu0
  %v2293 = vpop.f32.mrb[0].mxu0
  %v2294 = vadd.f32 0.0, %v2293
  %v2295 = vpop.f32.mrb[0].mxu0
  %2296 = vmatprep.mubr.bf16.mxu0 0
  %2297 = vmatmul.mubr.bf16.gmra.mrb[0].mxu0 %v2213
  %v2298 = vpop.f32.mrb[0].mxu0
  %v2299 = vadd.f32 0.0, %v2298
  %v2300 = vpop.f32.mrb[0].mxu0
  %v2301 = vpop.f32.mrb[0].mxu0
  %v2302 = vadd.f32 0.0, %v2301
  %v2303 = vpop.f32.mrb[0].mxu0
  %2304 = vmatprep.mubr.bf16.mxu0 0
  %2305 = vmatmul.mubr.bf16.gmra.mrb[0].mxu0 %v2214
  %v2306 = vpop.f32.mrb[0].mxu0
  %v2307 = vadd.f32 0.0, %v2306
  %v2308 = vpop.f32.mrb[0].mxu0
  %v2309 = vpop.f32.mrb[0].mxu0
  %v2310 = vadd.f32 0.0, %v2309
  %v2311 = vpop.f32.mrb[0].mxu0
  %2312 = vmatprep.mubr.bf16.mxu0 0
  %2313 = vmatmul.mubr.bf16.gmra.mrb[0].mxu0 %v2215
  %v2314 = vpop.f32.mrb[0].mxu0
  %v2315 = vadd.f32 0.0, %v2314
  %v2316 = vpop.f32.mrb[0].mxu0
  %v2317 = vpop.f32.mrb[0].mxu0
  %v2318 = vadd.f32 0.0, %v2317
  %v2319 = vpop.f32.mrb[0].mxu0
  %2320 = vdwg.mxu0
  %v2321 = vadd.f32 %v2144, %v2259
  %v2322 = vadd.f32 %v2145, %v2262
  %v2323 = vadd.f32 %v2146, %v2267
  %v2324 = vadd.f32 %v2147, %v2270
  %v2325 = vadd.f32 %v2148, %v2275
  %v2326 = vadd.f32 %v2149, %v2278
  %v2327 = vadd.f32 %v2150, %v2283
  %v2328 = vadd.f32 %v2151, %v2286
  %v2329 = vadd.f32 %v2152, %v2291
  %v2330 = vadd.f32 %v2153, %v2294
  %v2331 = vadd.f32 %v2154, %v2299
  %v2332 = vadd.f32 %v2155, %v2302
  %v2333 = vadd.f32 %v2156, %v2307
  %v2334 = vadd.f32 %v2157, %v2310
  %v2335 = vadd.f32 %v2158, %v2315
  %v2336 = vadd.f32 %v2159, %v2318
  %s2337 = scalar_lea.vmem %s4, 1
  %v2338 = vld [vmem:[%s2337] sm:$0x1]
  %v2340 = vlaneseq
  %v2341 = vshrl.u32 %v2340, 7
  %v2342 = vsub.s32 0, %v2341
  %v2343 = vrot.slane %v2338, %v2342
  %v2345 = vadd.f32 %v2321, %v2343
  %v2346 = vadd.f32 %v2322, %v2343
  %v2347 = vadd.f32 %v2323, %v2343
  %v2348 = vadd.f32 %v2324, %v2343
  %v2349 = vadd.f32 %v2325, %v2343
  %v2350 = vadd.f32 %v2326, %v2343
  %v2351 = vadd.f32 %v2327, %v2343
  %v2352 = vadd.f32 %v2328, %v2343
  %v2353 = vadd.f32 %v2329, %v2343
  %v2354 = vadd.f32 %v2330, %v2343
  %v2355 = vadd.f32 %v2331, %v2343
  %v2356 = vadd.f32 %v2332, %v2343
  %v2357 = vadd.f32 %v2333, %v2343
  %v2358 = vadd.f32 %v2334, %v2343
  %v2359 = vadd.f32 %v2335, %v2343
  %v2360 = vadd.f32 %v2336, %v2343
  %v2361 = vld [vmem:[%s2] sm:$0xff]
  %v2362 = vld [vmem:[%s2 + $0x8] sm:$0xff]
  %v2363 = vld [vmem:[%s2 + $0x10] sm:$0xff]
  %v2364 = vld [vmem:[%s2 + $0x18] sm:$0xff]
  %v2365 = vld [vmem:[%s2 + $0x20] sm:$0xff]
  %v2366 = vld [vmem:[%s2 + $0x28] sm:$0xff]
  %v2367 = vld [vmem:[%s2 + $0x30] sm:$0xff]
  %v2368 = vld [vmem:[%s2 + $0x38] sm:$0xff]
  %v2369 = vld [vmem:[%s2 + $0x40] sm:$0xff]
  %v2370 = vld [vmem:[%s2 + $0x48] sm:$0xff]
  %v2371 = vld [vmem:[%s2 + $0x50] sm:$0xff]
  %v2372 = vld [vmem:[%s2 + $0x58] sm:$0xff]
  %v2373 = vld [vmem:[%s2 + $0x60] sm:$0xff]
  %v2374 = vld [vmem:[%s2 + $0x68] sm:$0xff]
  %v2375 = vld [vmem:[%s2 + $0x70] sm:$0xff]
  %v2376 = vld [vmem:[%s2 + $0x78] sm:$0xff]
  %2378 = vset.pattern.permute.xlu0 0
  %2379 = vperm.xlu0 %2378, %v2361
  %v2380 = vpop.permute.xlu0 %2379
  %2383 = vset.pattern.permute.xlu0 0
  %2384 = vperm.xlu0 %2383, %v2362
  %v2385 = vpop.permute.xlu0 %2384
  %2388 = vset.pattern.permute.xlu0 0
  %2389 = vperm.xlu0 %2388, %v2363
  %v2390 = vpop.permute.xlu0 %2389
  %2393 = vset.pattern.permute.xlu0 0
  %2394 = vperm.xlu0 %2393, %v2364
  %v2395 = vpop.permute.xlu0 %2394
  %2398 = vset.pattern.permute.xlu0 0
  %2399 = vperm.xlu0 %2398, %v2365
  %v2400 = vpop.permute.xlu0 %2399
  %2403 = vset.pattern.permute.xlu0 0
  %2404 = vperm.xlu0 %2403, %v2366
  %v2405 = vpop.permute.xlu0 %2404
  %2408 = vset.pattern.permute.xlu0 0
  %2409 = vperm.xlu0 %2408, %v2367
  %v2410 = vpop.permute.xlu0 %2409
  %2413 = vset.pattern.permute.xlu0 0
  %2414 = vperm.xlu0 %2413, %v2368
  %v2415 = vpop.permute.xlu0 %2414
  %2418 = vset.pattern.permute.xlu0 0
  %2419 = vperm.xlu0 %2418, %v2369
  %v2420 = vpop.permute.xlu0 %2419
  %2423 = vset.pattern.permute.xlu0 0
  %2424 = vperm.xlu0 %2423, %v2370
  %v2425 = vpop.permute.xlu0 %2424
  %2428 = vset.pattern.permute.xlu0 0
  %2429 = vperm.xlu0 %2428, %v2371
  %v2430 = vpop.permute.xlu0 %2429
  %2433 = vset.pattern.permute.xlu0 0
  %2434 = vperm.xlu0 %2433, %v2372
  %v2435 = vpop.permute.xlu0 %2434
  %2438 = vset.pattern.permute.xlu0 0
  %2439 = vperm.xlu0 %2438, %v2373
  %v2440 = vpop.permute.xlu0 %2439
  %2443 = vset.pattern.permute.xlu0 0
  %2444 = vperm.xlu0 %2443, %v2374
  %v2445 = vpop.permute.xlu0 %2444
  %2448 = vset.pattern.permute.xlu0 0
  %2449 = vperm.xlu0 %2448, %v2375
  %v2450 = vpop.permute.xlu0 %2449
  %2453 = vset.pattern.permute.xlu0 0
  %2454 = vperm.xlu0 %2453, %v2376
  %v2455 = vpop.permute.xlu0 %2454
  %v2457 = vmul.f32 %v2345, %v2380
  %v2458 = vmul.f32 %v2346, %v2385
  %v2459 = vmul.f32 %v2347, %v2390
  %v2460 = vmul.f32 %v2348, %v2395
  %v2461 = vmul.f32 %v2349, %v2400
  %v2462 = vmul.f32 %v2350, %v2405
  %v2463 = vmul.f32 %v2351, %v2410
  %v2464 = vmul.f32 %v2352, %v2415
  %v2465 = vmul.f32 %v2353, %v2420
  %v2466 = vmul.f32 %v2354, %v2425
  %v2467 = vmul.f32 %v2355, %v2430
  %v2468 = vmul.f32 %v2356, %v2435
  %v2469 = vmul.f32 %v2357, %v2440
  %v2470 = vmul.f32 %v2358, %v2445
  %v2471 = vmul.f32 %v2359, %v2450
  %v2472 = vmul.f32 %v2360, %v2455
  %v2473 = vadd.f32 %v2457, %v2458
  %v2474 = vadd.f32 %v2473, %v2459
  %v2475 = vadd.f32 %v2474, %v2460
  %v2476 = vadd.f32 %v2475, %v2461
  %v2477 = vadd.f32 %v2476, %v2462
  %v2478 = vadd.f32 %v2477, %v2463
  %v2479 = vadd.f32 %v2478, %v2464
  %v2480 = vadd.f32 %v2479, %v2465
  %v2481 = vadd.f32 %v2480, %v2466
  %v2482 = vadd.f32 %v2481, %v2467
  %v2483 = vadd.f32 %v2482, %v2468
  %v2484 = vadd.f32 %v2483, %v2469
  %v2485 = vadd.f32 %v2484, %v2470
  %v2486 = vadd.f32 %v2485, %v2471
  %v2487 = vadd.f32 %v2486, %v2472
  %v2488 = vrot.slane %v2487, 4
  %v2489 = vadd.f32 %v2487, %v2488
  %v2490 = vrot.slane %v2489, 2
  %v2491 = vadd.f32 %v2489, %v2490
  %v2492 = vrot.slane %v2491, 1
  %v2493 = vadd.f32 %v2491, %v2492
  %v2494 = vmul.f32 %v2493, %v1214
  %v2495 = vmul.f32 %v2457, %v2457
  %v2496 = vmul.f32 %v2458, %v2458
  %v2497 = vmul.f32 %v2459, %v2459
  %v2498 = vmul.f32 %v2460, %v2460
  %v2499 = vmul.f32 %v2461, %v2461
  %v2500 = vmul.f32 %v2462, %v2462
  %v2501 = vmul.f32 %v2463, %v2463
  %v2502 = vmul.f32 %v2464, %v2464
  %v2503 = vmul.f32 %v2465, %v2465
  %v2504 = vmul.f32 %v2466, %v2466
  %v2505 = vmul.f32 %v2467, %v2467
  %v2506 = vmul.f32 %v2468, %v2468
  %v2507 = vmul.f32 %v2469, %v2469
  %v2508 = vmul.f32 %v2470, %v2470
  %v2509 = vmul.f32 %v2471, %v2471
  %v2510 = vmul.f32 %v2472, %v2472
  %v2511 = vadd.f32 %v2495, %v2496
  %v2512 = vadd.f32 %v2511, %v2497
  %v2513 = vadd.f32 %v2512, %v2498
  %v2514 = vadd.f32 %v2513, %v2499
  %v2515 = vadd.f32 %v2514, %v2500
  %v2516 = vadd.f32 %v2515, %v2501
  %v2517 = vadd.f32 %v2516, %v2502
  %v2518 = vadd.f32 %v2517, %v2503
  %v2519 = vadd.f32 %v2518, %v2504
  %v2520 = vadd.f32 %v2519, %v2505
  %v2521 = vadd.f32 %v2520, %v2506
  %v2522 = vadd.f32 %v2521, %v2507
  %v2523 = vadd.f32 %v2522, %v2508
  %v2524 = vadd.f32 %v2523, %v2509
  %v2525 = vadd.f32 %v2524, %v2510
  %v2526 = vrot.slane %v2525, 4
  %v2527 = vadd.f32 %v2525, %v2526
  %v2528 = vrot.slane %v2527, 2
  %v2529 = vadd.f32 %v2527, %v2528
  %v2530 = vrot.slane %v2529, 1
  %v2531 = vadd.f32 %v2529, %v2530
  %v2532 = vmul.f32 %v2531, %v1214
  %v2533 = vmul.f32 %v2494, %v2494
  %v2534 = vsub.f32 %v2532, %v2533
  %s2535 = scalar_lea.vmem %s5, 1
  %v2536 = vld [vmem:[%s2535] sm:$0x1]
  %v2537 = vadd.f32 %v2534, 1e-05
  %v2538 = vrsqrt.pop %v2537
  %v2539 = vmul.f32 %v2536, %v2538
  %s2540 = scalar_lea.vmem %s6, 1
  %v2541 = vld [vmem:[%s2540] sm:$0x1]
  %v2542 = vmul.f32 %v2494, %v2539
  %v2543 = vsub.f32 %v2541, %v2542
  %v2545 = vlaneseq
  %v2546 = vshrl.u32 %v2545, 7
  %v2547 = vsub.s32 0, %v2546
  %v2548 = vrot.slane %v2539, %v2547
  %v2550 = vmul.f32 %v2457, %v2548
  %v2551 = vmul.f32 %v2458, %v2548
  %v2552 = vmul.f32 %v2459, %v2548
  %v2553 = vmul.f32 %v2460, %v2548
  %v2554 = vmul.f32 %v2461, %v2548
  %v2555 = vmul.f32 %v2462, %v2548
  %v2556 = vmul.f32 %v2463, %v2548
  %v2557 = vmul.f32 %v2464, %v2548
  %v2558 = vmul.f32 %v2465, %v2548
  %v2559 = vmul.f32 %v2466, %v2548
  %v2560 = vmul.f32 %v2467, %v2548
  %v2561 = vmul.f32 %v2468, %v2548
  %v2562 = vmul.f32 %v2469, %v2548
  %v2563 = vmul.f32 %v2470, %v2548
  %v2564 = vmul.f32 %v2471, %v2548
  %v2565 = vmul.f32 %v2472, %v2548
  %v2567 = vlaneseq
  %v2568 = vshrl.u32 %v2567, 7
  %v2569 = vsub.s32 0, %v2568
  %v2570 = vrot.slane %v2543, %v2569
  %v2572 = vadd.f32 %v2550, %v2570
  %v2573 = vadd.f32 %v2551, %v2570
  %v2574 = vadd.f32 %v2552, %v2570
  %v2575 = vadd.f32 %v2553, %v2570
  %v2576 = vadd.f32 %v2554, %v2570
  %v2577 = vadd.f32 %v2555, %v2570
  %v2578 = vadd.f32 %v2556, %v2570
  %v2579 = vadd.f32 %v2557, %v2570
  %v2580 = vadd.f32 %v2558, %v2570
  %v2581 = vadd.f32 %v2559, %v2570
  %v2582 = vadd.f32 %v2560, %v2570
  %v2583 = vadd.f32 %v2561, %v2570
  %v2584 = vadd.f32 %v2562, %v2570
  %v2585 = vadd.f32 %v2563, %v2570
  %v2586 = vadd.f32 %v2564, %v2570
  %v2587 = vadd.f32 %v2565, %v2570
  %v2588 = vmax.f32 %v2572, 0.0
  %v2589 = vmax.f32 %v2573, 0.0
  %v2590 = vmax.f32 %v2574, 0.0
  %v2591 = vmax.f32 %v2575, 0.0
  %v2592 = vmax.f32 %v2576, 0.0
  %v2593 = vmax.f32 %v2577, 0.0
  %v2594 = vmax.f32 %v2578, 0.0
  %v2595 = vmax.f32 %v2579, 0.0
  %v2596 = vmax.f32 %v2580, 0.0
  %v2597 = vmax.f32 %v2581, 0.0
  %v2598 = vmax.f32 %v2582, 0.0
  %v2599 = vmax.f32 %v2583, 0.0
  %v2600 = vmax.f32 %v2584, 0.0
  %v2601 = vmax.f32 %v2585, 0.0
  %v2602 = vmax.f32 %v2586, 0.0
  %v2603 = vmax.f32 %v2587, 0.0
  %v2604 = vadd.f32 %v2588, %v1339
  %v2605 = vadd.f32 %v2589, %v1340
  %v2606 = vadd.f32 %v2590, %v1341
  %v2607 = vadd.f32 %v2591, %v1342
  %v2608 = vadd.f32 %v2592, %v1343
  %v2609 = vadd.f32 %v2593, %v1344
  %v2610 = vadd.f32 %v2594, %v1345
  %v2611 = vadd.f32 %v2595, %v1346
  %v2612 = vadd.f32 %v2596, %v1347
  %v2613 = vadd.f32 %v2597, %v1348
  %v2614 = vadd.f32 %v2598, %v1349
  %v2615 = vadd.f32 %v2599, %v1350
  %v2616 = vadd.f32 %v2600, %v1351
  %v2617 = vadd.f32 %v2601, %v1352
  %v2618 = vadd.f32 %v2602, %v1353
  %v2619 = vadd.f32 %v2603, %v1354
  %2620 = vst [vmem:[#allocation2] sm:$0xff] %v2604
  %2621 = vst [vmem:[#allocation2 + $0x8] sm:$0xff] %v2605
  %2622 = vst [vmem:[#allocation2 + $0x10] sm:$0xff] %v2606
  %2623 = vst [vmem:[#allocation2 + $0x18] sm:$0xff] %v2607
  %2624 = vst [vmem:[#allocation2 + $0x20] sm:$0xff] %v2608
  %2625 = vst [vmem:[#allocation2 + $0x28] sm:$0xff] %v2609
  %2626 = vst [vmem:[#allocation2 + $0x30] sm:$0xff] %v2610
  %2627 = vst [vmem:[#allocation2 + $0x38] sm:$0xff] %v2611
  %2628 = vst [vmem:[#allocation2 + $0x40] sm:$0xff] %v2612
  %2629 = vst [vmem:[#allocation2 + $0x48] sm:$0xff] %v2613
  %2630 = vst [vmem:[#allocation2 + $0x50] sm:$0xff] %v2614
  %2631 = vst [vmem:[#allocation2 + $0x58] sm:$0xff] %v2615
  %2632 = vst [vmem:[#allocation2 + $0x60] sm:$0xff] %v2616
  %2633 = vst [vmem:[#allocation2 + $0x68] sm:$0xff] %v2617
  %2634 = vst [vmem:[#allocation2 + $0x70] sm:$0xff] %v2618
  %2635 = vst [vmem:[#allocation2 + $0x78] sm:$0xff] %v2619
  %v2636 = vld [vmem:[#allocation2] sm:$0xff]
  %v2637 = vld [vmem:[#allocation2 + $0x8] sm:$0xff]
  %v2638 = vld [vmem:[#allocation2 + $0x10] sm:$0xff]
  %v2639 = vld [vmem:[#allocation2 + $0x18] sm:$0xff]
  %v2640 = vld [vmem:[#allocation2 + $0x20] sm:$0xff]
  %v2641 = vld [vmem:[#allocation2 + $0x28] sm:$0xff]
  %v2642 = vld [vmem:[#allocation2 + $0x30] sm:$0xff]
  %v2643 = vld [vmem:[#allocation2 + $0x38] sm:$0xff]
  %v2644 = vld [vmem:[#allocation2 + $0x40] sm:$0xff]
  %v2645 = vld [vmem:[#allocation2 + $0x48] sm:$0xff]
  %v2646 = vld [vmem:[#allocation2 + $0x50] sm:$0xff]
  %v2647 = vld [vmem:[#allocation2 + $0x58] sm:$0xff]
  %v2648 = vld [vmem:[#allocation2 + $0x60] sm:$0xff]
  %v2649 = vld [vmem:[#allocation2 + $0x68] sm:$0xff]
  %v2650 = vld [vmem:[#allocation2 + $0x70] sm:$0xff]
  %v2651 = vld [vmem:[#allocation2 + $0x78] sm:$0xff]
  %v2652 = vpack.c.bf16 %v2637, %v2636
  %v2653 = vpack.c.bf16 %v2639, %v2638
  %v2654 = vpack.c.bf16 %v2641, %v2640
  %v2655 = vpack.c.bf16 %v2643, %v2642
  %v2656 = vpack.c.bf16 %v2645, %v2644
  %v2657 = vpack.c.bf16 %v2647, %v2646
  %v2658 = vpack.c.bf16 %v2649, %v2648
  %v2659 = vpack.c.bf16 %v2651, %v2650
  %s2660 = scalar_lea.vmem %s3, 512
  %v2661 = vld [vmem:[%s2660] sm:$0xff]
  %v2662 = vld [vmem:[%s2660 + $0x8] sm:$0xff]
  %v2663 = vld [vmem:[%s2660 + $0x10] sm:$0xff]
  %v2664 = vld [vmem:[%s2660 + $0x18] sm:$0xff]
  %v2665 = vld [vmem:[%s2660 + $0x20] sm:$0xff]
  %v2666 = vld [vmem:[%s2660 + $0x28] sm:$0xff]
  %v2667 = vld [vmem:[%s2660 + $0x30] sm:$0xff]
  %v2668 = vld [vmem:[%s2660 + $0x38] sm:$0xff]
  %v2669 = vld [vmem:[%s2660 + $0x40] sm:$0xff]
  %v2670 = vld [vmem:[%s2660 + $0x48] sm:$0xff]
  %v2671 = vld [vmem:[%s2660 + $0x50] sm:$0xff]
  %v2672 = vld [vmem:[%s2660 + $0x58] sm:$0xff]
  %v2673 = vld [vmem:[%s2660 + $0x60] sm:$0xff]
  %v2674 = vld [vmem:[%s2660 + $0x68] sm:$0xff]
  %v2675 = vld [vmem:[%s2660 + $0x70] sm:$0xff]
  %v2676 = vld [vmem:[%s2660 + $0x78] sm:$0xff]
  %v2677 = vld [vmem:[%s2660 + $0x80] sm:$0xff]
  %v2678 = vld [vmem:[%s2660 + $0x88] sm:$0xff]
  %v2679 = vld [vmem:[%s2660 + $0x90] sm:$0xff]
  %v2680 = vld [vmem:[%s2660 + $0x98] sm:$0xff]
  %v2681 = vld [vmem:[%s2660 + $0xa0] sm:$0xff]
  %v2682 = vld [vmem:[%s2660 + $0xa8] sm:$0xff]
  %v2683 = vld [vmem:[%s2660 + $0xb0] sm:$0xff]
  %v2684 = vld [vmem:[%s2660 + $0xb8] sm:$0xff]
  %v2685 = vld [vmem:[%s2660 + $0xc0] sm:$0xff]
  %v2686 = vld [vmem:[%s2660 + $0xc8] sm:$0xff]
  %v2687 = vld [vmem:[%s2660 + $0xd0] sm:$0xff]
  %v2688 = vld [vmem:[%s2660 + $0xd8] sm:$0xff]
  %v2689 = vld [vmem:[%s2660 + $0xe0] sm:$0xff]
  %v2690 = vld [vmem:[%s2660 + $0xe8] sm:$0xff]
  %v2691 = vld [vmem:[%s2660 + $0xf0] sm:$0xff]
  %v2692 = vld [vmem:[%s2660 + $0xf8] sm:$0xff]
  %v2725 = vunpack.c.l.b16 %v2661
  %v2726 = vunpack.c.h.b16 %v2661
  %v2727 = vunpack.c.l.b16 %v2662
  %v2728 = vunpack.c.h.b16 %v2662
  %v2729 = vunpack.c.l.b16 %v2663
  %v2730 = vunpack.c.h.b16 %v2663
  %v2731 = vunpack.c.l.b16 %v2664
  %v2732 = vunpack.c.h.b16 %v2664
  %v2733 = vunpack.c.l.b16 %v2665
  %v2734 = vunpack.c.h.b16 %v2665
  %v2735 = vunpack.c.l.b16 %v2666
  %v2736 = vunpack.c.h.b16 %v2666
  %v2737 = vunpack.c.l.b16 %v2667
  %v2738 = vunpack.c.h.b16 %v2667
  %v2739 = vunpack.c.l.b16 %v2668
  %v2740 = vunpack.c.h.b16 %v2668
  %v2741 = vunpack.c.l.b16 %v2669
  %v2742 = vunpack.c.h.b16 %v2669
  %v2743 = vunpack.c.l.b16 %v2670
  %v2744 = vunpack.c.h.b16 %v2670
  %v2745 = vunpack.c.l.b16 %v2671
  %v2746 = vunpack.c.h.b16 %v2671
  %v2747 = vunpack.c.l.b16 %v2672
  %v2748 = vunpack.c.h.b16 %v2672
  %v2749 = vunpack.c.l.b16 %v2673
  %v2750 = vunpack.c.h.b16 %v2673
  %v2751 = vunpack.c.l.b16 %v2674
  %v2752 = vunpack.c.h.b16 %v2674
  %v2753 = vunpack.c.l.b16 %v2675
  %v2754 = vunpack.c.h.b16 %v2675
  %v2755 = vunpack.c.l.b16 %v2676
  %v2756 = vunpack.c.h.b16 %v2676
  %v2757 = vunpack.c.l.b16 %v2677
  %v2758 = vunpack.c.h.b16 %v2677
  %v2759 = vunpack.c.l.b16 %v2678
  %v2760 = vunpack.c.h.b16 %v2678
  %v2761 = vunpack.c.l.b16 %v2679
  %v2762 = vunpack.c.h.b16 %v2679
  %v2763 = vunpack.c.l.b16 %v2680
  %v2764 = vunpack.c.h.b16 %v2680
  %v2765 = vunpack.c.l.b16 %v2681
  %v2766 = vunpack.c.h.b16 %v2681
  %v2767 = vunpack.c.l.b16 %v2682
  %v2768 = vunpack.c.h.b16 %v2682
  %v2769 = vunpack.c.l.b16 %v2683
  %v2770 = vunpack.c.h.b16 %v2683
  %v2771 = vunpack.c.l.b16 %v2684
  %v2772 = vunpack.c.h.b16 %v2684
  %v2773 = vunpack.c.l.b16 %v2685
  %v2774 = vunpack.c.h.b16 %v2685
  %v2775 = vunpack.c.l.b16 %v2686
  %v2776 = vunpack.c.h.b16 %v2686
  %v2777 = vunpack.c.l.b16 %v2687
  %v2778 = vunpack.c.h.b16 %v2687
  %v2779 = vunpack.c.l.b16 %v2688
  %v2780 = vunpack.c.h.b16 %v2688
  %v2781 = vunpack.c.l.b16 %v2689
  %v2782 = vunpack.c.h.b16 %v2689
  %v2783 = vunpack.c.l.b16 %v2690
  %v2784 = vunpack.c.h.b16 %v2690
  %v2785 = vunpack.c.l.b16 %v2691
  %v2786 = vunpack.c.h.b16 %v2691
  %v2787 = vunpack.c.l.b16 %v2692
  %v2788 = vunpack.c.h.b16 %v2692
  %v2789 = vpack.c.b16 %v2729, %v2725
  %v2790 = vpack.c.b16 %v2730, %v2726
  %v2791 = vpack.c.b16 %v2731, %v2727
  %v2792 = vpack.c.b16 %v2732, %v2728
  %v2793 = vpack.c.b16 %v2737, %v2733
  %v2794 = vpack.c.b16 %v2738, %v2734
  %v2795 = vpack.c.b16 %v2739, %v2735
  %v2796 = vpack.c.b16 %v2740, %v2736
  %v2797 = vpack.c.b16 %v2745, %v2741
  %v2798 = vpack.c.b16 %v2746, %v2742
  %v2799 = vpack.c.b16 %v2747, %v2743
  %v2800 = vpack.c.b16 %v2748, %v2744
  %v2801 = vpack.c.b16 %v2753, %v2749
  %v2802 = vpack.c.b16 %v2754, %v2750
  %v2803 = vpack.c.b16 %v2755, %v2751
  %v2804 = vpack.c.b16 %v2756, %v2752
  %v2805 = vpack.c.b16 %v2761, %v2757
  %v2806 = vpack.c.b16 %v2762, %v2758
  %v2807 = vpack.c.b16 %v2763, %v2759
  %v2808 = vpack.c.b16 %v2764, %v2760
  %v2809 = vpack.c.b16 %v2769, %v2765
  %v2810 = vpack.c.b16 %v2770, %v2766
  %v2811 = vpack.c.b16 %v2771, %v2767
  %v2812 = vpack.c.b16 %v2772, %v2768
  %v2813 = vpack.c.b16 %v2777, %v2773
  %v2814 = vpack.c.b16 %v2778, %v2774
  %v2815 = vpack.c.b16 %v2779, %v2775
  %v2816 = vpack.c.b16 %v2780, %v2776
  %v2817 = vpack.c.b16 %v2785, %v2781
  %v2818 = vpack.c.b16 %v2786, %v2782
  %v2819 = vpack.c.b16 %v2787, %v2783
  %v2820 = vpack.c.b16 %v2788, %v2784
  %2853 = vmatprep.subr.bf16.mxu0 %v2790
  %2854 = vmatpush1.bf16.msra.mxu0 %v2789
  %2855 = vmatprep.subr.bf16.mxu0 %v2794
  %2856 = vmatpush1.bf16.msra.mxu0 %v2793
  %2857 = vmatprep.subr.bf16.mxu0 %v2798
  %2858 = vmatpush1.bf16.msra.mxu0 %v2797
  %2859 = vmatprep.subr.bf16.mxu0 %v2802
  %2860 = vmatpush1.bf16.msra.mxu0 %v2801
  %2861 = vmatprep.subr.bf16.mxu0 %v2806
  %2862 = vmatpush1.bf16.msra.mxu0 %v2805
  %2863 = vmatprep.subr.bf16.mxu0 %v2810
  %2864 = vmatpush1.bf16.msra.mxu0 %v2809
  %2865 = vmatprep.subr.bf16.mxu0 %v2814
  %2866 = vmatpush1.bf16.msra.mxu0 %v2813
  %2867 = vmatprep.subr.bf16.mxu0 %v2818
  %2868 = vmatpush1.bf16.msra.mxu0 %v2817
  %2869 = vmatprep.subr.bf16.mxu0 0
  %2870 = vmatpush1.bf16.msra.mxu0 0
  %2871 = vmatprep.subr.bf16.mxu0 0
  %2872 = vmatpush1.bf16.msra.mxu0 0
  %2873 = vmatprep.subr.bf16.mxu0 0
  %2874 = vmatpush1.bf16.msra.mxu0 0
  %2875 = vmatprep.subr.bf16.mxu0 0
  %2876 = vmatpush1.bf16.msra.mxu0 0
  %2877 = vmatprep.subr.bf16.mxu0 0
  %2878 = vmatpush1.bf16.msra.mxu0 0
  %2879 = vmatprep.subr.bf16.mxu0 0
  %2880 = vmatpush1.bf16.msra.mxu0 0
  %2881 = vmatprep.subr.bf16.mxu0 0
  %2882 = vmatpush1.bf16.msra.mxu0 0
  %2883 = vmatprep.subr.bf16.mxu0 0
  %2884 = vmatpush1.bf16.msra.mxu0 0
  %2885 = vmatprep.mubr.bf16.mxu0 0
  %2886 = vmatmul.mubr.bf16.gmra.mrb[0].mxu0 %v2652
  %v2887 = vpop.f32.mrb[0].mxu0
  %v2888 = vadd.f32 0.0, %v2887
  %v2889 = vpop.f32.mrb[0].mxu0
  %v2890 = vadd.f32 0.0, %v2889
  %v2891 = vpop.f32.mrb[0].mxu0
  %v2892 = vadd.f32 0.0, %v2891
  %v2893 = vpop.f32.mrb[0].mxu0
  %v2894 = vadd.f32 0.0, %v2893
  %2895 = vmatprep.mubr.bf16.mxu0 0
  %2896 = vmatmul.mubr.bf16.gmra.mrb[0].mxu0 %v2653
  %v2897 = vpop.f32.mrb[0].mxu0
  %v2898 = vadd.f32 0.0, %v2897
  %v2899 = vpop.f32.mrb[0].mxu0
  %v2900 = vadd.f32 0.0, %v2899
  %v2901 = vpop.f32.mrb[0].mxu0
  %v2902 = vadd.f32 0.0, %v2901
  %v2903 = vpop.f32.mrb[0].mxu0
  %v2904 = vadd.f32 0.0, %v2903
  %2905 = vmatprep.mubr.bf16.mxu0 0
  %2906 = vmatmul.mubr.bf16.gmra.mrb[0].mxu0 %v2654
  %v2907 = vpop.f32.mrb[0].mxu0
  %v2908 = vadd.f32 0.0, %v2907
  %v2909 = vpop.f32.mrb[0].mxu0
  %v2910 = vadd.f32 0.0, %v2909
  %v2911 = vpop.f32.mrb[0].mxu0
  %v2912 = vadd.f32 0.0, %v2911
  %v2913 = vpop.f32.mrb[0].mxu0
  %v2914 = vadd.f32 0.0, %v2913
  %2915 = vmatprep.mubr.bf16.mxu0 0
  %2916 = vmatmul.mubr.bf16.gmra.mrb[0].mxu0 %v2655
  %v2917 = vpop.f32.mrb[0].mxu0
  %v2918 = vadd.f32 0.0, %v2917
  %v2919 = vpop.f32.mrb[0].mxu0
  %v2920 = vadd.f32 0.0, %v2919
  %v2921 = vpop.f32.mrb[0].mxu0
  %v2922 = vadd.f32 0.0, %v2921
  %v2923 = vpop.f32.mrb[0].mxu0
  %v2924 = vadd.f32 0.0, %v2923
  %2925 = vmatprep.mubr.bf16.mxu0 0
  %2926 = vmatmul.mubr.bf16.gmra.mrb[0].mxu0 %v2656
  %v2927 = vpop.f32.mrb[0].mxu0
  %v2928 = vadd.f32 0.0, %v2927
  %v2929 = vpop.f32.mrb[0].mxu0
  %v2930 = vadd.f32 0.0, %v2929
  %v2931 = vpop.f32.mrb[0].mxu0
  %v2932 = vadd.f32 0.0, %v2931
  %v2933 = vpop.f32.mrb[0].mxu0
  %v2934 = vadd.f32 0.0, %v2933
  %2935 = vmatprep.mubr.bf16.mxu0 0
  %2936 = vmatmul.mubr.bf16.gmra.mrb[0].mxu0 %v2657
  %v2937 = vpop.f32.mrb[0].mxu0
  %v2938 = vadd.f32 0.0, %v2937
  %v2939 = vpop.f32.mrb[0].mxu0
  %v2940 = vadd.f32 0.0, %v2939
  %v2941 = vpop.f32.mrb[0].mxu0
  %v2942 = vadd.f32 0.0, %v2941
  %v2943 = vpop.f32.mrb[0].mxu0
  %v2944 = vadd.f32 0.0, %v2943
  %2945 = vmatprep.mubr.bf16.mxu0 0
  %2946 = vmatmul.mubr.bf16.gmra.mrb[0].mxu0 %v2658
  %v2947 = vpop.f32.mrb[0].mxu0
  %v2948 = vadd.f32 0.0, %v2947
  %v2949 = vpop.f32.mrb[0].mxu0
  %v2950 = vadd.f32 0.0, %v2949
  %v2951 = vpop.f32.mrb[0].mxu0
  %v2952 = vadd.f32 0.0, %v2951
  %v2953 = vpop.f32.mrb[0].mxu0
  %v2954 = vadd.f32 0.0, %v2953
  %2955 = vmatprep.mubr.bf16.mxu0 0
  %2956 = vmatmul.mubr.bf16.gmra.mrb[0].mxu0 %v2659
  %v2957 = vpop.f32.mrb[0].mxu0
  %v2958 = vadd.f32 0.0, %v2957
  %v2959 = vpop.f32.mrb[0].mxu0
  %v2960 = vadd.f32 0.0, %v2959
  %v2961 = vpop.f32.mrb[0].mxu0
  %v2962 = vadd.f32 0.0, %v2961
  %v2963 = vpop.f32.mrb[0].mxu0
  %v2964 = vadd.f32 0.0, %v2963
  %2965 = vdwg.mxu0
  %2966 = vmatprep.subr.bf16.mxu0 %v2792
  %2967 = vmatpush1.bf16.msra.mxu0 %v2791
  %2968 = vmatprep.subr.bf16.mxu0 %v2796
  %2969 = vmatpush1.bf16.msra.mxu0 %v2795
  %2970 = vmatprep.subr.bf16.mxu0 %v2800
  %2971 = vmatpush1.bf16.msra.mxu0 %v2799
  %2972 = vmatprep.subr.bf16.mxu0 %v2804
  %2973 = vmatpush1.bf16.msra.mxu0 %v2803
  %2974 = vmatprep.subr.bf16.mxu0 %v2808
  %2975 = vmatpush1.bf16.msra.mxu0 %v2807
  %2976 = vmatprep.subr.bf16.mxu0 %v2812
  %2977 = vmatpush1.bf16.msra.mxu0 %v2811
  %2978 = vmatprep.subr.bf16.mxu0 %v2816
  %2979 = vmatpush1.bf16.msra.mxu0 %v2815
  %2980 = vmatprep.subr.bf16.mxu0 %v2820
  %2981 = vmatpush1.bf16.msra.mxu0 %v2819
  %2982 = vmatprep.subr.bf16.mxu0 0
  %2983 = vmatpush1.bf16.msra.mxu0 0
  %2984 = vmatprep.subr.bf16.mxu0 0
  %2985 = vmatpush1.bf16.msra.mxu0 0
  %2986 = vmatprep.subr.bf16.mxu0 0
  %2987 = vmatpush1.bf16.msra.mxu0 0
  %2988 = vmatprep.subr.bf16.mxu0 0
  %2989 = vmatpush1.bf16.msra.mxu0 0
  %2990 = vmatprep.subr.bf16.mxu0 0
  %2991 = vmatpush1.bf16.msra.mxu0 0
  %2992 = vmatprep.subr.bf16.mxu0 0
  %2993 = vmatpush1.bf16.msra.mxu0 0
  %2994 = vmatprep.subr.bf16.mxu0 0
  %2995 = vmatpush1.bf16.msra.mxu0 0
  %2996 = vmatprep.subr.bf16.mxu0 0
  %2997 = vmatpush1.bf16.msra.mxu0 0
  %2998 = vmatprep.mubr.bf16.mxu0 0
  %2999 = vmatmul.mubr.bf16.gmra.mrb[0].mxu0 %v2652
  %v3000 = vpop.f32.mrb[0].mxu0
  %v3001 = vadd.f32 0.0, %v3000
  %v3002 = vpop.f32.mrb[0].mxu0
  %v3003 = vadd.f32 0.0, %v3002
  %v3004 = vpop.f32.mrb[0].mxu0
  %v3005 = vadd.f32 0.0, %v3004
  %v3006 = vpop.f32.mrb[0].mxu0
  %v3007 = vadd.f32 0.0, %v3006
  %3008 = vmatprep.mubr.bf16.mxu0 0
  %3009 = vmatmul.mubr.bf16.gmra.mrb[0].mxu0 %v2653
  %v3010 = vpop.f32.mrb[0].mxu0
  %v3011 = vadd.f32 0.0, %v3010
  %v3012 = vpop.f32.mrb[0].mxu0
  %v3013 = vadd.f32 0.0, %v3012
  %v3014 = vpop.f32.mrb[0].mxu0
  %v3015 = vadd.f32 0.0, %v3014
  %v3016 = vpop.f32.mrb[0].mxu0
  %v3017 = vadd.f32 0.0, %v3016
  %3018 = vmatprep.mubr.bf16.mxu0 0
  %3019 = vmatmul.mubr.bf16.gmra.mrb[0].mxu0 %v2654
  %v3020 = vpop.f32.mrb[0].mxu0
  %v3021 = vadd.f32 0.0, %v3020
  %v3022 = vpop.f32.mrb[0].mxu0
  %v3023 = vadd.f32 0.0, %v3022
  %v3024 = vpop.f32.mrb[0].mxu0
  %v3025 = vadd.f32 0.0, %v3024
  %v3026 = vpop.f32.mrb[0].mxu0
  %v3027 = vadd.f32 0.0, %v3026
  %3028 = vmatprep.mubr.bf16.mxu0 0
  %3029 = vmatmul.mubr.bf16.gmra.mrb[0].mxu0 %v2655
  %v3030 = vpop.f32.mrb[0].mxu0
  %v3031 = vadd.f32 0.0, %v3030
  %v3032 = vpop.f32.mrb[0].mxu0
  %v3033 = vadd.f32 0.0, %v3032
  %v3034 = vpop.f32.mrb[0].mxu0
  %v3035 = vadd.f32 0.0, %v3034
  %v3036 = vpop.f32.mrb[0].mxu0
  %v3037 = vadd.f32 0.0, %v3036
  %3038 = vmatprep.mubr.bf16.mxu0 0
  %3039 = vmatmul.mubr.bf16.gmra.mrb[0].mxu0 %v2656
  %v3040 = vpop.f32.mrb[0].mxu0
  %v3041 = vadd.f32 0.0, %v3040
  %v3042 = vpop.f32.mrb[0].mxu0
  %v3043 = vadd.f32 0.0, %v3042
  %v3044 = vpop.f32.mrb[0].mxu0
  %v3045 = vadd.f32 0.0, %v3044
  %v3046 = vpop.f32.mrb[0].mxu0
  %v3047 = vadd.f32 0.0, %v3046
  %3048 = vmatprep.mubr.bf16.mxu0 0
  %3049 = vmatmul.mubr.bf16.gmra.mrb[0].mxu0 %v2657
  %v3050 = vpop.f32.mrb[0].mxu0
  %v3051 = vadd.f32 0.0, %v3050
  %v3052 = vpop.f32.mrb[0].mxu0
  %v3053 = vadd.f32 0.0, %v3052
  %v3054 = vpop.f32.mrb[0].mxu0
  %v3055 = vadd.f32 0.0, %v3054
  %v3056 = vpop.f32.mrb[0].mxu0
  %v3057 = vadd.f32 0.0, %v3056
  %3058 = vmatprep.mubr.bf16.mxu0 0
  %3059 = vmatmul.mubr.bf16.gmra.mrb[0].mxu0 %v2658
  %v3060 = vpop.f32.mrb[0].mxu0
  %v3061 = vadd.f32 0.0, %v3060
  %v3062 = vpop.f32.mrb[0].mxu0
  %v3063 = vadd.f32 0.0, %v3062
  %v3064 = vpop.f32.mrb[0].mxu0
  %v3065 = vadd.f32 0.0, %v3064
  %v3066 = vpop.f32.mrb[0].mxu0
  %v3067 = vadd.f32 0.0, %v3066
  %3068 = vmatprep.mubr.bf16.mxu0 0
  %3069 = vmatmul.mubr.bf16.gmra.mrb[0].mxu0 %v2659
  %v3070 = vpop.f32.mrb[0].mxu0
  %v3071 = vadd.f32 0.0, %v3070
  %v3072 = vpop.f32.mrb[0].mxu0
  %v3073 = vadd.f32 0.0, %v3072
  %v3074 = vpop.f32.mrb[0].mxu0
  %v3075 = vadd.f32 0.0, %v3074
  %v3076 = vpop.f32.mrb[0].mxu0
  %v3077 = vadd.f32 0.0, %v3076
  %3078 = vdwg.mxu0
  %v3079 = vpack.c.bf16 %v2894, %v2890
  %v3080 = vpack.c.bf16 %v3005, %v3001
  %v3081 = vpack.c.bf16 %v3007, %v3003
  %v3082 = vpack.c.bf16 %v2904, %v2900
  %v3083 = vpack.c.bf16 %v3015, %v3011
  %v3084 = vpack.c.bf16 %v3017, %v3013
  %v3085 = vpack.c.bf16 %v2914, %v2910
  %v3086 = vpack.c.bf16 %v3025, %v3021
  %v3087 = vpack.c.bf16 %v3027, %v3023
  %v3088 = vpack.c.bf16 %v2924, %v2920
  %v3089 = vpack.c.bf16 %v3035, %v3031
  %v3090 = vpack.c.bf16 %v3037, %v3033
  %v3091 = vpack.c.bf16 %v2934, %v2930
  %v3092 = vpack.c.bf16 %v3045, %v3041
  %v3093 = vpack.c.bf16 %v3047, %v3043
  %v3094 = vpack.c.bf16 %v2944, %v2940
  %v3095 = vpack.c.bf16 %v3055, %v3051
  %v3096 = vpack.c.bf16 %v3057, %v3053
  %v3097 = vpack.c.bf16 %v2954, %v2950
  %v3098 = vpack.c.bf16 %v3065, %v3061
  %v3099 = vpack.c.bf16 %v3067, %v3063
  %v3100 = vpack.c.bf16 %v2964, %v2960
  %v3101 = vpack.c.bf16 %v3075, %v3071
  %v3102 = vpack.c.bf16 %v3077, %v3073
  %v3103 = vld [vmem:[%s0] sm:$0xf]
  %v3104 = vld [vmem:[%s0 + $0x4] sm:$0xf]
  %v3105 = vld [vmem:[%s0 + $0x8] sm:$0xf]
  %v3106 = vld [vmem:[%s0 + $0xc] sm:$0xf]
  %v3107 = vld [vmem:[%s0 + $0x10] sm:$0xf]
  %v3108 = vld [vmem:[%s0 + $0x14] sm:$0xf]
  %v3109 = vld [vmem:[%s0 + $0x18] sm:$0xf]
  %v3110 = vld [vmem:[%s0 + $0x1c] sm:$0xf]
  %v3111 = vld [vmem:[%s0 + $0x20] sm:$0xf]
  %v3112 = vld [vmem:[%s0 + $0x24] sm:$0xf]
  %v3113 = vld [vmem:[%s0 + $0x28] sm:$0xf]
  %v3114 = vld [vmem:[%s0 + $0x2c] sm:$0xf]
  %v3115 = vld [vmem:[%s0 + $0x30] sm:$0xf]
  %v3116 = vld [vmem:[%s0 + $0x34] sm:$0xf]
  %v3117 = vld [vmem:[%s0 + $0x38] sm:$0xf]
  %v3118 = vld [vmem:[%s0 + $0x3c] sm:$0xf]
  %v3135 = vunpack.c.l.b16 %v3103
  %v3136 = vunpack.c.l.b16 %v3104
  %v3137 = vunpack.c.l.b16 %v3105
  %v3138 = vunpack.c.l.b16 %v3106
  %v3139 = vunpack.c.l.b16 %v3107
  %v3140 = vunpack.c.l.b16 %v3108
  %v3141 = vunpack.c.l.b16 %v3109
  %v3142 = vunpack.c.l.b16 %v3110
  %v3143 = vunpack.c.l.b16 %v3111
  %v3144 = vunpack.c.l.b16 %v3112
  %v3145 = vunpack.c.l.b16 %v3113
  %v3146 = vunpack.c.l.b16 %v3114
  %v3147 = vunpack.c.l.b16 %v3115
  %v3148 = vunpack.c.l.b16 %v3116
  %v3149 = vunpack.c.l.b16 %v3117
  %v3150 = vunpack.c.l.b16 %v3118
  %v3151 = vpack.c.b16 %v3136, %v3135
  %v3152 = vpack.c.b16 %v3138, %v3137
  %v3153 = vpack.c.b16 %v3140, %v3139
  %v3154 = vpack.c.b16 %v3142, %v3141
  %v3155 = vpack.c.b16 %v3144, %v3143
  %v3156 = vpack.c.b16 %v3146, %v3145
  %v3157 = vpack.c.b16 %v3148, %v3147
  %v3158 = vpack.c.b16 %v3150, %v3149
  %3167 = vmatprep.subr.bf16.mxu0 0
  %3168 = vmatpush1.bf16.msra.mxu0 %v3079
  %3169 = vmatprep.subr.bf16.mxu0 0
  %3170 = vmatpush1.bf16.msra.mxu0 %v3082
  %3171 = vmatprep.subr.bf16.mxu0 0
  %3172 = vmatpush1.bf16.msra.mxu0 %v3085
  %3173 = vmatprep.subr.bf16.mxu0 0
  %3174 = vmatpush1.bf16.msra.mxu0 %v3088
  %3175 = vmatprep.subr.bf16.mxu0 0
  %3176 = vmatpush1.bf16.msra.mxu0 %v3091
  %3177 = vmatprep.subr.bf16.mxu0 0
  %3178 = vmatpush1.bf16.msra.mxu0 %v3094
  %3179 = vmatprep.subr.bf16.mxu0 0
  %3180 = vmatpush1.bf16.msra.mxu0 %v3097
  %3181 = vmatprep.subr.bf16.mxu0 0
  %3182 = vmatpush1.bf16.msra.mxu0 %v3100
  %3183 = vmatprep.subr.bf16.mxu0 0
  %3184 = vmatpush1.bf16.msra.mxu0 0
  %3185 = vmatprep.subr.bf16.mxu0 0
  %3186 = vmatpush1.bf16.msra.mxu0 0
  %3187 = vmatprep.subr.bf16.mxu0 0
  %3188 = vmatpush1.bf16.msra.mxu0 0
  %3189 = vmatprep.subr.bf16.mxu0 0
  %3190 = vmatpush1.bf16.msra.mxu0 0
  %3191 = vmatprep.subr.bf16.mxu0 0
  %3192 = vmatpush1.bf16.msra.mxu0 0
  %3193 = vmatprep.subr.bf16.mxu0 0
  %3194 = vmatpush1.bf16.msra.mxu0 0
  %3195 = vmatprep.subr.bf16.mxu0 0
  %3196 = vmatpush1.bf16.msra.mxu0 0
  %3197 = vmatprep.subr.bf16.mxu0 0
  %3198 = vmatpush1.bf16.msra.mxu0 0
  %3199 = vmatprep.mubr.bf16.mxu0 0
  %3200 = vmatmul.mubr.bf16.gmra.mrb[0].mxu0 %v3151
  %v3201 = vpop.f32.mrb[0].mxu0
  %v3202 = vadd.f32 0.0, %v3201
  %v3203 = vpop.f32.mrb[0].mxu0
  %v3204 = vpop.f32.mrb[0].mxu0
  %v3205 = vadd.f32 0.0, %v3204
  %v3206 = vpop.f32.mrb[0].mxu0
  %3207 = vmatprep.mubr.bf16.mxu0 0
  %3208 = vmatmul.mubr.bf16.gmra.mrb[0].mxu0 %v3152
  %v3209 = vpop.f32.mrb[0].mxu0
  %v3210 = vadd.f32 0.0, %v3209
  %v3211 = vpop.f32.mrb[0].mxu0
  %v3212 = vpop.f32.mrb[0].mxu0
  %v3213 = vadd.f32 0.0, %v3212
  %v3214 = vpop.f32.mrb[0].mxu0
  %3215 = vmatprep.mubr.bf16.mxu0 0
  %3216 = vmatmul.mubr.bf16.gmra.mrb[0].mxu0 %v3153
  %v3217 = vpop.f32.mrb[0].mxu0
  %v3218 = vadd.f32 0.0, %v3217
  %v3219 = vpop.f32.mrb[0].mxu0
  %v3220 = vpop.f32.mrb[0].mxu0
  %v3221 = vadd.f32 0.0, %v3220
  %v3222 = vpop.f32.mrb[0].mxu0
  %3223 = vmatprep.mubr.bf16.mxu0 0
  %3224 = vmatmul.mubr.bf16.gmra.mrb[0].mxu0 %v3154
  %v3225 = vpop.f32.mrb[0].mxu0
  %v3226 = vadd.f32 0.0, %v3225
  %v3227 = vpop.f32.mrb[0].mxu0
  %v3228 = vpop.f32.mrb[0].mxu0
  %v3229 = vadd.f32 0.0, %v3228
  %v3230 = vpop.f32.mrb[0].mxu0
  %3231 = vmatprep.mubr.bf16.mxu0 0
  %3232 = vmatmul.mubr.bf16.gmra.mrb[0].mxu0 %v3155
  %v3233 = vpop.f32.mrb[0].mxu0
  %v3234 = vadd.f32 0.0, %v3233
  %v3235 = vpop.f32.mrb[0].mxu0
  %v3236 = vpop.f32.mrb[0].mxu0
  %v3237 = vadd.f32 0.0, %v3236
  %v3238 = vpop.f32.mrb[0].mxu0
  %3239 = vmatprep.mubr.bf16.mxu0 0
  %3240 = vmatmul.mubr.bf16.gmra.mrb[0].mxu0 %v3156
  %v3241 = vpop.f32.mrb[0].mxu0
  %v3242 = vadd.f32 0.0, %v3241
  %v3243 = vpop.f32.mrb[0].mxu0
  %v3244 = vpop.f32.mrb[0].mxu0
  %v3245 = vadd.f32 0.0, %v3244
  %v3246 = vpop.f32.mrb[0].mxu0
  %3247 = vmatprep.mubr.bf16.mxu0 0
  %3248 = vmatmul.mubr.bf16.gmra.mrb[0].mxu0 %v3157
  %v3249 = vpop.f32.mrb[0].mxu0
  %v3250 = vadd.f32 0.0, %v3249
  %v3251 = vpop.f32.mrb[0].mxu0
  %v3252 = vpop.f32.mrb[0].mxu0
  %v3253 = vadd.f32 0.0, %v3252
  %v3254 = vpop.f32.mrb[0].mxu0
  %3255 = vmatprep.mubr.bf16.mxu0 0
  %3256 = vmatmul.mubr.bf16.gmra.mrb[0].mxu0 %v3158
  %v3257 = vpop.f32.mrb[0].mxu0
  %v3258 = vadd.f32 0.0, %v3257
  %v3259 = vpop.f32.mrb[0].mxu0
  %v3260 = vpop.f32.mrb[0].mxu0
  %v3261 = vadd.f32 0.0, %v3260
  %v3262 = vpop.f32.mrb[0].mxu0
  %3263 = vdwg.mxu0
  %v3264 = vadd.f32 %v2888, %v3202
  %v3265 = vadd.f32 %v2892, %v3205
  %v3266 = vadd.f32 %v2898, %v3210
  %v3267 = vadd.f32 %v2902, %v3213
  %v3268 = vadd.f32 %v2908, %v3218
  %v3269 = vadd.f32 %v2912, %v3221
  %v3270 = vadd.f32 %v2918, %v3226
  %v3271 = vadd.f32 %v2922, %v3229
  %v3272 = vadd.f32 %v2928, %v3234
  %v3273 = vadd.f32 %v2932, %v3237
  %v3274 = vadd.f32 %v2938, %v3242
  %v3275 = vadd.f32 %v2942, %v3245
  %v3276 = vadd.f32 %v2948, %v3250
  %v3277 = vadd.f32 %v2952, %v3253
  %v3278 = vadd.f32 %v2958, %v3258
  %v3279 = vadd.f32 %v2962, %v3261
  %v3280 = vld [vmem:[%s702] sm:$0xf]
  %v3281 = vld [vmem:[%s702 + $0x4] sm:$0xf]
  %v3282 = vld [vmem:[%s702 + $0x8] sm:$0xf]
  %v3283 = vld [vmem:[%s702 + $0xc] sm:$0xf]
  %v3284 = vld [vmem:[%s702 + $0x10] sm:$0xf]
  %v3285 = vld [vmem:[%s702 + $0x14] sm:$0xf]
  %v3286 = vld [vmem:[%s702 + $0x18] sm:$0xf]
  %v3287 = vld [vmem:[%s702 + $0x1c] sm:$0xf]
  %v3288 = vld [vmem:[%s702 + $0x20] sm:$0xf]
  %v3289 = vld [vmem:[%s702 + $0x24] sm:$0xf]
  %v3290 = vld [vmem:[%s702 + $0x28] sm:$0xf]
  %v3291 = vld [vmem:[%s702 + $0x2c] sm:$0xf]
  %v3292 = vld [vmem:[%s702 + $0x30] sm:$0xf]
  %v3293 = vld [vmem:[%s702 + $0x34] sm:$0xf]
  %v3294 = vld [vmem:[%s702 + $0x38] sm:$0xf]
  %v3295 = vld [vmem:[%s702 + $0x3c] sm:$0xf]
  %v3312 = vunpack.c.l.b16 %v3280
  %v3313 = vunpack.c.l.b16 %v3281
  %v3314 = vunpack.c.l.b16 %v3282
  %v3315 = vunpack.c.l.b16 %v3283
  %v3316 = vunpack.c.l.b16 %v3284
  %v3317 = vunpack.c.l.b16 %v3285
  %v3318 = vunpack.c.l.b16 %v3286
  %v3319 = vunpack.c.l.b16 %v3287
  %v3320 = vunpack.c.l.b16 %v3288
  %v3321 = vunpack.c.l.b16 %v3289
  %v3322 = vunpack.c.l.b16 %v3290
  %v3323 = vunpack.c.l.b16 %v3291
  %v3324 = vunpack.c.l.b16 %v3292
  %v3325 = vunpack.c.l.b16 %v3293
  %v3326 = vunpack.c.l.b16 %v3294
  %v3327 = vunpack.c.l.b16 %v3295
  %v3328 = vpack.c.b16 %v3313, %v3312
  %v3329 = vpack.c.b16 %v3315, %v3314
  %v3330 = vpack.c.b16 %v3317, %v3316
  %v3331 = vpack.c.b16 %v3319, %v3318
  %v3332 = vpack.c.b16 %v3321, %v3320
  %v3333 = vpack.c.b16 %v3323, %v3322
  %v3334 = vpack.c.b16 %v3325, %v3324
  %v3335 = vpack.c.b16 %v3327, %v3326
  %3344 = vmatprep.subr.bf16.mxu0 0
  %3345 = vmatpush1.bf16.msra.mxu0 %v3080
  %3346 = vmatprep.subr.bf16.mxu0 0
  %3347 = vmatpush1.bf16.msra.mxu0 %v3083
  %3348 = vmatprep.subr.bf16.mxu0 0
  %3349 = vmatpush1.bf16.msra.mxu0 %v3086
  %3350 = vmatprep.subr.bf16.mxu0 0
  %3351 = vmatpush1.bf16.msra.mxu0 %v3089
  %3352 = vmatprep.subr.bf16.mxu0 0
  %3353 = vmatpush1.bf16.msra.mxu0 %v3092
  %3354 = vmatprep.subr.bf16.mxu0 0
  %3355 = vmatpush1.bf16.msra.mxu0 %v3095
  %3356 = vmatprep.subr.bf16.mxu0 0
  %3357 = vmatpush1.bf16.msra.mxu0 %v3098
  %3358 = vmatprep.subr.bf16.mxu0 0
  %3359 = vmatpush1.bf16.msra.mxu0 %v3101
  %3360 = vmatprep.subr.bf16.mxu0 0
  %3361 = vmatpush1.bf16.msra.mxu0 0
  %3362 = vmatprep.subr.bf16.mxu0 0
  %3363 = vmatpush1.bf16.msra.mxu0 0
  %3364 = vmatprep.subr.bf16.mxu0 0
  %3365 = vmatpush1.bf16.msra.mxu0 0
  %3366 = vmatprep.subr.bf16.mxu0 0
  %3367 = vmatpush1.bf16.msra.mxu0 0
  %3368 = vmatprep.subr.bf16.mxu0 0
  %3369 = vmatpush1.bf16.msra.mxu0 0
  %3370 = vmatprep.subr.bf16.mxu0 0
  %3371 = vmatpush1.bf16.msra.mxu0 0
  %3372 = vmatprep.subr.bf16.mxu0 0
  %3373 = vmatpush1.bf16.msra.mxu0 0
  %3374 = vmatprep.subr.bf16.mxu0 0
  %3375 = vmatpush1.bf16.msra.mxu0 0
  %3376 = vmatprep.mubr.bf16.mxu0 0
  %3377 = vmatmul.mubr.bf16.gmra.mrb[0].mxu0 %v3328
  %v3378 = vpop.f32.mrb[0].mxu0
  %v3379 = vadd.f32 0.0, %v3378
  %v3380 = vpop.f32.mrb[0].mxu0
  %v3381 = vpop.f32.mrb[0].mxu0
  %v3382 = vadd.f32 0.0, %v3381
  %v3383 = vpop.f32.mrb[0].mxu0
  %3384 = vmatprep.mubr.bf16.mxu0 0
  %3385 = vmatmul.mubr.bf16.gmra.mrb[0].mxu0 %v3329
  %v3386 = vpop.f32.mrb[0].mxu0
  %v3387 = vadd.f32 0.0, %v3386
  %v3388 = vpop.f32.mrb[0].mxu0
  %v3389 = vpop.f32.mrb[0].mxu0
  %v3390 = vadd.f32 0.0, %v3389
  %v3391 = vpop.f32.mrb[0].mxu0
  %3392 = vmatprep.mubr.bf16.mxu0 0
  %3393 = vmatmul.mubr.bf16.gmra.mrb[0].mxu0 %v3330
  %v3394 = vpop.f32.mrb[0].mxu0
  %v3395 = vadd.f32 0.0, %v3394
  %v3396 = vpop.f32.mrb[0].mxu0
  %v3397 = vpop.f32.mrb[0].mxu0
  %v3398 = vadd.f32 0.0, %v3397
  %v3399 = vpop.f32.mrb[0].mxu0
  %3400 = vmatprep.mubr.bf16.mxu0 0
  %3401 = vmatmul.mubr.bf16.gmra.mrb[0].mxu0 %v3331
  %v3402 = vpop.f32.mrb[0].mxu0
  %v3403 = vadd.f32 0.0, %v3402
  %v3404 = vpop.f32.mrb[0].mxu0
  %v3405 = vpop.f32.mrb[0].mxu0
  %v3406 = vadd.f32 0.0, %v3405
  %v3407 = vpop.f32.mrb[0].mxu0
  %3408 = vmatprep.mubr.bf16.mxu0 0
  %3409 = vmatmul.mubr.bf16.gmra.mrb[0].mxu0 %v3332
  %v3410 = vpop.f32.mrb[0].mxu0
  %v3411 = vadd.f32 0.0, %v3410
  %v3412 = vpop.f32.mrb[0].mxu0
  %v3413 = vpop.f32.mrb[0].mxu0
  %v3414 = vadd.f32 0.0, %v3413
  %v3415 = vpop.f32.mrb[0].mxu0
  %3416 = vmatprep.mubr.bf16.mxu0 0
  %3417 = vmatmul.mubr.bf16.gmra.mrb[0].mxu0 %v3333
  %v3418 = vpop.f32.mrb[0].mxu0
  %v3419 = vadd.f32 0.0, %v3418
  %v3420 = vpop.f32.mrb[0].mxu0
  %v3421 = vpop.f32.mrb[0].mxu0
  %v3422 = vadd.f32 0.0, %v3421
  %v3423 = vpop.f32.mrb[0].mxu0
  %3424 = vmatprep.mubr.bf16.mxu0 0
  %3425 = vmatmul.mubr.bf16.gmra.mrb[0].mxu0 %v3334
  %v3426 = vpop.f32.mrb[0].mxu0
  %v3427 = vadd.f32 0.0, %v3426
  %v3428 = vpop.f32.mrb[0].mxu0
  %v3429 = vpop.f32.mrb[0].mxu0
  %v3430 = vadd.f32 0.0, %v3429
  %v3431 = vpop.f32.mrb[0].mxu0
  %3432 = vmatprep.mubr.bf16.mxu0 0
  %3433 = vmatmul.mubr.bf16.gmra.mrb[0].mxu0 %v3335
  %v3434 = vpop.f32.mrb[0].mxu0
  %v3435 = vadd.f32 0.0, %v3434
  %v3436 = vpop.f32.mrb[0].mxu0
  %v3437 = vpop.f32.mrb[0].mxu0
  %v3438 = vadd.f32 0.0, %v3437
  %v3439 = vpop.f32.mrb[0].mxu0
  %3440 = vdwg.mxu0
  %v3441 = vadd.f32 %v3264, %v3379
  %v3442 = vadd.f32 %v3265, %v3382
  %v3443 = vadd.f32 %v3266, %v3387
  %v3444 = vadd.f32 %v3267, %v3390
  %v3445 = vadd.f32 %v3268, %v3395
  %v3446 = vadd.f32 %v3269, %v3398
  %v3447 = vadd.f32 %v3270, %v3403
  %v3448 = vadd.f32 %v3271, %v3406
  %v3449 = vadd.f32 %v3272, %v3411
  %v3450 = vadd.f32 %v3273, %v3414
  %v3451 = vadd.f32 %v3274, %v3419
  %v3452 = vadd.f32 %v3275, %v3422
  %v3453 = vadd.f32 %v3276, %v3427
  %v3454 = vadd.f32 %v3277, %v3430
  %v3455 = vadd.f32 %v3278, %v3435
  %v3456 = vadd.f32 %v3279, %v3438
  %v3457 = vld [vmem:[%s880] sm:$0xf]
  %v3458 = vld [vmem:[%s880 + $0x4] sm:$0xf]
  %v3459 = vld [vmem:[%s880 + $0x8] sm:$0xf]
  %v3460 = vld [vmem:[%s880 + $0xc] sm:$0xf]
  %v3461 = vld [vmem:[%s880 + $0x10] sm:$0xf]
  %v3462 = vld [vmem:[%s880 + $0x14] sm:$0xf]
  %v3463 = vld [vmem:[%s880 + $0x18] sm:$0xf]
  %v3464 = vld [vmem:[%s880 + $0x1c] sm:$0xf]
  %v3465 = vld [vmem:[%s880 + $0x20] sm:$0xf]
  %v3466 = vld [vmem:[%s880 + $0x24] sm:$0xf]
  %v3467 = vld [vmem:[%s880 + $0x28] sm:$0xf]
  %v3468 = vld [vmem:[%s880 + $0x2c] sm:$0xf]
  %v3469 = vld [vmem:[%s880 + $0x30] sm:$0xf]
  %v3470 = vld [vmem:[%s880 + $0x34] sm:$0xf]
  %v3471 = vld [vmem:[%s880 + $0x38] sm:$0xf]
  %v3472 = vld [vmem:[%s880 + $0x3c] sm:$0xf]
  %v3489 = vunpack.c.l.b16 %v3457
  %v3490 = vunpack.c.l.b16 %v3458
  %v3491 = vunpack.c.l.b16 %v3459
  %v3492 = vunpack.c.l.b16 %v3460
  %v3493 = vunpack.c.l.b16 %v3461
  %v3494 = vunpack.c.l.b16 %v3462
  %v3495 = vunpack.c.l.b16 %v3463
  %v3496 = vunpack.c.l.b16 %v3464
  %v3497 = vunpack.c.l.b16 %v3465
  %v3498 = vunpack.c.l.b16 %v3466
  %v3499 = vunpack.c.l.b16 %v3467
  %v3500 = vunpack.c.l.b16 %v3468
  %v3501 = vunpack.c.l.b16 %v3469
  %v3502 = vunpack.c.l.b16 %v3470
  %v3503 = vunpack.c.l.b16 %v3471
  %v3504 = vunpack.c.l.b16 %v3472
  %v3505 = vpack.c.b16 %v3490, %v3489
  %v3506 = vpack.c.b16 %v3492, %v3491
  %v3507 = vpack.c.b16 %v3494, %v3493
  %v3508 = vpack.c.b16 %v3496, %v3495
  %v3509 = vpack.c.b16 %v3498, %v3497
  %v3510 = vpack.c.b16 %v3500, %v3499
  %v3511 = vpack.c.b16 %v3502, %v3501
  %v3512 = vpack.c.b16 %v3504, %v3503
  %3521 = vmatprep.subr.bf16.mxu0 0
  %3522 = vmatpush1.bf16.msra.mxu0 %v3081
  %3523 = vmatprep.subr.bf16.mxu0 0
  %3524 = vmatpush1.bf16.msra.mxu0 %v3084
  %3525 = vmatprep.subr.bf16.mxu0 0
  %3526 = vmatpush1.bf16.msra.mxu0 %v3087
  %3527 = vmatprep.subr.bf16.mxu0 0
  %3528 = vmatpush1.bf16.msra.mxu0 %v3090
  %3529 = vmatprep.subr.bf16.mxu0 0
  %3530 = vmatpush1.bf16.msra.mxu0 %v3093
  %3531 = vmatprep.subr.bf16.mxu0 0
  %3532 = vmatpush1.bf16.msra.mxu0 %v3096
  %3533 = vmatprep.subr.bf16.mxu0 0
  %3534 = vmatpush1.bf16.msra.mxu0 %v3099
  %3535 = vmatprep.subr.bf16.mxu0 0
  %3536 = vmatpush1.bf16.msra.mxu0 %v3102
  %3537 = vmatprep.subr.bf16.mxu0 0
  %3538 = vmatpush1.bf16.msra.mxu0 0
  %3539 = vmatprep.subr.bf16.mxu0 0
  %3540 = vmatpush1.bf16.msra.mxu0 0
  %3541 = vmatprep.subr.bf16.mxu0 0
  %3542 = vmatpush1.bf16.msra.mxu0 0
  %3543 = vmatprep.subr.bf16.mxu0 0
  %3544 = vmatpush1.bf16.msra.mxu0 0
  %3545 = vmatprep.subr.bf16.mxu0 0
  %3546 = vmatpush1.bf16.msra.mxu0 0
  %3547 = vmatprep.subr.bf16.mxu0 0
  %3548 = vmatpush1.bf16.msra.mxu0 0
  %3549 = vmatprep.subr.bf16.mxu0 0
  %3550 = vmatpush1.bf16.msra.mxu0 0
  %3551 = vmatprep.subr.bf16.mxu0 0
  %3552 = vmatpush1.bf16.msra.mxu0 0
  %3553 = vmatprep.mubr.bf16.mxu0 0
  %3554 = vmatmul.mubr.bf16.gmra.mrb[0].mxu0 %v3505
  %v3555 = vpop.f32.mrb[0].mxu0
  %v3556 = vadd.f32 0.0, %v3555
  %v3557 = vpop.f32.mrb[0].mxu0
  %v3558 = vpop.f32.mrb[0].mxu0
  %v3559 = vadd.f32 0.0, %v3558
  %v3560 = vpop.f32.mrb[0].mxu0
  %3561 = vmatprep.mubr.bf16.mxu0 0
  %3562 = vmatmul.mubr.bf16.gmra.mrb[0].mxu0 %v3506
  %v3563 = vpop.f32.mrb[0].mxu0
  %v3564 = vadd.f32 0.0, %v3563
  %v3565 = vpop.f32.mrb[0].mxu0
  %v3566 = vpop.f32.mrb[0].mxu0
  %v3567 = vadd.f32 0.0, %v3566
  %v3568 = vpop.f32.mrb[0].mxu0
  %3569 = vmatprep.mubr.bf16.mxu0 0
  %3570 = vmatmul.mubr.bf16.gmra.mrb[0].mxu0 %v3507
  %v3571 = vpop.f32.mrb[0].mxu0
  %v3572 = vadd.f32 0.0, %v3571
  %v3573 = vpop.f32.mrb[0].mxu0
  %v3574 = vpop.f32.mrb[0].mxu0
  %v3575 = vadd.f32 0.0, %v3574
  %v3576 = vpop.f32.mrb[0].mxu0
  %3577 = vmatprep.mubr.bf16.mxu0 0
  %3578 = vmatmul.mubr.bf16.gmra.mrb[0].mxu0 %v3508
  %v3579 = vpop.f32.mrb[0].mxu0
  %v3580 = vadd.f32 0.0, %v3579
  %v3581 = vpop.f32.mrb[0].mxu0
  %v3582 = vpop.f32.mrb[0].mxu0
  %v3583 = vadd.f32 0.0, %v3582
  %v3584 = vpop.f32.mrb[0].mxu0
  %3585 = vmatprep.mubr.bf16.mxu0 0
  %3586 = vmatmul.mubr.bf16.gmra.mrb[0].mxu0 %v3509
  %v3587 = vpop.f32.mrb[0].mxu0
  %v3588 = vadd.f32 0.0, %v3587
  %v3589 = vpop.f32.mrb[0].mxu0
  %v3590 = vpop.f32.mrb[0].mxu0
  %v3591 = vadd.f32 0.0, %v3590
  %v3592 = vpop.f32.mrb[0].mxu0
  %3593 = vmatprep.mubr.bf16.mxu0 0
  %3594 = vmatmul.mubr.bf16.gmra.mrb[0].mxu0 %v3510
  %v3595 = vpop.f32.mrb[0].mxu0
  %v3596 = vadd.f32 0.0, %v3595
  %v3597 = vpop.f32.mrb[0].mxu0
  %v3598 = vpop.f32.mrb[0].mxu0
  %v3599 = vadd.f32 0.0, %v3598
  %v3600 = vpop.f32.mrb[0].mxu0
  %3601 = vmatprep.mubr.bf16.mxu0 0
  %3602 = vmatmul.mubr.bf16.gmra.mrb[0].mxu0 %v3511
  %v3603 = vpop.f32.mrb[0].mxu0
  %v3604 = vadd.f32 0.0, %v3603
  %v3605 = vpop.f32.mrb[0].mxu0
  %v3606 = vpop.f32.mrb[0].mxu0
  %v3607 = vadd.f32 0.0, %v3606
  %v3608 = vpop.f32.mrb[0].mxu0
  %3609 = vmatprep.mubr.bf16.mxu0 0
  %3610 = vmatmul.mubr.bf16.gmra.mrb[0].mxu0 %v3512
  %v3611 = vpop.f32.mrb[0].mxu0
  %v3612 = vadd.f32 0.0, %v3611
  %v3613 = vpop.f32.mrb[0].mxu0
  %v3614 = vpop.f32.mrb[0].mxu0
  %v3615 = vadd.f32 0.0, %v3614
  %v3616 = vpop.f32.mrb[0].mxu0
  %3617 = vdwg.mxu0
  %v3618 = vadd.f32 %v3441, %v3556
  %v3619 = vadd.f32 %v3442, %v3559
  %v3620 = vadd.f32 %v3443, %v3564
  %v3621 = vadd.f32 %v3444, %v3567
  %v3622 = vadd.f32 %v3445, %v3572
  %v3623 = vadd.f32 %v3446, %v3575
  %v3624 = vadd.f32 %v3447, %v3580
  %v3625 = vadd.f32 %v3448, %v3583
  %v3626 = vadd.f32 %v3449, %v3588
  %v3627 = vadd.f32 %v3450, %v3591
  %v3628 = vadd.f32 %v3451, %v3596
  %v3629 = vadd.f32 %v3452, %v3599
  %v3630 = vadd.f32 %v3453, %v3604
  %v3631 = vadd.f32 %v3454, %v3607
  %v3632 = vadd.f32 %v3455, %v3612
  %v3633 = vadd.f32 %v3456, %v3615
  %s3634 = scalar_lea.vmem %s4, 2
  %v3635 = vld [vmem:[%s3634] sm:$0x1]
  %v3637 = vlaneseq
  %v3638 = vshrl.u32 %v3637, 7
  %v3639 = vsub.s32 0, %v3638
  %v3640 = vrot.slane %v3635, %v3639
  %v3642 = vadd.f32 %v3618, %v3640
  %v3643 = vadd.f32 %v3619, %v3640
  %v3644 = vadd.f32 %v3620, %v3640
  %v3645 = vadd.f32 %v3621, %v3640
  %v3646 = vadd.f32 %v3622, %v3640
  %v3647 = vadd.f32 %v3623, %v3640
  %v3648 = vadd.f32 %v3624, %v3640
  %v3649 = vadd.f32 %v3625, %v3640
  %v3650 = vadd.f32 %v3626, %v3640
  %v3651 = vadd.f32 %v3627, %v3640
  %v3652 = vadd.f32 %v3628, %v3640
  %v3653 = vadd.f32 %v3629, %v3640
  %v3654 = vadd.f32 %v3630, %v3640
  %v3655 = vadd.f32 %v3631, %v3640
  %v3656 = vadd.f32 %v3632, %v3640
  %v3657 = vadd.f32 %v3633, %v3640
  %v3658 = vld [vmem:[%s2] sm:$0xff]
  %v3659 = vld [vmem:[%s2 + $0x8] sm:$0xff]
  %v3660 = vld [vmem:[%s2 + $0x10] sm:$0xff]
  %v3661 = vld [vmem:[%s2 + $0x18] sm:$0xff]
  %v3662 = vld [vmem:[%s2 + $0x20] sm:$0xff]
  %v3663 = vld [vmem:[%s2 + $0x28] sm:$0xff]
  %v3664 = vld [vmem:[%s2 + $0x30] sm:$0xff]
  %v3665 = vld [vmem:[%s2 + $0x38] sm:$0xff]
  %v3666 = vld [vmem:[%s2 + $0x40] sm:$0xff]
  %v3667 = vld [vmem:[%s2 + $0x48] sm:$0xff]
  %v3668 = vld [vmem:[%s2 + $0x50] sm:$0xff]
  %v3669 = vld [vmem:[%s2 + $0x58] sm:$0xff]
  %v3670 = vld [vmem:[%s2 + $0x60] sm:$0xff]
  %v3671 = vld [vmem:[%s2 + $0x68] sm:$0xff]
  %v3672 = vld [vmem:[%s2 + $0x70] sm:$0xff]
  %v3673 = vld [vmem:[%s2 + $0x78] sm:$0xff]
  %3675 = vset.pattern.permute.xlu0 0
  %3676 = vperm.xlu0 %3675, %v3658
  %v3677 = vpop.permute.xlu0 %3676
  %3680 = vset.pattern.permute.xlu0 0
  %3681 = vperm.xlu0 %3680, %v3659
  %v3682 = vpop.permute.xlu0 %3681
  %3685 = vset.pattern.permute.xlu0 0
  %3686 = vperm.xlu0 %3685, %v3660
  %v3687 = vpop.permute.xlu0 %3686
  %3690 = vset.pattern.permute.xlu0 0
  %3691 = vperm.xlu0 %3690, %v3661
  %v3692 = vpop.permute.xlu0 %3691
  %3695 = vset.pattern.permute.xlu0 0
  %3696 = vperm.xlu0 %3695, %v3662
  %v3697 = vpop.permute.xlu0 %3696
  %3700 = vset.pattern.permute.xlu0 0
  %3701 = vperm.xlu0 %3700, %v3663
  %v3702 = vpop.permute.xlu0 %3701
  %3705 = vset.pattern.permute.xlu0 0
  %3706 = vperm.xlu0 %3705, %v3664
  %v3707 = vpop.permute.xlu0 %3706
  %3710 = vset.pattern.permute.xlu0 0
  %3711 = vperm.xlu0 %3710, %v3665
  %v3712 = vpop.permute.xlu0 %3711
  %3715 = vset.pattern.permute.xlu0 0
  %3716 = vperm.xlu0 %3715, %v3666
  %v3717 = vpop.permute.xlu0 %3716
  %3720 = vset.pattern.permute.xlu0 0
  %3721 = vperm.xlu0 %3720, %v3667
  %v3722 = vpop.permute.xlu0 %3721
  %3725 = vset.pattern.permute.xlu0 0
  %3726 = vperm.xlu0 %3725, %v3668
  %v3727 = vpop.permute.xlu0 %3726
  %3730 = vset.pattern.permute.xlu0 0
  %3731 = vperm.xlu0 %3730, %v3669
  %v3732 = vpop.permute.xlu0 %3731
  %3735 = vset.pattern.permute.xlu0 0
  %3736 = vperm.xlu0 %3735, %v3670
  %v3737 = vpop.permute.xlu0 %3736
  %3740 = vset.pattern.permute.xlu0 0
  %3741 = vperm.xlu0 %3740, %v3671
  %v3742 = vpop.permute.xlu0 %3741
  %3745 = vset.pattern.permute.xlu0 0
  %3746 = vperm.xlu0 %3745, %v3672
  %v3747 = vpop.permute.xlu0 %3746
  %3750 = vset.pattern.permute.xlu0 0
  %3751 = vperm.xlu0 %3750, %v3673
  %v3752 = vpop.permute.xlu0 %3751
  %v3754 = vmul.f32 %v3642, %v3677
  %v3755 = vmul.f32 %v3643, %v3682
  %v3756 = vmul.f32 %v3644, %v3687
  %v3757 = vmul.f32 %v3645, %v3692
  %v3758 = vmul.f32 %v3646, %v3697
  %v3759 = vmul.f32 %v3647, %v3702
  %v3760 = vmul.f32 %v3648, %v3707
  %v3761 = vmul.f32 %v3649, %v3712
  %v3762 = vmul.f32 %v3650, %v3717
  %v3763 = vmul.f32 %v3651, %v3722
  %v3764 = vmul.f32 %v3652, %v3727
  %v3765 = vmul.f32 %v3653, %v3732
  %v3766 = vmul.f32 %v3654, %v3737
  %v3767 = vmul.f32 %v3655, %v3742
  %v3768 = vmul.f32 %v3656, %v3747
  %v3769 = vmul.f32 %v3657, %v3752
  %v3770 = vadd.f32 %v3754, %v3755
  %v3771 = vadd.f32 %v3770, %v3756
  %v3772 = vadd.f32 %v3771, %v3757
  %v3773 = vadd.f32 %v3772, %v3758
  %v3774 = vadd.f32 %v3773, %v3759
  %v3775 = vadd.f32 %v3774, %v3760
  %v3776 = vadd.f32 %v3775, %v3761
  %v3777 = vadd.f32 %v3776, %v3762
  %v3778 = vadd.f32 %v3777, %v3763
  %v3779 = vadd.f32 %v3778, %v3764
  %v3780 = vadd.f32 %v3779, %v3765
  %v3781 = vadd.f32 %v3780, %v3766
  %v3782 = vadd.f32 %v3781, %v3767
  %v3783 = vadd.f32 %v3782, %v3768
  %v3784 = vadd.f32 %v3783, %v3769
  %v3785 = vrot.slane %v3784, 4
  %v3786 = vadd.f32 %v3784, %v3785
  %v3787 = vrot.slane %v3786, 2
  %v3788 = vadd.f32 %v3786, %v3787
  %v3789 = vrot.slane %v3788, 1
  %v3790 = vadd.f32 %v3788, %v3789
  %v3791 = vmul.f32 %v3790, %v1214
  %v3792 = vmul.f32 %v3754, %v3754
  %v3793 = vmul.f32 %v3755, %v3755
  %v3794 = vmul.f32 %v3756, %v3756
  %v3795 = vmul.f32 %v3757, %v3757
  %v3796 = vmul.f32 %v3758, %v3758
  %v3797 = vmul.f32 %v3759, %v3759
  %v3798 = vmul.f32 %v3760, %v3760
  %v3799 = vmul.f32 %v3761, %v3761
  %v3800 = vmul.f32 %v3762, %v3762
  %v3801 = vmul.f32 %v3763, %v3763
  %v3802 = vmul.f32 %v3764, %v3764
  %v3803 = vmul.f32 %v3765, %v3765
  %v3804 = vmul.f32 %v3766, %v3766
  %v3805 = vmul.f32 %v3767, %v3767
  %v3806 = vmul.f32 %v3768, %v3768
  %v3807 = vmul.f32 %v3769, %v3769
  %v3808 = vadd.f32 %v3792, %v3793
  %v3809 = vadd.f32 %v3808, %v3794
  %v3810 = vadd.f32 %v3809, %v3795
  %v3811 = vadd.f32 %v3810, %v3796
  %v3812 = vadd.f32 %v3811, %v3797
  %v3813 = vadd.f32 %v3812, %v3798
  %v3814 = vadd.f32 %v3813, %v3799
  %v3815 = vadd.f32 %v3814, %v3800
  %v3816 = vadd.f32 %v3815, %v3801
  %v3817 = vadd.f32 %v3816, %v3802
  %v3818 = vadd.f32 %v3817, %v3803
  %v3819 = vadd.f32 %v3818, %v3804
  %v3820 = vadd.f32 %v3819, %v3805
  %v3821 = vadd.f32 %v3820, %v3806
  %v3822 = vadd.f32 %v3821, %v3807
  %v3823 = vrot.slane %v3822, 4
  %v3824 = vadd.f32 %v3822, %v3823
  %v3825 = vrot.slane %v3824, 2
  %v3826 = vadd.f32 %v3824, %v3825
  %v3827 = vrot.slane %v3826, 1
  %v3828 = vadd.f32 %v3826, %v3827
  %v3829 = vmul.f32 %v3828, %v1214
  %v3830 = vmul.f32 %v3791, %v3791
  %v3831 = vsub.f32 %v3829, %v3830
  %s3832 = scalar_lea.vmem %s5, 2
  %v3833 = vld [vmem:[%s3832] sm:$0x1]
  %v3834 = vadd.f32 %v3831, 1e-05
  %v3835 = vrsqrt.pop %v3834
  %v3836 = vmul.f32 %v3833, %v3835
  %s3837 = scalar_lea.vmem %s6, 2
  %v3838 = vld [vmem:[%s3837] sm:$0x1]
  %v3839 = vmul.f32 %v3791, %v3836
  %v3840 = vsub.f32 %v3838, %v3839
  %v3842 = vlaneseq
  %v3843 = vshrl.u32 %v3842, 7
  %v3844 = vsub.s32 0, %v3843
  %v3845 = vrot.slane %v3836, %v3844
  %v3847 = vmul.f32 %v3754, %v3845
  %v3848 = vmul.f32 %v3755, %v3845
  %v3849 = vmul.f32 %v3756, %v3845
  %v3850 = vmul.f32 %v3757, %v3845
  %v3851 = vmul.f32 %v3758, %v3845
  %v3852 = vmul.f32 %v3759, %v3845
  %v3853 = vmul.f32 %v3760, %v3845
  %v3854 = vmul.f32 %v3761, %v3845
  %v3855 = vmul.f32 %v3762, %v3845
  %v3856 = vmul.f32 %v3763, %v3845
  %v3857 = vmul.f32 %v3764, %v3845
  %v3858 = vmul.f32 %v3765, %v3845
  %v3859 = vmul.f32 %v3766, %v3845
  %v3860 = vmul.f32 %v3767, %v3845
  %v3861 = vmul.f32 %v3768, %v3845
  %v3862 = vmul.f32 %v3769, %v3845
  %v3864 = vlaneseq
  %v3865 = vshrl.u32 %v3864, 7
  %v3866 = vsub.s32 0, %v3865
  %v3867 = vrot.slane %v3840, %v3866
  %v3869 = vadd.f32 %v3847, %v3867
  %v3870 = vadd.f32 %v3848, %v3867
  %v3871 = vadd.f32 %v3849, %v3867
  %v3872 = vadd.f32 %v3850, %v3867
  %v3873 = vadd.f32 %v3851, %v3867
  %v3874 = vadd.f32 %v3852, %v3867
  %v3875 = vadd.f32 %v3853, %v3867
  %v3876 = vadd.f32 %v3854, %v3867
  %v3877 = vadd.f32 %v3855, %v3867
  %v3878 = vadd.f32 %v3856, %v3867
  %v3879 = vadd.f32 %v3857, %v3867
  %v3880 = vadd.f32 %v3858, %v3867
  %v3881 = vadd.f32 %v3859, %v3867
  %v3882 = vadd.f32 %v3860, %v3867
  %v3883 = vadd.f32 %v3861, %v3867
  %v3884 = vadd.f32 %v3862, %v3867
  %3885 = vst [vmem:[%s7] sm:$0xff] %v3869
  %3886 = vst [vmem:[%s7 + $0x8] sm:$0xff] %v3870
  %3887 = vst [vmem:[%s7 + $0x10] sm:$0xff] %v3871
  %3888 = vst [vmem:[%s7 + $0x18] sm:$0xff] %v3872
  %3889 = vst [vmem:[%s7 + $0x20] sm:$0xff] %v3873
  %3890 = vst [vmem:[%s7 + $0x28] sm:$0xff] %v3874
  %3891 = vst [vmem:[%s7 + $0x30] sm:$0xff] %v3875
  %3892 = vst [vmem:[%s7 + $0x38] sm:$0xff] %v3876
  %3893 = vst [vmem:[%s7 + $0x40] sm:$0xff] %v3877
  %3894 = vst [vmem:[%s7 + $0x48] sm:$0xff] %v3878
  %3895 = vst [vmem:[%s7 + $0x50] sm:$0xff] %v3879
  %3896 = vst [vmem:[%s7 + $0x58] sm:$0xff] %v3880
  %3897 = vst [vmem:[%s7 + $0x60] sm:$0xff] %v3881
  %3898 = vst [vmem:[%s7 + $0x68] sm:$0xff] %v3882
  %3899 = vst [vmem:[%s7 + $0x70] sm:$0xff] %v3883
  %3900 = vst [vmem:[%s7 + $0x78] sm:$0xff] %v3884
  // Predicated region
  $region30: #{autogcn_net_forward.1} parent=0 // pred_check
    _
  $region31: #{autogcn_net_forward.1} parent=0 // pred_check_branch
    %3902 = sbr.rel (0) target = $region33
  $region32: #{autogcn_net_forward.1} parent=0 // pred_region
    _
  $region33: #{autogcn_net_forward.1} parent=0 // pred_fallthru
    _
  // Predicated region
  $region34: #{autogcn_net_forward.1} parent=0 // pred_check
    _
  $region35: #{autogcn_net_forward.1} parent=0 // pred_check_branch
    %3904 = sbr.rel (0) target = $region37
  $region36: #{autogcn_net_forward.1} parent=0 // pred_region
    _
  $region37: #{autogcn_net_forward.1} parent=0 // pred_fallthru
    _

</llo_original>
